<compile_context>
chip_gen: v6e
topology: v6e:2x2x1
jax: 0.10.0
libtpu: 0.0.40
codegen_flags: <defaults>
</compile_context>

<pallas_src>
import functools

import jax
import jax.numpy as jnp
from jax.experimental import pallas as pl
from jax.experimental.pallas import tpu as pltpu

# --- small, CLIP-ViT-shaped, lane/sublane-aligned config --------------------
N = 2              # batch
L = 16             # sequence length (stands in for 50 + n_ctx)
D = 256            # transformer width (multiple of 128)
NUM_HEADS = 2      # heads; head_dim = 128 -> lane-aligned head slices
MLP_DIM = 4 * D    # CLIP MLP hidden = 4 * width
PROJ_DIM = 32      # true vision_proj output dim
PROJ_PAD = 128     # lane-dense padded output width (sliced in the wrapper)
NUM_LAYERS = 2
EPS = 1e-5         # torch.nn.LayerNorm default


def _layernorm(x, g, b):
    mu = jnp.mean(x, axis=-1, keepdims=True)
    var = jnp.mean((x - mu) ** 2, axis=-1, keepdims=True)
    return (x - mu) * jax.lax.rsqrt(var + EPS) * g + b


def _mm(a, b):
    """MXU matmul: bf16 operands, f32 accumulation."""
    return jnp.dot(a.astype(jnp.bfloat16), b.astype(jnp.bfloat16),
                   preferred_element_type=jnp.float32)


# --------------------------- fused Pallas kernel -----------------------------
def fused_encoder_kernel(x_ref,
                         pre_g_ref, pre_b_ref,
                         ln1_g_ref, ln1_b_ref,
                         wqkv_ref, bqkv_ref,
                         wo_ref, bo_ref,
                         ln2_g_ref, ln2_b_ref,
                         w1_ref, b1_ref,
                         w2_ref, b2_ref,
                         post_g_ref, post_b_ref,
                         proj_ref,
                         o_ref,
                         x_scr,
                         *, num_heads, batch, seq):
    layer = pl.program_id(0)
    num_layers = pl.num_programs(0)

    bf16 = jnp.bfloat16
    f32 = jnp.float32
    width = x_scr.shape[-1]
    hd = width // num_heads
    scale = 1.0 / (hd ** 0.5)

    # --- first grid step: pre-LN (ln_pre) into the persistent activation -----
    @pl.when(layer == 0)
    def _():
        x_scr[...] = _layernorm(x_ref[...], pre_g_ref[...], pre_b_ref[...])

    # --- one transformer block per grid step (this layer's weights in VMEM,
    #     next layer's weights DMA-ing behind the matmuls) --------------------
    x = x_scr[...]                                           # (N*L, D) f32
    xn = _layernorm(x, ln1_g_ref[...], ln1_b_ref[...])
    qkv = _mm(xn, wqkv_ref[...]) + bqkv_ref[...]             # (N*L, 3D) f32
    q = qkv[:, :width] * scale                               # scale folded into q
    k = qkv[:, width:2 * width]
    v = qkv[:, 2 * width:]

    # head split: 128-lane-aligned slabs -> (H, N*L, hd) -> (H*N, L, hd);
    # the leading-dim reshape is free and folds batch into the einsum batch.
    def to_heads(t):
        t = jnp.stack([t[:, h * hd:(h + 1) * hd] for h in range(num_heads)],
                      axis=0)                                # (H, N*L, hd) f32
        return t.reshape(num_heads * batch, seq, hd).astype(bf16)

    q3, k3, v3 = to_heads(q), to_heads(k), to_heads(v)
    s = jnp.einsum('bqd,bkd->bqk', q3, k3,
                   preferred_element_type=f32)               # (H*N, L, L) f32
    s = s - jnp.max(s, axis=-1, keepdims=True)
    p = jnp.exp(s)
    p = p / jnp.sum(p, axis=-1, keepdims=True)               # exact softmax
    o3 = jnp.einsum('bqk,bkd->bqd', p.astype(bf16), v3,
                    preferred_element_type=f32)              # (H*N, L, hd) f32

    # merge heads: (H*N, L, hd) -> (H, N*L, hd) -> lane concat -> (N*L, D),
    # then ONE (N*L, D) @ (D, D) output projection.
    o3 = o3.reshape(num_heads, batch * seq, hd)
    o2 = jnp.concatenate([o3[h] for h in range(num_heads)], axis=-1)
    x = x + _mm(o2, wo_ref[...]) + bo_ref[...]

    # MLP with QuickGELU (element-wise math stays f32)
    xn2 = _layernorm(x, ln2_g_ref[...], ln2_b_ref[...])
    h1 = _mm(xn2, w1_ref[...]) + b1_ref[...]
    h1 = h1 * jax.nn.sigmoid(1.702 * h1)
    x = x + _mm(h1, w2_ref[...]) + b2_ref[...]
    x_scr[...] = x

    # --- last grid step: post-LN on the CLS tokens + visual projection -------
    @pl.when(layer == num_layers - 1)
    def _():
        for i in range(batch):            # static tiny loop; CLS = row i*seq
            cls = x_scr[pl.ds(i * seq, 1), :]                # (1, D)
            cls = _layernorm(cls, post_g_ref[...], post_b_ref[...])
            # f32 projection into a lane-dense (1, 128) padded output row.
            o_ref[pl.ds(i, 1), :] = jnp.dot(cls, proj_ref[...],
                                            preferred_element_type=f32)


# --------------------------- Pallas wrapper ----------------------------------
def pack_params(params):
    """Stack per-layer weights along a leading layer axis; big weights -> bf16,
    final projection stays f32 and is zero-padded to a 128-lane output."""
    bf16 = jnp.bfloat16
    blocks = params["blocks"]
    stack = lambda key: jnp.stack([blk[key] for blk in blocks], axis=0)
    proj_pad = jnp.zeros((D, PROJ_PAD), jnp.float32).at[:, :PROJ_DIM].set(
        params["proj"])
    return {
        "pre_g": params["pre_ln_g"], "pre_b": params["pre_ln_b"],
        "post_g": params["post_ln_g"], "post_b": params["post_ln_b"],
        "proj": proj_pad,
        "ln1_g": stack("ln1_g"), "ln1_b": stack("ln1_b"),
        "wqkv": stack("wqkv").astype(bf16), "bqkv": stack("bqkv"),
        "wo": stack("wo").astype(bf16), "bo": stack("bo"),
        "ln2_g": stack("ln2_g"), "ln2_b": stack("ln2_b"),
        "w1": stack("w1").astype(bf16), "b1": stack("b1"),
        "w2": stack("w2").astype(bf16), "b2": stack("b2"),
    }


def visual_encoder_forward(prompt, packed):
    """prompt: (N, L, D) float32  ->  (N, PROJ_DIM) float32"""
    n, l, d = prompt.shape
    num_layers = packed["wqkv"].shape[0]
    mlp = packed["w1"].shape[-1]
    p_pad = packed["proj"].shape[-1]

    x2 = prompt.reshape(n * l, d)        # fold batch into the matmul rows

    def const_spec(shape):               # whole array, resident across layers
        return pl.BlockSpec(shape, lambda i: (0,) * len(shape))

    def layer_spec(shape):               # one layer streamed per grid step
        return pl.BlockSpec((None,) + shape, lambda i: (i,) + (0,) * len(shape))

    kernel = functools.partial(fused_encoder_kernel,
                               num_heads=NUM_HEADS, batch=n, seq=l)
    out = pl.pallas_call(
        kernel,
        out_shape=jax.ShapeDtypeStruct((n, p_pad), jnp.float32),
        grid=(num_layers,),
        in_specs=[
            const_spec((n * l, d)),                           # x (all batches)
            const_spec((1, d)), const_spec((1, d)),           # ln_pre
            layer_spec((1, d)), layer_spec((1, d)),           # ln_1
            layer_spec((d, 3 * d)), layer_spec((1, 3 * d)),   # attn in_proj
            layer_spec((d, d)), layer_spec((1, d)),           # attn out_proj
            layer_spec((1, d)), layer_spec((1, d)),           # ln_2
            layer_spec((d, mlp)), layer_spec((1, mlp)),       # mlp c_fc
            layer_spec((mlp, d)), layer_spec((1, d)),         # mlp c_proj
            const_spec((1, d)), const_spec((1, d)),           # ln_post
            const_spec((d, p_pad)),                           # vision proj (padded)
        ],
        out_specs=pl.BlockSpec((n, p_pad), lambda i: (0, 0)),
        scratch_shapes=[pltpu.VMEM((n * l, d), jnp.float32)],  # persistent acts
        compiler_params=pltpu.CompilerParams(
            dimension_semantics=("arbitrary",),   # layer axis carries state
            vmem_limit_bytes=32 * 1024 * 1024),
    )(x2,
      packed["pre_g"], packed["pre_b"],
      packed["ln1_g"], packed["ln1_b"], packed["wqkv"], packed["bqkv"],
      packed["wo"], packed["bo"],
      packed["ln2_g"], packed["ln2_b"], packed["w1"], packed["b1"],
      packed["w2"], packed["b2"],
      packed["post_g"], packed["post_b"], packed["proj"])
    return out[:, :PROJ_DIM]


# ------------------------- pure-JAX reference -------------------------------
def reference_forward(prompt, params):
    x = _layernorm(prompt, params["pre_ln_g"], params["pre_ln_b"])
    hd = D // NUM_HEADS
    for p in params["blocks"]:
        xn = _layernorm(x, p["ln1_g"], p["ln1_b"])
        qkv = xn @ p["wqkv"] + p["bqkv"]
        q, k, v = qkv[..., :D], qkv[..., D:2 * D], qkv[..., 2 * D:]
        q = q.reshape(N, L, NUM_HEADS, hd)
        k = k.reshape(N, L, NUM_HEADS, hd)
        v = v.reshape(N, L, NUM_HEADS, hd)
        s = jnp.einsum("nqhd,nkhd->nhqk", q, k) / (hd ** 0.5)
        a = jax.nn.softmax(s, axis=-1)
        o = jnp.einsum("nhqk,nkhd->nqhd", a, v).reshape(N, L, D)
        x = x + o @ p["wo"] + p["bo"]
        xn2 = _layernorm(x, p["ln2_g"], p["ln2_b"])
        h1 = xn2 @ p["w1"] + p["b1"]
        h1 = h1 * jax.nn.sigmoid(1.702 * h1)
        x = x + h1 @ p["w2"] + p["b2"]
    cls = _layernorm(x[:, 0, :], params["post_ln_g"], params["post_ln_b"])
    return cls @ params["proj"]


# ------------------------------ param init ----------------------------------
def init_params(key):
    def dense(k, shape, scale=0.02):
        return scale * jax.random.normal(k, shape, dtype=jnp.float32)

    keys = jax.random.split(key, 4 + 6 * NUM_LAYERS)
    it = iter(keys)
    params = {
        "pre_ln_g": jnp.ones((1, D), jnp.float32),
        "pre_ln_b": jnp.zeros((1, D), jnp.float32),
        "post_ln_g": jnp.ones((1, D), jnp.float32),
        "post_ln_b": jnp.zeros((1, D), jnp.float32),
        "proj": dense(next(it), (D, PROJ_DIM)),
        "blocks": [],
    }
    for _ in range(NUM_LAYERS):
        params["blocks"].append({
            "ln1_g": jnp.ones((1, D), jnp.float32),
            "ln1_b": jnp.zeros((1, D), jnp.float32),
            "wqkv": dense(next(it), (D, 3 * D)),
            "bqkv": jnp.zeros((1, 3 * D), jnp.float32),
            "wo": dense(next(it), (D, D)),
            "bo": jnp.zeros((1, D), jnp.float32),
            "ln2_g": jnp.ones((1, D), jnp.float32),
            "ln2_b": jnp.zeros((1, D), jnp.float32),
            "w1": dense(next(it), (D, MLP_DIM)),
            "b1": jnp.zeros((1, MLP_DIM), jnp.float32),
            "w2": dense(next(it), (MLP_DIM, D)),
            "b2": jnp.zeros((1, D), jnp.float32),
        })
    return params


if __name__ == "__main__":
    key = jax.random.PRNGKey(0)
    k_param, k_x = jax.random.split(key)
    params = init_params(k_param)
    packed = pack_params(params)
    prompt = jax.random.normal(k_x, (N, L, D), dtype=jnp.float32)

    out = jax.block_until_ready(visual_encoder_forward(prompt, packed))
    assert out.shape == (N, PROJ_DIM) and out.dtype == jnp.float32

    ref = jax.block_until_ready(reference_forward(prompt, params))
    assert jnp.allclose(out, ref, rtol=2e-2, atol=2e-2), "mismatch vs reference"

    print("KERNEL_OK")
</pallas_src>

<mosaic_0001>
module attributes {stable_mosaic.version = 11 : i64} {
  func.func @fused_encoder_kernel(%arg0: i32, %arg1: memref<32x256xf32, #tpu.memory_space<vmem>>, %arg2: memref<1x256xf32, #tpu.memory_space<vmem>>, %arg3: memref<1x256xf32, #tpu.memory_space<vmem>>, %arg4: memref<1x1x256xf32, #tpu.memory_space<vmem>>, %arg5: memref<1x1x256xf32, #tpu.memory_space<vmem>>, %arg6: memref<1x256x768xbf16, #tpu.memory_space<vmem>>, %arg7: memref<1x1x768xf32, #tpu.memory_space<vmem>>, %arg8: memref<1x256x256xbf16, #tpu.memory_space<vmem>>, %arg9: memref<1x1x256xf32, #tpu.memory_space<vmem>>, %arg10: memref<1x1x256xf32, #tpu.memory_space<vmem>>, %arg11: memref<1x1x256xf32, #tpu.memory_space<vmem>>, %arg12: memref<1x256x1024xbf16, #tpu.memory_space<vmem>>, %arg13: memref<1x1x1024xf32, #tpu.memory_space<vmem>>, %arg14: memref<1x1024x256xbf16, #tpu.memory_space<vmem>>, %arg15: memref<1x1x256xf32, #tpu.memory_space<vmem>>, %arg16: memref<1x256xf32, #tpu.memory_space<vmem>>, %arg17: memref<1x256xf32, #tpu.memory_space<vmem>>, %arg18: memref<256x128xf32, #tpu.memory_space<vmem>>, %arg19: memref<2x128xf32, #tpu.memory_space<vmem>>, %arg20: memref<32x256xf32, #tpu.memory_space<vmem>>) attributes {dimension_semantics = [#tpu.dimension_semantics<arbitrary>], iteration_bounds = array<i64: 2>, scalar_prefetch = 0 : i64, scratch_operands = 1 : i64, tpu.core_type = #tpu.core_type<tc>, window_params = [{pipeline_mode = #tpu.pipeline_mode<synchronous>, transform_indices = @transform_0, window_bounds = array<i64: 32, 256>}, {pipeline_mode = #tpu.pipeline_mode<synchronous>, transform_indices = @transform_1, window_bounds = array<i64: 1, 256>}, {pipeline_mode = #tpu.pipeline_mode<synchronous>, transform_indices = @transform_2, window_bounds = array<i64: 1, 256>}, {transform_indices = @transform_3, window_bounds = array<i64: 1, 1, 256>}, {transform_indices = @transform_4, window_bounds = array<i64: 1, 1, 256>}, {transform_indices = @transform_5, window_bounds = array<i64: 1, 256, 768>}, {transform_indices = @transform_6, window_bounds = array<i64: 1, 1, 768>}, {transform_indices = @transform_7, window_bounds = array<i64: 1, 256, 256>}, {transform_indices = @transform_8, window_bounds = array<i64: 1, 1, 256>}, {transform_indices = @transform_9, window_bounds = array<i64: 1, 1, 256>}, {transform_indices = @transform_10, window_bounds = array<i64: 1, 1, 256>}, {transform_indices = @transform_11, window_bounds = array<i64: 1, 256, 1024>}, {transform_indices = @transform_12, window_bounds = array<i64: 1, 1, 1024>}, {transform_indices = @transform_13, window_bounds = array<i64: 1, 1024, 256>}, {transform_indices = @transform_14, window_bounds = array<i64: 1, 1, 256>}, {pipeline_mode = #tpu.pipeline_mode<synchronous>, transform_indices = @transform_15, window_bounds = array<i64: 1, 256>}, {pipeline_mode = #tpu.pipeline_mode<synchronous>, transform_indices = @transform_16, window_bounds = array<i64: 1, 256>}, {pipeline_mode = #tpu.pipeline_mode<synchronous>, transform_indices = @transform_17, window_bounds = array<i64: 256, 128>}, {pipeline_mode = #tpu.pipeline_mode<synchronous>, transform_indices = @transform_18, window_bounds = array<i64: 2, 128>}]} {
    %c0_i32 = arith.constant 0 : i32
    %0 = arith.cmpi eq, %arg0, %c0_i32 : i32
    %1 = arith.extui %0 : i1 to i32
    %c0_i32_0 = arith.constant 0 : i32
    %2 = arith.cmpi ne, %1, %c0_i32_0 : i32
    scf.if %2 {
      %c0_61 = arith.constant 0 : index
      %c0_62 = arith.constant 0 : index
      %146 = vector.load %arg1[%c0_61, %c0_62] : memref<32x256xf32, #tpu.memory_space<vmem>>, vector<32x256xf32>
      %c0_63 = arith.constant 0 : index
      %c0_64 = arith.constant 0 : index
      %147 = vector.load %arg2[%c0_63, %c0_64] : memref<1x256xf32, #tpu.memory_space<vmem>>, vector<1x256xf32>
      %c0_65 = arith.constant 0 : index
      %c0_66 = arith.constant 0 : index
      %148 = vector.load %arg3[%c0_65, %c0_66] : memref<1x256xf32, #tpu.memory_space<vmem>>, vector<1x256xf32>
      %cst_67 = arith.constant dense<0.000000e+00> : vector<32xf32>
      %149 = vector.multi_reduction <add>, %146, %cst_67 [1] : vector<32x256xf32> to vector<32xf32>
      %150 = vector.shape_cast %149 : vector<32xf32> to vector<32x1xf32>
      %cst_68 = arith.constant 2.560000e+02 : f32
      %151 = vector.broadcast %cst_68 : f32 to vector<32x1xf32>
      %152 = arith.divf %150, %151 : vector<32x1xf32>
      %153 = vector.broadcast %152 : vector<32x1xf32> to vector<32x256xf32>
      %154 = arith.subf %146, %153 : vector<32x256xf32>
      %155 = arith.mulf %154, %154 : vector<32x256xf32>
      %cst_69 = arith.constant dense<0.000000e+00> : vector<32xf32>
      %156 = vector.multi_reduction <add>, %155, %cst_69 [1] : vector<32x256xf32> to vector<32xf32>
      %157 = vector.shape_cast %156 : vector<32xf32> to vector<32x1xf32>
      %cst_70 = arith.constant 2.560000e+02 : f32
      %158 = vector.broadcast %cst_70 : f32 to vector<32x1xf32>
      %159 = arith.divf %157, %158 : vector<32x1xf32>
      %160 = vector.broadcast %152 : vector<32x1xf32> to vector<32x256xf32>
      %161 = arith.subf %146, %160 : vector<32x256xf32>
      %cst_71 = arith.constant 9.99999974E-6 : f32
      %162 = vector.broadcast %cst_71 : f32 to vector<32x1xf32>
      %163 = arith.addf %159, %162 : vector<32x1xf32>
      %164 = math.rsqrt %163 : vector<32x1xf32>
      %165 = vector.broadcast %164 : vector<32x1xf32> to vector<32x256xf32>
      %166 = arith.mulf %161, %165 : vector<32x256xf32>
      %167 = vector.broadcast %147 : vector<1x256xf32> to vector<32x256xf32>
      %168 = arith.mulf %166, %167 : vector<32x256xf32>
      %169 = vector.broadcast %148 : vector<1x256xf32> to vector<32x256xf32>
      %170 = arith.addf %168, %169 : vector<32x256xf32>
      %c0_72 = arith.constant 0 : index
      %c0_73 = arith.constant 0 : index
      %171 = vector.load %arg20[%c0_72, %c0_73] : memref<32x256xf32, #tpu.memory_space<vmem>>, vector<32x256xf32>
      tpu.vector_store %arg20[%c0_72, %c0_73], %170 {strides = array<i32>} : memref<32x256xf32, #tpu.memory_space<vmem>>, vector<32x256xf32>,
    } else {
    }
    %c0 = arith.constant 0 : index
    %c0_1 = arith.constant 0 : index
    %3 = vector.load %arg20[%c0, %c0_1] : memref<32x256xf32, #tpu.memory_space<vmem>>, vector<32x256xf32>
    %c0_2 = arith.constant 0 : index
    %c0_3 = arith.constant 0 : index
    %c0_4 = arith.constant 0 : index
    %4 = vector.load %arg4[%c0_2, %c0_3, %c0_4] : memref<1x1x256xf32, #tpu.memory_space<vmem>>, vector<1x1x256xf32>
    %5 = vector.shape_cast %4 : vector<1x1x256xf32> to vector<1x256xf32>
    %c0_5 = arith.constant 0 : index
    %c0_6 = arith.constant 0 : index
    %c0_7 = arith.constant 0 : index
    %6 = vector.load %arg5[%c0_5, %c0_6, %c0_7] : memref<1x1x256xf32, #tpu.memory_space<vmem>>, vector<1x1x256xf32>
    %7 = vector.shape_cast %6 : vector<1x1x256xf32> to vector<1x256xf32>
    %cst = arith.constant dense<0.000000e+00> : vector<32xf32>
    %8 = vector.multi_reduction <add>, %3, %cst [1] : vector<32x256xf32> to vector<32xf32>
    %9 = vector.shape_cast %8 : vector<32xf32> to vector<32x1xf32>
    %cst_8 = arith.constant 2.560000e+02 : f32
    %10 = vector.broadcast %cst_8 : f32 to vector<32x1xf32>
    %11 = arith.divf %9, %10 : vector<32x1xf32>
    %12 = vector.broadcast %11 : vector<32x1xf32> to vector<32x256xf32>
    %13 = arith.subf %3, %12 : vector<32x256xf32>
    %14 = arith.mulf %13, %13 : vector<32x256xf32>
    %cst_9 = arith.constant dense<0.000000e+00> : vector<32xf32>
    %15 = vector.multi_reduction <add>, %14, %cst_9 [1] : vector<32x256xf32> to vector<32xf32>
    %16 = vector.shape_cast %15 : vector<32xf32> to vector<32x1xf32>
    %cst_10 = arith.constant 2.560000e+02 : f32
    %17 = vector.broadcast %cst_10 : f32 to vector<32x1xf32>
    %18 = arith.divf %16, %17 : vector<32x1xf32>
    %19 = vector.broadcast %11 : vector<32x1xf32> to vector<32x256xf32>
    %20 = arith.subf %3, %19 : vector<32x256xf32>
    %cst_11 = arith.constant 9.99999974E-6 : f32
    %21 = vector.broadcast %cst_11 : f32 to vector<32x1xf32>
    %22 = arith.addf %18, %21 : vector<32x1xf32>
    %23 = math.rsqrt %22 : vector<32x1xf32>
    %24 = vector.broadcast %23 : vector<32x1xf32> to vector<32x256xf32>
    %25 = arith.mulf %20, %24 : vector<32x256xf32>
    %26 = vector.broadcast %5 : vector<1x256xf32> to vector<32x256xf32>
    %27 = arith.mulf %25, %26 : vector<32x256xf32>
    %28 = vector.broadcast %7 : vector<1x256xf32> to vector<32x256xf32>
    %29 = arith.addf %27, %28 : vector<32x256xf32>
    %c0_12 = arith.constant 0 : index
    %c0_13 = arith.constant 0 : index
    %c0_14 = arith.constant 0 : index
    %30 = vector.load %arg6[%c0_12, %c0_13, %c0_14] : memref<1x256x768xbf16, #tpu.memory_space<vmem>>, vector<1x256x768xbf16>
    %31 = vector.shape_cast %30 : vector<1x256x768xbf16> to vector<256x768xbf16>
    %32 = arith.truncf %29 : vector<32x256xf32> to vector<32x256xbf16>
    %cst_15 = arith.constant dense<0.000000e+00> : vector<32x768xf32>
    %33 = tpu.matmul %32, %31, %cst_15 {dimension_numbers = #tpu.dot_dimension_numbers<[1], [0], [0], [1], [0, 0, 1, 1], [], []>} : vector<32x256xbf16>, vector<256x768xbf16>, vector<32x768xf32> -> vector<32x768xf32>
    %c0_16 = arith.constant 0 : index
    %c0_17 = arith.constant 0 : index
    %c0_18 = arith.constant 0 : index
    %34 = vector.load %arg7[%c0_16, %c0_17, %c0_18] : memref<1x1x768xf32, #tpu.memory_space<vmem>>, vector<1x1x768xf32>
    %35 = vector.shape_cast %34 : vector<1x1x768xf32> to vector<1x768xf32>
    %36 = vector.broadcast %35 : vector<1x768xf32> to vector<32x768xf32>
    %37 = arith.addf %33, %36 : vector<32x768xf32>
    %38 = vector.extract_strided_slice %37 {offsets = [0, 0], sizes = [32, 256], strides = [1, 1]} : vector<32x768xf32> to vector<32x256xf32>
    %cst_19 = arith.constant 0.0883883461 : f32
    %39 = vector.broadcast %cst_19 : f32 to vector<32x256xf32>
    %40 = arith.mulf %38, %39 : vector<32x256xf32>
    %41 = vector.extract_strided_slice %37 {offsets = [0, 256], sizes = [32, 256], strides = [1, 1]} : vector<32x768xf32> to vector<32x256xf32>
    %42 = vector.extract_strided_slice %37 {offsets = [0, 512], sizes = [32, 256], strides = [1, 1]} : vector<32x768xf32> to vector<32x256xf32>
    %43 = vector.extract_strided_slice %40 {offsets = [0, 0], sizes = [32, 128], strides = [1, 1]} : vector<32x256xf32> to vector<32x128xf32>
    %44 = vector.extract_strided_slice %40 {offsets = [0, 128], sizes = [32, 128], strides = [1, 1]} : vector<32x256xf32> to vector<32x128xf32>
    %45 = vector.shape_cast %43 : vector<32x128xf32> to vector<1x32x128xf32>
    %46 = vector.shape_cast %44 : vector<32x128xf32> to vector<1x32x128xf32>
    %47 = tpu.concatenate %45, %46 in 0 : vector<1x32x128xf32>, vector<1x32x128xf32> -> vector<2x32x128xf32>
    %48 = vector.shape_cast %47 : vector<2x32x128xf32> to vector<4x16x128xf32>
    %49 = arith.truncf %48 : vector<4x16x128xf32> to vector<4x16x128xbf16>
    %50 = vector.extract_strided_slice %41 {offsets = [0, 0], sizes = [32, 128], strides = [1, 1]} : vector<32x256xf32> to vector<32x128xf32>
    %51 = vector.extract_strided_slice %41 {offsets = [0, 128], sizes = [32, 128], strides = [1, 1]} : vector<32x256xf32> to vector<32x128xf32>
    %52 = vector.shape_cast %50 : vector<32x128xf32> to vector<1x32x128xf32>
    %53 = vector.shape_cast %51 : vector<32x128xf32> to vector<1x32x128xf32>
    %54 = tpu.concatenate %52, %53 in 0 : vector<1x32x128xf32>, vector<1x32x128xf32> -> vector<2x32x128xf32>
    %55 = vector.shape_cast %54 : vector<2x32x128xf32> to vector<4x16x128xf32>
    %56 = arith.truncf %55 : vector<4x16x128xf32> to vector<4x16x128xbf16>
    %57 = vector.extract_strided_slice %42 {offsets = [0, 0], sizes = [32, 128], strides = [1, 1]} : vector<32x256xf32> to vector<32x128xf32>
    %58 = vector.extract_strided_slice %42 {offsets = [0, 128], sizes = [32, 128], strides = [1, 1]} : vector<32x256xf32> to vector<32x128xf32>
    %59 = vector.shape_cast %57 : vector<32x128xf32> to vector<1x32x128xf32>
    %60 = vector.shape_cast %58 : vector<32x128xf32> to vector<1x32x128xf32>
    %61 = tpu.concatenate %59, %60 in 0 : vector<1x32x128xf32>, vector<1x32x128xf32> -> vector<2x32x128xf32>
    %62 = vector.shape_cast %61 : vector<2x32x128xf32> to vector<4x16x128xf32>
    %63 = arith.truncf %62 : vector<4x16x128xf32> to vector<4x16x128xbf16>
    "tpu.trace_start"() <{level = 10 : i32, message = "bqd,bkd->bqk"}> : () -> ()
    %cst_20 = arith.constant dense<0.000000e+00> : vector<4x16x16xf32>
    %64 = tpu.matmul %49, %56, %cst_20 {dimension_numbers = #tpu.dot_dimension_numbers<[2], [2], [1], [1], [0, 0, 0, 1, 1, 1], [0], [0]>} : vector<4x16x128xbf16>, vector<4x16x128xbf16>, vector<4x16x16xf32> -> vector<4x16x16xf32>
    "tpu.trace_stop"() : () -> ()
    %cst_21 = arith.constant dense<0xFF800000> : vector<4x16xf32>
    %65 = vector.multi_reduction <maximumf>, %64, %cst_21 [2] : vector<4x16x16xf32> to vector<4x16xf32>
    %66 = vector.shape_cast %65 : vector<4x16xf32> to vector<4x16x1xf32>
    %67 = vector.broadcast %66 : vector<4x16x1xf32> to vector<4x16x16xf32>
    %68 = arith.subf %64, %67 : vector<4x16x16xf32>
    %69 = math.exp %68 : vector<4x16x16xf32>
    %cst_22 = arith.constant dense<0.000000e+00> : vector<4x16xf32>
    %70 = vector.multi_reduction <add>, %69, %cst_22 [2] : vector<4x16x16xf32> to vector<4x16xf32>
    %71 = vector.shape_cast %70 : vector<4x16xf32> to vector<4x16x1xf32>
    %72 = vector.broadcast %71 : vector<4x16x1xf32> to vector<4x16x16xf32>
    %73 = arith.divf %69, %72 : vector<4x16x16xf32>
    %74 = arith.truncf %73 : vector<4x16x16xf32> to vector<4x16x16xbf16>
    "tpu.trace_start"() <{level = 10 : i32, message = "bqk,bkd->bqd"}> : () -> ()
    %cst_23 = arith.constant dense<0.000000e+00> : vector<4x16x128xf32>
    %75 = tpu.matmul %74, %63, %cst_23 {dimension_numbers = #tpu.dot_dimension_numbers<[2], [1], [1], [2], [0, 0, 0, 1, 1, 2], [0], [0]>} : vector<4x16x16xbf16>, vector<4x16x128xbf16>, vector<4x16x128xf32> -> vector<4x16x128xf32>
    "tpu.trace_stop"() : () -> ()
    %76 = vector.shape_cast %75 : vector<4x16x128xf32> to vector<2x32x128xf32>
    %77 = vector.extract_strided_slice %76 {offsets = [0, 0, 0], sizes = [1, 32, 128], strides = [1, 1, 1]} : vector<2x32x128xf32> to vector<1x32x128xf32>
    %78 = vector.shape_cast %77 : vector<1x32x128xf32> to vector<32x128xf32>
    %79 = vector.extract_strided_slice %76 {offsets = [1, 0, 0], sizes = [1, 32, 128], strides = [1, 1, 1]} : vector<2x32x128xf32> to vector<1x32x128xf32>
    %80 = vector.shape_cast %79 : vector<1x32x128xf32> to vector<32x128xf32>
    %81 = tpu.concatenate %78, %80 in 1 : vector<32x128xf32>, vector<32x128xf32> -> vector<32x256xf32>
    %c0_24 = arith.constant 0 : index
    %c0_25 = arith.constant 0 : index
    %c0_26 = arith.constant 0 : index
    %82 = vector.load %arg8[%c0_24, %c0_25, %c0_26] : memref<1x256x256xbf16, #tpu.memory_space<vmem>>, vector<1x256x256xbf16>
    %83 = vector.shape_cast %82 : vector<1x256x256xbf16> to vector<256x256xbf16>
    %84 = arith.truncf %81 : vector<32x256xf32> to vector<32x256xbf16>
    %cst_27 = arith.constant dense<0.000000e+00> : vector<32x256xf32>
    %85 = tpu.matmul %84, %83, %cst_27 {dimension_numbers = #tpu.dot_dimension_numbers<[1], [0], [0], [1], [0, 0, 1, 1], [], []>} : vector<32x256xbf16>, vector<256x256xbf16>, vector<32x256xf32> -> vector<32x256xf32>
    %86 = arith.addf %3, %85 : vector<32x256xf32>
    %c0_28 = arith.constant 0 : index
    %c0_29 = arith.constant 0 : index
    %c0_30 = arith.constant 0 : index
    %87 = vector.load %arg9[%c0_28, %c0_29, %c0_30] : memref<1x1x256xf32, #tpu.memory_space<vmem>>, vector<1x1x256xf32>
    %88 = vector.shape_cast %87 : vector<1x1x256xf32> to vector<1x256xf32>
    %89 = vector.broadcast %88 : vector<1x256xf32> to vector<32x256xf32>
    %90 = arith.addf %86, %89 : vector<32x256xf32>
    %c0_31 = arith.constant 0 : index
    %c0_32 = arith.constant 0 : index
    %c0_33 = arith.constant 0 : index
    %91 = vector.load %arg10[%c0_31, %c0_32, %c0_33] : memref<1x1x256xf32, #tpu.memory_space<vmem>>, vector<1x1x256xf32>
    %92 = vector.shape_cast %91 : vector<1x1x256xf32> to vector<1x256xf32>
    %c0_34 = arith.constant 0 : index
    %c0_35 = arith.constant 0 : index
    %c0_36 = arith.constant 0 : index
    %93 = vector.load %arg11[%c0_34, %c0_35, %c0_36] : memref<1x1x256xf32, #tpu.memory_space<vmem>>, vector<1x1x256xf32>
    %94 = vector.shape_cast %93 : vector<1x1x256xf32> to vector<1x256xf32>
    %cst_37 = arith.constant dense<0.000000e+00> : vector<32xf32>
    %95 = vector.multi_reduction <add>, %90, %cst_37 [1] : vector<32x256xf32> to vector<32xf32>
    %96 = vector.shape_cast %95 : vector<32xf32> to vector<32x1xf32>
    %cst_38 = arith.constant 2.560000e+02 : f32
    %97 = vector.broadcast %cst_38 : f32 to vector<32x1xf32>
    %98 = arith.divf %96, %97 : vector<32x1xf32>
    %99 = vector.broadcast %98 : vector<32x1xf32> to vector<32x256xf32>
    %100 = arith.subf %90, %99 : vector<32x256xf32>
    %101 = arith.mulf %100, %100 : vector<32x256xf32>
    %cst_39 = arith.constant dense<0.000000e+00> : vector<32xf32>
    %102 = vector.multi_reduction <add>, %101, %cst_39 [1] : vector<32x256xf32> to vector<32xf32>
    %103 = vector.shape_cast %102 : vector<32xf32> to vector<32x1xf32>
    %cst_40 = arith.constant 2.560000e+02 : f32
    %104 = vector.broadcast %cst_40 : f32 to vector<32x1xf32>
    %105 = arith.divf %103, %104 : vector<32x1xf32>
    %106 = vector.broadcast %98 : vector<32x1xf32> to vector<32x256xf32>
    %107 = arith.subf %90, %106 : vector<32x256xf32>
    %cst_41 = arith.constant 9.99999974E-6 : f32
    %108 = vector.broadcast %cst_41 : f32 to vector<32x1xf32>
    %109 = arith.addf %105, %108 : vector<32x1xf32>
    %110 = math.rsqrt %109 : vector<32x1xf32>
    %111 = vector.broadcast %110 : vector<32x1xf32> to vector<32x256xf32>
    %112 = arith.mulf %107, %111 : vector<32x256xf32>
    %113 = vector.broadcast %92 : vector<1x256xf32> to vector<32x256xf32>
    %114 = arith.mulf %112, %113 : vector<32x256xf32>
    %115 = vector.broadcast %94 : vector<1x256xf32> to vector<32x256xf32>
    %116 = arith.addf %114, %115 : vector<32x256xf32>
    %c0_42 = arith.constant 0 : index
    %c0_43 = arith.constant 0 : index
    %c0_44 = arith.constant 0 : index
    %117 = vector.load %arg12[%c0_42, %c0_43, %c0_44] : memref<1x256x1024xbf16, #tpu.memory_space<vmem>>, vector<1x256x1024xbf16>
    %118 = vector.shape_cast %117 : vector<1x256x1024xbf16> to vector<256x1024xbf16>
    %119 = arith.truncf %116 : vector<32x256xf32> to vector<32x256xbf16>
    %cst_45 = arith.constant dense<0.000000e+00> : vector<32x1024xf32>
    %120 = tpu.matmul %119, %118, %cst_45 {dimension_numbers = #tpu.dot_dimension_numbers<[1], [0], [0], [1], [0, 0, 1, 1], [], []>} : vector<32x256xbf16>, vector<256x1024xbf16>, vector<32x1024xf32> -> vector<32x1024xf32>
    %c0_46 = arith.constant 0 : index
    %c0_47 = arith.constant 0 : index
    %c0_48 = arith.constant 0 : index
    %121 = vector.load %arg13[%c0_46, %c0_47, %c0_48] : memref<1x1x1024xf32, #tpu.memory_space<vmem>>, vector<1x1x1024xf32>
    %122 = vector.shape_cast %121 : vector<1x1x1024xf32> to vector<1x1024xf32>
    %123 = vector.broadcast %122 : vector<1x1024xf32> to vector<32x1024xf32>
    %124 = arith.addf %120, %123 : vector<32x1024xf32>
    %cst_49 = arith.constant 1.702000e+00 : f32
    %125 = vector.broadcast %cst_49 : f32 to vector<32x1024xf32>
    %126 = arith.mulf %125, %124 : vector<32x1024xf32>
    %127 = arith.negf %126 : vector<32x1024xf32>
    %128 = math.exp %127 : vector<32x1024xf32>
    %cst_50 = arith.constant 1.000000e+00 : f32
    %129 = vector.broadcast %cst_50 : f32 to vector<32x1024xf32>
    %130 = arith.addf %129, %128 : vector<32x1024xf32>
    %131 = arith.divf %129, %130 : vector<32x1024xf32>
    %132 = arith.mulf %124, %131 : vector<32x1024xf32>
    %c0_51 = arith.constant 0 : index
    %c0_52 = arith.constant 0 : index
    %c0_53 = arith.constant 0 : index
    %133 = vector.load %arg14[%c0_51, %c0_52, %c0_53] : memref<1x1024x256xbf16, #tpu.memory_space<vmem>>, vector<1x1024x256xbf16>
    %134 = vector.shape_cast %133 : vector<1x1024x256xbf16> to vector<1024x256xbf16>
    %135 = arith.truncf %132 : vector<32x1024xf32> to vector<32x1024xbf16>
    %cst_54 = arith.constant dense<0.000000e+00> : vector<32x256xf32>
    %136 = tpu.matmul %135, %134, %cst_54 {dimension_numbers = #tpu.dot_dimension_numbers<[1], [0], [0], [1], [0, 0, 1, 1], [], []>} : vector<32x1024xbf16>, vector<1024x256xbf16>, vector<32x256xf32> -> vector<32x256xf32>
    %137 = arith.addf %90, %136 : vector<32x256xf32>
    %c0_55 = arith.constant 0 : index
    %c0_56 = arith.constant 0 : index
    %c0_57 = arith.constant 0 : index
    %138 = vector.load %arg15[%c0_55, %c0_56, %c0_57] : memref<1x1x256xf32, #tpu.memory_space<vmem>>, vector<1x1x256xf32>
    %139 = vector.shape_cast %138 : vector<1x1x256xf32> to vector<1x256xf32>
    %140 = vector.broadcast %139 : vector<1x256xf32> to vector<32x256xf32>
    %141 = arith.addf %137, %140 : vector<32x256xf32>
    %c0_58 = arith.constant 0 : index
    %c0_59 = arith.constant 0 : index
    %142 = vector.load %arg20[%c0_58, %c0_59] : memref<32x256xf32, #tpu.memory_space<vmem>>, vector<32x256xf32>
    tpu.vector_store %arg20[%c0_58, %c0_59], %141 {strides = array<i32>} : memref<32x256xf32, #tpu.memory_space<vmem>>, vector<32x256xf32>,
    %c1_i32 = arith.constant 1 : i32
    %143 = arith.cmpi eq, %arg0, %c1_i32 : i32
    %144 = arith.extui %143 : i1 to i32
    %c0_i32_60 = arith.constant 0 : i32
    %145 = arith.cmpi ne, %144, %c0_i32_60 : i32
    scf.if %145 {
      %c0_61 = arith.constant 0 : index
      %c0_62 = arith.constant 0 : index
      %146 = vector.load %arg20[%c0_61, %c0_62] : memref<32x256xf32, #tpu.memory_space<vmem>>, vector<1x256xf32>
      %c0_63 = arith.constant 0 : index
      %c0_64 = arith.constant 0 : index
      %147 = vector.load %arg16[%c0_63, %c0_64] : memref<1x256xf32, #tpu.memory_space<vmem>>, vector<1x256xf32>
      %c0_65 = arith.constant 0 : index
      %c0_66 = arith.constant 0 : index
      %148 = vector.load %arg17[%c0_65, %c0_66] : memref<1x256xf32, #tpu.memory_space<vmem>>, vector<1x256xf32>
      %cst_67 = arith.constant dense<0.000000e+00> : vector<1xf32>
      %149 = vector.multi_reduction <add>, %146, %cst_67 [1] : vector<1x256xf32> to vector<1xf32>
      %150 = vector.shape_cast %149 : vector<1xf32> to vector<1x1xf32>
      %cst_68 = arith.constant 2.560000e+02 : f32
      %151 = vector.broadcast %cst_68 : f32 to vector<1x1xf32>
      %152 = arith.divf %150, %151 : vector<1x1xf32>
      %153 = vector.broadcast %152 : vector<1x1xf32> to vector<1x256xf32>
      %154 = arith.subf %146, %153 : vector<1x256xf32>
      %155 = arith.mulf %154, %154 : vector<1x256xf32>
      %cst_69 = arith.constant dense<0.000000e+00> : vector<1xf32>
      %156 = vector.multi_reduction <add>, %155, %cst_69 [1] : vector<1x256xf32> to vector<1xf32>
      %157 = vector.shape_cast %156 : vector<1xf32> to vector<1x1xf32>
      %cst_70 = arith.constant 2.560000e+02 : f32
      %158 = vector.broadcast %cst_70 : f32 to vector<1x1xf32>
      %159 = arith.divf %157, %158 : vector<1x1xf32>
      %160 = vector.broadcast %152 : vector<1x1xf32> to vector<1x256xf32>
      %161 = arith.subf %146, %160 : vector<1x256xf32>
      %cst_71 = arith.constant 9.99999974E-6 : f32
      %162 = vector.broadcast %cst_71 : f32 to vector<1x1xf32>
      %163 = arith.addf %159, %162 : vector<1x1xf32>
      %164 = math.rsqrt %163 : vector<1x1xf32>
      %165 = vector.broadcast %164 : vector<1x1xf32> to vector<1x256xf32>
      %166 = arith.mulf %161, %165 : vector<1x256xf32>
      %167 = arith.mulf %166, %147 : vector<1x256xf32>
      %168 = arith.addf %167, %148 : vector<1x256xf32>
      %c0_72 = arith.constant 0 : index
      %c0_73 = arith.constant 0 : index
      %169 = vector.load %arg18[%c0_72, %c0_73] : memref<256x128xf32, #tpu.memory_space<vmem>>, vector<256x128xf32>
      %cst_74 = arith.constant dense<0.000000e+00> : vector<1x128xf32>
      %170 = tpu.matmul %168, %169, %cst_74 {dimension_numbers = #tpu.dot_dimension_numbers<[1], [0], [0], [1], [0, 0, 1, 1], [], []>} : vector<1x256xf32>, vector<256x128xf32>, vector<1x128xf32> -> vector<1x128xf32>
      %c0_75 = arith.constant 0 : index
      %c0_76 = arith.constant 0 : index
      %171 = vector.load %arg19[%c0_75, %c0_76] : memref<2x128xf32, #tpu.memory_space<vmem>>, vector<1x128xf32>
      tpu.vector_store %arg19[%c0_75, %c0_76], %170 {strides = array<i32>} : memref<2x128xf32, #tpu.memory_space<vmem>>, vector<1x128xf32>,
      %c16 = arith.constant 16 : index
      %c0_77 = arith.constant 0 : index
      %172 = vector.load %arg20[%c16, %c0_77] : memref<32x256xf32, #tpu.memory_space<vmem>>, vector<1x256xf32>
      %c0_78 = arith.constant 0 : index
      %c0_79 = arith.constant 0 : index
      %173 = vector.load %arg16[%c0_78, %c0_79] : memref<1x256xf32, #tpu.memory_space<vmem>>, vector<1x256xf32>
      %c0_80 = arith.constant 0 : index
      %c0_81 = arith.constant 0 : index
      %174 = vector.load %arg17[%c0_80, %c0_81] : memref<1x256xf32, #tpu.memory_space<vmem>>, vector<1x256xf32>
      %cst_82 = arith.constant dense<0.000000e+00> : vector<1xf32>
      %175 = vector.multi_reduction <add>, %172, %cst_82 [1] : vector<1x256xf32> to vector<1xf32>
      %176 = vector.shape_cast %175 : vector<1xf32> to vector<1x1xf32>
      %cst_83 = arith.constant 2.560000e+02 : f32
      %177 = vector.broadcast %cst_83 : f32 to vector<1x1xf32>
      %178 = arith.divf %176, %177 : vector<1x1xf32>
      %179 = vector.broadcast %178 : vector<1x1xf32> to vector<1x256xf32>
      %180 = arith.subf %172, %179 : vector<1x256xf32>
      %181 = arith.mulf %180, %180 : vector<1x256xf32>
      %cst_84 = arith.constant dense<0.000000e+00> : vector<1xf32>
      %182 = vector.multi_reduction <add>, %181, %cst_84 [1] : vector<1x256xf32> to vector<1xf32>
      %183 = vector.shape_cast %182 : vector<1xf32> to vector<1x1xf32>
      %cst_85 = arith.constant 2.560000e+02 : f32
      %184 = vector.broadcast %cst_85 : f32 to vector<1x1xf32>
      %185 = arith.divf %183, %184 : vector<1x1xf32>
      %186 = vector.broadcast %178 : vector<1x1xf32> to vector<1x256xf32>
      %187 = arith.subf %172, %186 : vector<1x256xf32>
      %cst_86 = arith.constant 9.99999974E-6 : f32
      %188 = vector.broadcast %cst_86 : f32 to vector<1x1xf32>
      %189 = arith.addf %185, %188 : vector<1x1xf32>
      %190 = math.rsqrt %189 : vector<1x1xf32>
      %191 = vector.broadcast %190 : vector<1x1xf32> to vector<1x256xf32>
      %192 = arith.mulf %187, %191 : vector<1x256xf32>
      %193 = arith.mulf %192, %173 : vector<1x256xf32>
      %194 = arith.addf %193, %174 : vector<1x256xf32>
      %c0_87 = arith.constant 0 : index
      %c0_88 = arith.constant 0 : index
      %195 = vector.load %arg18[%c0_87, %c0_88] : memref<256x128xf32, #tpu.memory_space<vmem>>, vector<256x128xf32>
      %cst_89 = arith.constant dense<0.000000e+00> : vector<1x128xf32>
      %196 = tpu.matmul %194, %195, %cst_89 {dimension_numbers = #tpu.dot_dimension_numbers<[1], [0], [0], [1], [0, 0, 1, 1], [], []>} : vector<1x256xf32>, vector<256x128xf32>, vector<1x128xf32> -> vector<1x128xf32>
      %c1 = arith.constant 1 : index
      %c0_90 = arith.constant 0 : index
      %197 = vector.load %arg19[%c1, %c0_90] : memref<2x128xf32, #tpu.memory_space<vmem>>, vector<1x128xf32>
      tpu.vector_store %arg19[%c1, %c0_90], %196 {strides = array<i32>} : memref<2x128xf32, #tpu.memory_space<vmem>>, vector<1x128xf32>,
    } else {
    }
    return
  }
  func.func @transform_0(%arg0: i32) -> (i32, i32) {
    %c0_i32 = arith.constant 0 : i32
    %c0_i32_0 = arith.constant 0 : i32
    %c0_i32_1 = arith.constant 0 : i32
    return %c0_i32, %c0_i32_0 : i32, i32
  }
  func.func @transform_1(%arg0: i32) -> (i32, i32) {
    %c0_i32 = arith.constant 0 : i32
    %c0_i32_0 = arith.constant 0 : i32
    %c0_i32_1 = arith.constant 0 : i32
    return %c0_i32, %c0_i32_0 : i32, i32
  }
  func.func @transform_2(%arg0: i32) -> (i32, i32) {
    %c0_i32 = arith.constant 0 : i32
    %c0_i32_0 = arith.constant 0 : i32
    %c0_i32_1 = arith.constant 0 : i32
    return %c0_i32, %c0_i32_0 : i32, i32
  }
  func.func @transform_3(%arg0: i32) -> (i32, i32, i32) {
    %c0_i32 = arith.constant 0 : i32
    %c0_i32_0 = arith.constant 0 : i32
    %c0_i32_1 = arith.constant 0 : i32
    return %arg0, %c0_i32, %c0_i32_0 : i32, i32, i32
  }
  func.func @transform_4(%arg0: i32) -> (i32, i32, i32) {
    %c0_i32 = arith.constant 0 : i32
    %c0_i32_0 = arith.constant 0 : i32
    %c0_i32_1 = arith.constant 0 : i32
    return %arg0, %c0_i32, %c0_i32_0 : i32, i32, i32
  }
  func.func @transform_5(%arg0: i32) -> (i32, i32, i32) {
    %c0_i32 = arith.constant 0 : i32
    %c0_i32_0 = arith.constant 0 : i32
    %c0_i32_1 = arith.constant 0 : i32
    return %arg0, %c0_i32, %c0_i32_0 : i32, i32, i32
  }
  func.func @transform_6(%arg0: i32) -> (i32, i32, i32) {
    %c0_i32 = arith.constant 0 : i32
    %c0_i32_0 = arith.constant 0 : i32
    %c0_i32_1 = arith.constant 0 : i32
    return %arg0, %c0_i32, %c0_i32_0 : i32, i32, i32
  }
  func.func @transform_7(%arg0: i32) -> (i32, i32, i32) {
    %c0_i32 = arith.constant 0 : i32
    %c0_i32_0 = arith.constant 0 : i32
    %c0_i32_1 = arith.constant 0 : i32
    return %arg0, %c0_i32, %c0_i32_0 : i32, i32, i32
  }
  func.func @transform_8(%arg0: i32) -> (i32, i32, i32) {
    %c0_i32 = arith.constant 0 : i32
    %c0_i32_0 = arith.constant 0 : i32
    %c0_i32_1 = arith.constant 0 : i32
    return %arg0, %c0_i32, %c0_i32_0 : i32, i32, i32
  }
  func.func @transform_9(%arg0: i32) -> (i32, i32, i32) {
    %c0_i32 = arith.constant 0 : i32
    %c0_i32_0 = arith.constant 0 : i32
    %c0_i32_1 = arith.constant 0 : i32
    return %arg0, %c0_i32, %c0_i32_0 : i32, i32, i32
  }
  func.func @transform_10(%arg0: i32) -> (i32, i32, i32) {
    %c0_i32 = arith.constant 0 : i32
    %c0_i32_0 = arith.constant 0 : i32
    %c0_i32_1 = arith.constant 0 : i32
    return %arg0, %c0_i32, %c0_i32_0 : i32, i32, i32
  }
  func.func @transform_11(%arg0: i32) -> (i32, i32, i32) {
    %c0_i32 = arith.constant 0 : i32
    %c0_i32_0 = arith.constant 0 : i32
    %c0_i32_1 = arith.constant 0 : i32
    return %arg0, %c0_i32, %c0_i32_0 : i32, i32, i32
  }
  func.func @transform_12(%arg0: i32) -> (i32, i32, i32) {
    %c0_i32 = arith.constant 0 : i32
    %c0_i32_0 = arith.constant 0 : i32
    %c0_i32_1 = arith.constant 0 : i32
    return %arg0, %c0_i32, %c0_i32_0 : i32, i32, i32
  }
  func.func @transform_13(%arg0: i32) -> (i32, i32, i32) {
    %c0_i32 = arith.constant 0 : i32
    %c0_i32_0 = arith.constant 0 : i32
    %c0_i32_1 = arith.constant 0 : i32
    return %arg0, %c0_i32, %c0_i32_0 : i32, i32, i32
  }
  func.func @transform_14(%arg0: i32) -> (i32, i32, i32) {
    %c0_i32 = arith.constant 0 : i32
    %c0_i32_0 = arith.constant 0 : i32
    %c0_i32_1 = arith.constant 0 : i32
    return %arg0, %c0_i32, %c0_i32_0 : i32, i32, i32
  }
  func.func @transform_15(%arg0: i32) -> (i32, i32) {
    %c0_i32 = arith.constant 0 : i32
    %c0_i32_0 = arith.constant 0 : i32
    %c0_i32_1 = arith.constant 0 : i32
    return %c0_i32, %c0_i32_0 : i32, i32
  }
  func.func @transform_16(%arg0: i32) -> (i32, i32) {
    %c0_i32 = arith.constant 0 : i32
    %c0_i32_0 = arith.constant 0 : i32
    %c0_i32_1 = arith.constant 0 : i32
    return %c0_i32, %c0_i32_0 : i32, i32
  }
  func.func @transform_17(%arg0: i32) -> (i32, i32) {
    %c0_i32 = arith.constant 0 : i32
    %c0_i32_0 = arith.constant 0 : i32
    %c0_i32_1 = arith.constant 0 : i32
    return %c0_i32, %c0_i32_0 : i32, i32
  }
  func.func @transform_18(%arg0: i32) -> (i32, i32) {
    %c0_i32 = arith.constant 0 : i32
    %c0_i32_0 = arith.constant 0 : i32
    %c0_i32_1 = arith.constant 0 : i32
    return %c0_i32, %c0_i32_0 : i32, i32
  }
}

</mosaic_0001>

<llo_original>
// kernel: tpu_custom_call.1
$region0: #{tpu_custom_call.1}
  #allocation0 [shape = 'u32[]', space=smem, size = 0x4, offset = 0x4, fixed_abs, tag = 'smem constant byte address 0x4 - core index']
  #allocation1 [shape = 'u32[144,128]{1,0:T(1,128)}', space=vmem, size = 0x12000, scoped, tag = 'internal scratch']
  #allocation2 [shape = 'f32[32,256]{1,0:T(8,128)}', space=vmem, size = 0x8000, scoped, tag = 'scratch operand']
  %s0 = inlined_call_operand.hbm [shape: f32[32,256], index: 0, kind: input, shape index: {}]
  %s1 = inlined_call_operand.hbm [shape: f32[1,256], index: 1, kind: input, shape index: {}]
  %s2 = inlined_call_operand.hbm [shape: f32[1,256], index: 2, kind: input, shape index: {}]
  %s3 = inlined_call_operand.vmem [shape: f32[2,1,256], index: 3, kind: input, shape index: {}]
  %s4 = inlined_call_operand.hbm [shape: f32[2,1,256], index: 4, kind: input, shape index: {}]
  %s5 = inlined_call_operand.hbm [shape: bf16[2,256,768], index: 5, kind: input, shape index: {}]
  %s6 = inlined_call_operand.hbm [shape: f32[2,1,768], index: 6, kind: input, shape index: {}]
  %s7 = inlined_call_operand.hbm [shape: bf16[2,256,256], index: 7, kind: input, shape index: {}]
  %s8 = inlined_call_operand.hbm [shape: f32[2,1,256], index: 8, kind: input, shape index: {}]
  %s9 = inlined_call_operand.hbm [shape: f32[2,1,256], index: 9, kind: input, shape index: {}]
  %s10 = inlined_call_operand.hbm [shape: f32[2,1,256], index: 10, kind: input, shape index: {}]
  %s11 = inlined_call_operand.hbm [shape: bf16[2,256,1024], index: 11, kind: input, shape index: {}]
  %s12 = inlined_call_operand.vmem [shape: f32[2,1,1024], index: 12, kind: input, shape index: {}]
  %s13 = inlined_call_operand.hbm [shape: bf16[2,1024,256], index: 13, kind: input, shape index: {}]
  %s14 = inlined_call_operand.vmem [shape: f32[2,1,256], index: 14, kind: input, shape index: {}]
  %s15 = inlined_call_operand.vmem [shape: f32[1,256], index: 15, kind: input, shape index: {}]
  %s16 = inlined_call_operand.vmem [shape: f32[1,256], index: 16, kind: input, shape index: {}]
  %s17 = inlined_call_operand.hbm [shape: f32[256,128], index: 17, kind: input, shape index: {}]
  %s18 = inlined_call_operand.hbm [shape: f32[2,128], index: 18, kind: output, shape index: {}]
  %s19 = sld [smem:[#allocation0]]
  $region165: #{tpu_custom_call.1} parent=0
    _
  %s21 = ssub.s32 1, %s19
  %s22 = scalar_select 0, %s21, %s19
  $region1: #{tpu_custom_call.1} parent=0
    #allocation3 [shape = 'u8[32768]{0}', space=vmem, size = 0x8000, scoped, tag = 'input window, operand 0, single buffered']
    #allocation4 [shape = 's32[2]{0}', space=sflag, size = 0x8, scoped, tag = 'scoped memory for tpu_custom_call.1']
    #allocation5 [shape = 's32[2]{0}', space=sflag, size = 0x8, scoped, tag = 'scoped memory for tpu_custom_call.1']
    #allocation6 [shape = 'u8[1024]{0}', space=vmem, size = 0x400, scoped, tag = 'input window, operand 1, single buffered']
    #allocation7 [shape = 's32[1]{0}', space=sflag, size = 0x4, scoped, tag = 'scoped memory for tpu_custom_call.1']
    #allocation8 [shape = 'u8[1024]{0}', space=vmem, size = 0x400, scoped, tag = 'input window, operand 2, single buffered']
    #allocation9 [shape = 'u8[2048]{0}', space=vmem, size = 0x800, scoped, tag = 'input window, operand 4']
    #allocation10 [shape = 's32[2]{0}', space=sflag, size = 0x8, scoped, tag = 'scoped memory for tpu_custom_call.1']
    #allocation11 [shape = 'u8[786432]{0}', space=vmem, size = 0xc0000, scoped, tag = 'input window, operand 5']
    #allocation12 [shape = 'u8[6144]{0}', space=vmem, size = 0x1800, scoped, tag = 'input window, operand 6']
    #allocation13 [shape = 's32[2]{0}', space=sflag, size = 0x8, scoped, tag = 'scoped memory for tpu_custom_call.1']
    #allocation14 [shape = 'u8[262144]{0}', space=vmem, size = 0x40000, scoped, tag = 'input window, operand 7']
    #allocation15 [shape = 'u8[2048]{0}', space=vmem, size = 0x800, scoped, tag = 'input window, operand 8']
    #allocation16 [shape = 's32[2]{0}', space=sflag, size = 0x8, scoped, tag = 'scoped memory for tpu_custom_call.1']
    #allocation17 [shape = 'u8[2048]{0}', space=vmem, size = 0x800, scoped, tag = 'input window, operand 9']
    #allocation18 [shape = 'u8[2048]{0}', space=vmem, size = 0x800, scoped, tag = 'input window, operand 10']
    #allocation19 [shape = 's32[2]{0}', space=sflag, size = 0x8, scoped, tag = 'scoped memory for tpu_custom_call.1']
    #allocation20 [shape = 'u8[1048576]{0}', space=vmem, size = 0x100000, scoped, tag = 'input window, operand 11']
    #allocation21 [shape = 'u8[1048576]{0}', space=vmem, size = 0x100000, scoped, tag = 'input window, operand 13']
    #allocation22 [shape = 's32[2]{0}', space=sflag, size = 0x8, scoped, tag = 'scoped memory for tpu_custom_call.1']
    #allocation23 [shape = 'u8[131072]{0}', space=vmem, size = 0x20000, scoped, tag = 'input window, operand 17, single buffered']
    #allocation24 [shape = 'u8[1024]{0}', space=vmem, size = 0x400, scoped, tag = 'output window, operand 0, single buffered']
    %23 = vsyncpa [#allocation4], 0
    %24 = vsyncpa [#allocation7], 0
    %25 = vsyncpa [#allocation10], 0
    %s26 = scalar_lea.sflag [#allocation10], 1
    %27 = vsyncpa %s26, 0
    %28 = vsyncpa [#allocation13], 0
    %s29 = scalar_lea.sflag [#allocation13], 1
    %30 = vsyncpa %s29, 0
    %31 = vsyncpa [#allocation16], 0
    %s32 = scalar_lea.sflag [#allocation16], 1
    %33 = vsyncpa %s32, 0
    %34 = vsyncpa [#allocation19], 0
    %s35 = scalar_lea.sflag [#allocation19], 1
    %36 = vsyncpa %s35, 0
    %37 = vsyncpa [#allocation22], 0
    %s38 = scalar_lea.sflag [#allocation22], 1
    %39 = vsyncpa %s38, 0
    %40 = vsyncpa [#allocation5], 0
    loop: start=0, step=1, limit=4
    $region2: #{tpu_custom_call.1} parent=1 // loop_pre_header
      _
    $region3: #{tpu_custom_call.1} parent=1 // loop_header
      %s42 = sphi 0, %s46
      %p43 = scmp.ge.s32.totalorder %s42, 4
      %s50 = sphi 0, %s50
      %s52 = sphi 0, %s50
      %s53 = sphi 0, %s52
      %s67 = sphi 0, %s53
      %s71 = sphi 0, %s71
      %s73 = sphi 0, %s71
      %s74 = sphi 0, %s73
      %s88 = sphi 0, %s74
      %s92 = sphi 0, %s92
      %s94 = sphi 0, %s92
      %s95 = sphi 0, %s94
      %s109 = sphi 0, %s95
      %s115 = sphi 0, %s117
      %s118 = sphi 0, %s115
      %s119 = sphi 0, %s118
      %s135 = sphi 0, %s119
      %s141 = sphi 0, %s143
      %s144 = sphi 0, %s141
      %s145 = sphi 0, %s144
      %s161 = sphi 0, %s145
      %s167 = sphi 0, %s169
      %s170 = sphi 0, %s167
      %s171 = sphi 0, %s170
      %s187 = sphi 0, %s171
      %s193 = sphi 0, %s195
      %s196 = sphi 0, %s193
      %s197 = sphi 0, %s196
      %s213 = sphi 0, %s197
      %s219 = sphi 0, %s221
      %s222 = sphi 0, %s219
      %s223 = sphi 0, %s222
      %s239 = sphi 0, %s223
      %s245 = sphi 0, %s247
      %s248 = sphi 0, %s245
      %s249 = sphi 0, %s248
      %s265 = sphi 0, %s249
      %s271 = sphi 0, %s273
      %s274 = sphi 0, %s271
      %s275 = sphi 0, %s274
      %s291 = sphi 0, %s275
      %s297 = sphi 0, %s299
      %s300 = sphi 0, %s297
      %s301 = sphi 0, %s300
      %s317 = sphi 0, %s301
      %s323 = sphi 0, %s325
      %s326 = sphi 0, %s323
      %s327 = sphi 0, %s326
      %s343 = sphi 0, %s327
      %s349 = sphi 0, %s351
      %s352 = sphi 0, %s349
      %s353 = sphi 0, %s352
      %s369 = sphi 0, %s353
      %s375 = sphi 0, %s377
      %s378 = sphi 0, %s375
      %s379 = sphi 0, %s378
      %s395 = sphi 0, %s379
      %s401 = sphi 0, %s403
      %s404 = sphi 0, %s401
      %s405 = sphi 0, %s404
      %s421 = sphi 0, %s405
      %s425 = sphi 0, %s425
      %s427 = sphi 0, %s425
      %s428 = sphi 0, %s427
      %s442 = sphi 0, %s428
      %s446 = sphi 0, %s446
      %s448 = sphi 0, %s446
      %s449 = sphi 0, %s448
      %s463 = sphi 0, %s449
      %s467 = sphi 0, %s467
      %s469 = sphi 0, %s467
      %s470 = sphi 0, %s469
      %s484 = sphi 0, %s470
      %s488 = sphi 0, %s488
      %s490 = sphi 0, %s488
      %s491 = sphi 0, %s490
      %s505 = sphi 0, %s491
    $region4: #{tpu_custom_call.1} parent=1 // loop_header_branch
      %45 = sbr.rel (%p43) target = $region8
    $region5: #{tpu_custom_call.1} parent=1 // loop_body
      %s47 = ssub.s32 %s42, 1
      %s48 = ssub.s32 %s42, 2
      %s49 = sadd.s32 %s42, 1
      %s51 = sadd.s32 %s50, 1
      %p54 = scmp.eq.s32.totalorder %s42, 1
      %p55 = scmp.ne.s32.totalorder %s50, %s52
      %p56 = scmp.eq.s32.totalorder %s42, 0
      %p57 = por %p55, %p56
      %p58 = scmp.ne.s32.totalorder %s50, %s52
      %p59 = scmp.eq.s32.totalorder %s47, 1
      %p60 = por %p58, %p59
      %p61 = scmp.ne.s32.totalorder %s52, %s53
      %p62 = scmp.eq.s32.totalorder %s47, 0
      %p63 = por %p61, %p62
      %p64 = scmp.ne.s32.totalorder %s52, %s53
      %p65 = scmp.eq.s32.totalorder %s48, 1
      %p66 = por %p64, %p65
      %p68 = scmp.ne.s32.totalorder %s53, %s67
      %p69 = scmp.eq.s32.totalorder %s48, 0
      %p70 = por %p68, %p69
      %s72 = sadd.s32 %s71, 1
      %p75 = scmp.eq.s32.totalorder %s42, 1
      %p76 = scmp.ne.s32.totalorder %s71, %s73
      %p77 = scmp.eq.s32.totalorder %s42, 0
      %p78 = por %p76, %p77
      %p79 = scmp.ne.s32.totalorder %s71, %s73
      %p80 = scmp.eq.s32.totalorder %s47, 1
      %p81 = por %p79, %p80
      %p82 = scmp.ne.s32.totalorder %s73, %s74
      %p83 = scmp.eq.s32.totalorder %s47, 0
      %p84 = por %p82, %p83
      %p85 = scmp.ne.s32.totalorder %s73, %s74
      %p86 = scmp.eq.s32.totalorder %s48, 1
      %p87 = por %p85, %p86
      %p89 = scmp.ne.s32.totalorder %s74, %s88
      %p90 = scmp.eq.s32.totalorder %s48, 0
      %p91 = por %p89, %p90
      %s93 = sadd.s32 %s92, 1
      %p96 = scmp.eq.s32.totalorder %s42, 1
      %p97 = scmp.ne.s32.totalorder %s92, %s94
      %p98 = scmp.eq.s32.totalorder %s42, 0
      %p99 = por %p97, %p98
      %p100 = scmp.ne.s32.totalorder %s92, %s94
      %p101 = scmp.eq.s32.totalorder %s47, 1
      %p102 = por %p100, %p101
      %p103 = scmp.ne.s32.totalorder %s94, %s95
      %p104 = scmp.eq.s32.totalorder %s47, 0
      %p105 = por %p103, %p104
      %p106 = scmp.ne.s32.totalorder %s94, %s95
      %p107 = scmp.eq.s32.totalorder %s48, 1
      %p108 = por %p106, %p107
      %p110 = scmp.ne.s32.totalorder %s95, %s109
      %p111 = scmp.eq.s32.totalorder %s48, 0
      %p112 = por %p110, %p111
      %s113 = ssub.s32 %s42, %s49
      %p114 = scmp.eq.s32.totalorder %s113, 0
      %s116 = sadd.s32 %s115, 1
      %s117 = scalar_select %p114, %s115, %s116
      %p120 = pneg %p114
      %p121 = scmp.eq.s32.totalorder %s42, 1
      %p122 = por %p120, %p121
      %p123 = scmp.ne.s32.totalorder %s115, %s118
      %p124 = scmp.eq.s32.totalorder %s42, 0
      %p125 = por %p123, %p124
      %p126 = scmp.ne.s32.totalorder %s115, %s118
      %p127 = scmp.eq.s32.totalorder %s47, 1
      %p128 = por %p126, %p127
      %p129 = scmp.ne.s32.totalorder %s118, %s119
      %p130 = scmp.eq.s32.totalorder %s47, 0
      %p131 = por %p129, %p130
      %p132 = scmp.ne.s32.totalorder %s118, %s119
      %p133 = scmp.eq.s32.totalorder %s48, 1
      %p134 = por %p132, %p133
      %p136 = scmp.ne.s32.totalorder %s119, %s135
      %p137 = scmp.eq.s32.totalorder %s48, 0
      %p138 = por %p136, %p137
      %s139 = ssub.s32 %s42, %s49
      %p140 = scmp.eq.s32.totalorder %s139, 0
      %s142 = sadd.s32 %s141, 1
      %s143 = scalar_select %p140, %s141, %s142
      %p146 = pneg %p140
      %p147 = scmp.eq.s32.totalorder %s42, 1
      %p148 = por %p146, %p147
      %p149 = scmp.ne.s32.totalorder %s141, %s144
      %p150 = scmp.eq.s32.totalorder %s42, 0
      %p151 = por %p149, %p150
      %p152 = scmp.ne.s32.totalorder %s141, %s144
      %p153 = scmp.eq.s32.totalorder %s47, 1
      %p154 = por %p152, %p153
      %p155 = scmp.ne.s32.totalorder %s144, %s145
      %p156 = scmp.eq.s32.totalorder %s47, 0
      %p157 = por %p155, %p156
      %p158 = scmp.ne.s32.totalorder %s144, %s145
      %p159 = scmp.eq.s32.totalorder %s48, 1
      %p160 = por %p158, %p159
      %p162 = scmp.ne.s32.totalorder %s145, %s161
      %p163 = scmp.eq.s32.totalorder %s48, 0
      %p164 = por %p162, %p163
      %s165 = ssub.s32 %s42, %s49
      %p166 = scmp.eq.s32.totalorder %s165, 0
      %s168 = sadd.s32 %s167, 1
      %s169 = scalar_select %p166, %s167, %s168
      %p172 = pneg %p166
      %p173 = scmp.eq.s32.totalorder %s42, 1
      %p174 = por %p172, %p173
      %p175 = scmp.ne.s32.totalorder %s167, %s170
      %p176 = scmp.eq.s32.totalorder %s42, 0
      %p177 = por %p175, %p176
      %p178 = scmp.ne.s32.totalorder %s167, %s170
      %p179 = scmp.eq.s32.totalorder %s47, 1
      %p180 = por %p178, %p179
      %p181 = scmp.ne.s32.totalorder %s170, %s171
      %p182 = scmp.eq.s32.totalorder %s47, 0
      %p183 = por %p181, %p182
      %p184 = scmp.ne.s32.totalorder %s170, %s171
      %p185 = scmp.eq.s32.totalorder %s48, 1
      %p186 = por %p184, %p185
      %p188 = scmp.ne.s32.totalorder %s171, %s187
      %p189 = scmp.eq.s32.totalorder %s48, 0
      %p190 = por %p188, %p189
      %s191 = ssub.s32 %s42, %s49
      %p192 = scmp.eq.s32.totalorder %s191, 0
      %s194 = sadd.s32 %s193, 1
      %s195 = scalar_select %p192, %s193, %s194
      %p198 = pneg %p192
      %p199 = scmp.eq.s32.totalorder %s42, 1
      %p200 = por %p198, %p199
      %p201 = scmp.ne.s32.totalorder %s193, %s196
      %p202 = scmp.eq.s32.totalorder %s42, 0
      %p203 = por %p201, %p202
      %p204 = scmp.ne.s32.totalorder %s193, %s196
      %p205 = scmp.eq.s32.totalorder %s47, 1
      %p206 = por %p204, %p205
      %p207 = scmp.ne.s32.totalorder %s196, %s197
      %p208 = scmp.eq.s32.totalorder %s47, 0
      %p209 = por %p207, %p208
      %p210 = scmp.ne.s32.totalorder %s196, %s197
      %p211 = scmp.eq.s32.totalorder %s48, 1
      %p212 = por %p210, %p211
      %p214 = scmp.ne.s32.totalorder %s197, %s213
      %p215 = scmp.eq.s32.totalorder %s48, 0
      %p216 = por %p214, %p215
      %s217 = ssub.s32 %s42, %s49
      %p218 = scmp.eq.s32.totalorder %s217, 0
      %s220 = sadd.s32 %s219, 1
      %s221 = scalar_select %p218, %s219, %s220
      %p224 = pneg %p218
      %p225 = scmp.eq.s32.totalorder %s42, 1
      %p226 = por %p224, %p225
      %p227 = scmp.ne.s32.totalorder %s219, %s222
      %p228 = scmp.eq.s32.totalorder %s42, 0
      %p229 = por %p227, %p228
      %p230 = scmp.ne.s32.totalorder %s219, %s222
      %p231 = scmp.eq.s32.totalorder %s47, 1
      %p232 = por %p230, %p231
      %p233 = scmp.ne.s32.totalorder %s222, %s223
      %p234 = scmp.eq.s32.totalorder %s47, 0
      %p235 = por %p233, %p234
      %p236 = scmp.ne.s32.totalorder %s222, %s223
      %p237 = scmp.eq.s32.totalorder %s48, 1
      %p238 = por %p236, %p237
      %p240 = scmp.ne.s32.totalorder %s223, %s239
      %p241 = scmp.eq.s32.totalorder %s48, 0
      %p242 = por %p240, %p241
      %s243 = ssub.s32 %s42, %s49
      %p244 = scmp.eq.s32.totalorder %s243, 0
      %s246 = sadd.s32 %s245, 1
      %s247 = scalar_select %p244, %s245, %s246
      %p250 = pneg %p244
      %p251 = scmp.eq.s32.totalorder %s42, 1
      %p252 = por %p250, %p251
      %p253 = scmp.ne.s32.totalorder %s245, %s248
      %p254 = scmp.eq.s32.totalorder %s42, 0
      %p255 = por %p253, %p254
      %p256 = scmp.ne.s32.totalorder %s245, %s248
      %p257 = scmp.eq.s32.totalorder %s47, 1
      %p258 = por %p256, %p257
      %p259 = scmp.ne.s32.totalorder %s248, %s249
      %p260 = scmp.eq.s32.totalorder %s47, 0
      %p261 = por %p259, %p260
      %p262 = scmp.ne.s32.totalorder %s248, %s249
      %p263 = scmp.eq.s32.totalorder %s48, 1
      %p264 = por %p262, %p263
      %p266 = scmp.ne.s32.totalorder %s249, %s265
      %p267 = scmp.eq.s32.totalorder %s48, 0
      %p268 = por %p266, %p267
      %s269 = ssub.s32 %s42, %s49
      %p270 = scmp.eq.s32.totalorder %s269, 0
      %s272 = sadd.s32 %s271, 1
      %s273 = scalar_select %p270, %s271, %s272
      %p276 = pneg %p270
      %p277 = scmp.eq.s32.totalorder %s42, 1
      %p278 = por %p276, %p277
      %p279 = scmp.ne.s32.totalorder %s271, %s274
      %p280 = scmp.eq.s32.totalorder %s42, 0
      %p281 = por %p279, %p280
      %p282 = scmp.ne.s32.totalorder %s271, %s274
      %p283 = scmp.eq.s32.totalorder %s47, 1
      %p284 = por %p282, %p283
      %p285 = scmp.ne.s32.totalorder %s274, %s275
      %p286 = scmp.eq.s32.totalorder %s47, 0
      %p287 = por %p285, %p286
      %p288 = scmp.ne.s32.totalorder %s274, %s275
      %p289 = scmp.eq.s32.totalorder %s48, 1
      %p290 = por %p288, %p289
      %p292 = scmp.ne.s32.totalorder %s275, %s291
      %p293 = scmp.eq.s32.totalorder %s48, 0
      %p294 = por %p292, %p293
      %s295 = ssub.s32 %s42, %s49
      %p296 = scmp.eq.s32.totalorder %s295, 0
      %s298 = sadd.s32 %s297, 1
      %s299 = scalar_select %p296, %s297, %s298
      %p302 = pneg %p296
      %p303 = scmp.eq.s32.totalorder %s42, 1
      %p304 = por %p302, %p303
      %p305 = scmp.ne.s32.totalorder %s297, %s300
      %p306 = scmp.eq.s32.totalorder %s42, 0
      %p307 = por %p305, %p306
      %p308 = scmp.ne.s32.totalorder %s297, %s300
      %p309 = scmp.eq.s32.totalorder %s47, 1
      %p310 = por %p308, %p309
      %p311 = scmp.ne.s32.totalorder %s300, %s301
      %p312 = scmp.eq.s32.totalorder %s47, 0
      %p313 = por %p311, %p312
      %p314 = scmp.ne.s32.totalorder %s300, %s301
      %p315 = scmp.eq.s32.totalorder %s48, 1
      %p316 = por %p314, %p315
      %p318 = scmp.ne.s32.totalorder %s301, %s317
      %p319 = scmp.eq.s32.totalorder %s48, 0
      %p320 = por %p318, %p319
      %s321 = ssub.s32 %s42, %s49
      %p322 = scmp.eq.s32.totalorder %s321, 0
      %s324 = sadd.s32 %s323, 1
      %s325 = scalar_select %p322, %s323, %s324
      %p328 = pneg %p322
      %p329 = scmp.eq.s32.totalorder %s42, 1
      %p330 = por %p328, %p329
      %p331 = scmp.ne.s32.totalorder %s323, %s326
      %p332 = scmp.eq.s32.totalorder %s42, 0
      %p333 = por %p331, %p332
      %p334 = scmp.ne.s32.totalorder %s323, %s326
      %p335 = scmp.eq.s32.totalorder %s47, 1
      %p336 = por %p334, %p335
      %p337 = scmp.ne.s32.totalorder %s326, %s327
      %p338 = scmp.eq.s32.totalorder %s47, 0
      %p339 = por %p337, %p338
      %p340 = scmp.ne.s32.totalorder %s326, %s327
      %p341 = scmp.eq.s32.totalorder %s48, 1
      %p342 = por %p340, %p341
      %p344 = scmp.ne.s32.totalorder %s327, %s343
      %p345 = scmp.eq.s32.totalorder %s48, 0
      %p346 = por %p344, %p345
      %s347 = ssub.s32 %s42, %s49
      %p348 = scmp.eq.s32.totalorder %s347, 0
      %s350 = sadd.s32 %s349, 1
      %s351 = scalar_select %p348, %s349, %s350
      %p354 = pneg %p348
      %p355 = scmp.eq.s32.totalorder %s42, 1
      %p356 = por %p354, %p355
      %p357 = scmp.ne.s32.totalorder %s349, %s352
      %p358 = scmp.eq.s32.totalorder %s42, 0
      %p359 = por %p357, %p358
      %p360 = scmp.ne.s32.totalorder %s349, %s352
      %p361 = scmp.eq.s32.totalorder %s47, 1
      %p362 = por %p360, %p361
      %p363 = scmp.ne.s32.totalorder %s352, %s353
      %p364 = scmp.eq.s32.totalorder %s47, 0
      %p365 = por %p363, %p364
      %p366 = scmp.ne.s32.totalorder %s352, %s353
      %p367 = scmp.eq.s32.totalorder %s48, 1
      %p368 = por %p366, %p367
      %p370 = scmp.ne.s32.totalorder %s353, %s369
      %p371 = scmp.eq.s32.totalorder %s48, 0
      %p372 = por %p370, %p371
      %s373 = ssub.s32 %s42, %s49
      %p374 = scmp.eq.s32.totalorder %s373, 0
      %s376 = sadd.s32 %s375, 1
      %s377 = scalar_select %p374, %s375, %s376
      %p380 = pneg %p374
      %p381 = scmp.eq.s32.totalorder %s42, 1
      %p382 = por %p380, %p381
      %p383 = scmp.ne.s32.totalorder %s375, %s378
      %p384 = scmp.eq.s32.totalorder %s42, 0
      %p385 = por %p383, %p384
      %p386 = scmp.ne.s32.totalorder %s375, %s378
      %p387 = scmp.eq.s32.totalorder %s47, 1
      %p388 = por %p386, %p387
      %p389 = scmp.ne.s32.totalorder %s378, %s379
      %p390 = scmp.eq.s32.totalorder %s47, 0
      %p391 = por %p389, %p390
      %p392 = scmp.ne.s32.totalorder %s378, %s379
      %p393 = scmp.eq.s32.totalorder %s48, 1
      %p394 = por %p392, %p393
      %p396 = scmp.ne.s32.totalorder %s379, %s395
      %p397 = scmp.eq.s32.totalorder %s48, 0
      %p398 = por %p396, %p397
      %s399 = ssub.s32 %s42, %s49
      %p400 = scmp.eq.s32.totalorder %s399, 0
      %s402 = sadd.s32 %s401, 1
      %s403 = scalar_select %p400, %s401, %s402
      %p406 = pneg %p400
      %p407 = scmp.eq.s32.totalorder %s42, 1
      %p408 = por %p406, %p407
      %p409 = scmp.ne.s32.totalorder %s401, %s404
      %p410 = scmp.eq.s32.totalorder %s42, 0
      %p411 = por %p409, %p410
      %p412 = scmp.ne.s32.totalorder %s401, %s404
      %p413 = scmp.eq.s32.totalorder %s47, 1
      %p414 = por %p412, %p413
      %p415 = scmp.ne.s32.totalorder %s404, %s405
      %p416 = scmp.eq.s32.totalorder %s47, 0
      %p417 = por %p415, %p416
      %p418 = scmp.ne.s32.totalorder %s404, %s405
      %p419 = scmp.eq.s32.totalorder %s48, 1
      %p420 = por %p418, %p419
      %p422 = scmp.ne.s32.totalorder %s405, %s421
      %p423 = scmp.eq.s32.totalorder %s48, 0
      %p424 = por %p422, %p423
      %s426 = sadd.s32 %s425, 1
      %p429 = scmp.eq.s32.totalorder %s42, 1
      %p430 = scmp.ne.s32.totalorder %s425, %s427
      %p431 = scmp.eq.s32.totalorder %s42, 0
      %p432 = por %p430, %p431
      %p433 = scmp.ne.s32.totalorder %s425, %s427
      %p434 = scmp.eq.s32.totalorder %s47, 1
      %p435 = por %p433, %p434
      %p436 = scmp.ne.s32.totalorder %s427, %s428
      %p437 = scmp.eq.s32.totalorder %s47, 0
      %p438 = por %p436, %p437
      %p439 = scmp.ne.s32.totalorder %s427, %s428
      %p440 = scmp.eq.s32.totalorder %s48, 1
      %p441 = por %p439, %p440
      %p443 = scmp.ne.s32.totalorder %s428, %s442
      %p444 = scmp.eq.s32.totalorder %s48, 0
      %p445 = por %p443, %p444
      %s447 = sadd.s32 %s446, 1
      %p450 = scmp.eq.s32.totalorder %s42, 1
      %p451 = scmp.ne.s32.totalorder %s446, %s448
      %p452 = scmp.eq.s32.totalorder %s42, 0
      %p453 = por %p451, %p452
      %p454 = scmp.ne.s32.totalorder %s446, %s448
      %p455 = scmp.eq.s32.totalorder %s47, 1
      %p456 = por %p454, %p455
      %p457 = scmp.ne.s32.totalorder %s448, %s449
      %p458 = scmp.eq.s32.totalorder %s47, 0
      %p459 = por %p457, %p458
      %p460 = scmp.ne.s32.totalorder %s448, %s449
      %p461 = scmp.eq.s32.totalorder %s48, 1
      %p462 = por %p460, %p461
      %p464 = scmp.ne.s32.totalorder %s449, %s463
      %p465 = scmp.eq.s32.totalorder %s48, 0
      %p466 = por %p464, %p465
      %s468 = sadd.s32 %s467, 1
      %p471 = scmp.eq.s32.totalorder %s42, 1
      %p472 = scmp.ne.s32.totalorder %s467, %s469
      %p473 = scmp.eq.s32.totalorder %s42, 0
      %p474 = por %p472, %p473
      %p475 = scmp.ne.s32.totalorder %s467, %s469
      %p476 = scmp.eq.s32.totalorder %s47, 1
      %p477 = por %p475, %p476
      %p478 = scmp.ne.s32.totalorder %s469, %s470
      %p479 = scmp.eq.s32.totalorder %s47, 0
      %p480 = por %p478, %p479
      %p481 = scmp.ne.s32.totalorder %s469, %s470
      %p482 = scmp.eq.s32.totalorder %s48, 1
      %p483 = por %p481, %p482
      %p485 = scmp.ne.s32.totalorder %s470, %s484
      %p486 = scmp.eq.s32.totalorder %s48, 0
      %p487 = por %p485, %p486
      %s489 = sadd.s32 %s488, 1
      %p492 = scmp.eq.s32.totalorder %s42, 1
      %p493 = scmp.ne.s32.totalorder %s488, %s490
      %p494 = scmp.eq.s32.totalorder %s42, 0
      %p495 = por %p493, %p494
      %p496 = scmp.ne.s32.totalorder %s488, %s490
      %p497 = scmp.eq.s32.totalorder %s47, 1
      %p498 = por %p496, %p497
      %p499 = scmp.ne.s32.totalorder %s490, %s491
      %p500 = scmp.eq.s32.totalorder %s47, 0
      %p501 = por %p499, %p500
      %p502 = scmp.ne.s32.totalorder %s490, %s491
      %p503 = scmp.eq.s32.totalorder %s48, 1
      %p504 = por %p502, %p503
      %p506 = scmp.ne.s32.totalorder %s491, %s505
      %p507 = scmp.eq.s32.totalorder %s48, 0
      %p508 = por %p506, %p507
      %p509 = scmp.le.s32.totalorder 1, %s42
      %p510 = scmp.lt.s32.totalorder %s42, 3
      %p511 = pnand %p509, %p510
      %p512 = pneg %p511
      // Predicated region
      $region9: #{tpu_custom_call.1} parent=5 // pred_check
        _
      $region10: #{tpu_custom_call.1} parent=5 // pred_check_branch
        %514 = sbr.rel (%p511) target = $region12
      $region11: #{tpu_custom_call.1} parent=5 // pred_region
        %s515 = ssub.s32 %s42, 1
        // Predicated region
        $region13: #{tpu_custom_call.1} parent=11 // pred_check
          %p516 = pneg %p63
        $region14: #{tpu_custom_call.1} parent=11 // pred_check_branch
          %518 = sbr.rel (%p516) target = $region16
        $region15: #{tpu_custom_call.1} parent=11 // pred_region
          %s520 = ssub.s32 1024, 1024
          %521 = vsyncadd [#allocation4], %s520
          %s522 = sshll.u32 [#allocation3], 4
          %s523 = int_to_ptr.vmem [resolvable:$true] %s522
          %528 = dma.hbm_to_vmem [thread:$0]  %s0, 1024, %s523, [#allocation4], 256, 256, 16
        $region16: #{tpu_custom_call.1} parent=11 // pred_fallthru
          _
        // Predicated region
        $region17: #{tpu_custom_call.1} parent=11 // pred_check
          %p529 = pneg %p84
        $region18: #{tpu_custom_call.1} parent=11 // pred_check_branch
          %531 = sbr.rel (%p529) target = $region20
        $region19: #{tpu_custom_call.1} parent=11 // pred_region
          %s533 = ssub.s32 32, 32
          %534 = vsyncadd [#allocation7], %s533
          %s536 = sshll.u32 [#allocation6], 4
          %s537 = int_to_ptr.vmem [resolvable:$true] %s536
          %539 = dma.hbm_to_vmem [thread:$0]  %s1, 32, %s537, [#allocation7]
        $region20: #{tpu_custom_call.1} parent=11 // pred_fallthru
          _
        // Predicated region
        $region21: #{tpu_custom_call.1} parent=11 // pred_check
          %p540 = pneg %p105
        $region22: #{tpu_custom_call.1} parent=11 // pred_check_branch
          %542 = sbr.rel (%p540) target = $region24
        $region23: #{tpu_custom_call.1} parent=11 // pred_region
          %s544 = ssub.s32 32, 32
          %545 = vsyncadd [#allocation7], %s544
          %s547 = sshll.u32 [#allocation8], 4
          %s548 = int_to_ptr.vmem [resolvable:$true] %s547
          %550 = dma.hbm_to_vmem [thread:$0]  %s2, 32, %s548, [#allocation7]
        $region24: #{tpu_custom_call.1} parent=11 // pred_fallthru
          _
        // Predicated region
        $region25: #{tpu_custom_call.1} parent=11 // pred_check
          %p551 = pneg %p438
        $region26: #{tpu_custom_call.1} parent=11 // pred_check_branch
          %553 = sbr.rel (%p551) target = $region28
        $region27: #{tpu_custom_call.1} parent=11 // pred_region
          _
        $region28: #{tpu_custom_call.1} parent=11 // pred_fallthru
          _
        // Predicated region
        $region29: #{tpu_custom_call.1} parent=11 // pred_check
          %p554 = pneg %p459
        $region30: #{tpu_custom_call.1} parent=11 // pred_check_branch
          %556 = sbr.rel (%p554) target = $region32
        $region31: #{tpu_custom_call.1} parent=11 // pred_region
          _
        $region32: #{tpu_custom_call.1} parent=11 // pred_fallthru
          _
        // Predicated region
        $region33: #{tpu_custom_call.1} parent=11 // pred_check
          %p557 = pneg %p480
        $region34: #{tpu_custom_call.1} parent=11 // pred_check_branch
          %559 = sbr.rel (%p557) target = $region36
        $region35: #{tpu_custom_call.1} parent=11 // pred_region
          %s561 = ssub.s32 4096, 4096
          %562 = vsyncadd [#allocation22], %s561
          %s563 = sshll.u32 [#allocation23], 4
          %s564 = int_to_ptr.vmem [resolvable:$true] %s563
          %569 = dma.hbm_to_vmem [thread:$0]  %s17, 4096, %s564, [#allocation22], 128, 128, 8
        $region36: #{tpu_custom_call.1} parent=11 // pred_fallthru
          _
      $region12: #{tpu_custom_call.1} parent=5 // pred_fallthru
        _
      %p570 = scmp.lt.s32.totalorder %s42, 2
      // Predicated region
      $region37: #{tpu_custom_call.1} parent=5 // pred_check
        %p571 = pneg %p570
      $region38: #{tpu_custom_call.1} parent=5 // pred_check_branch
        %573 = sbr.rel (%p571) target = $region40
      $region39: #{tpu_custom_call.1} parent=5 // pred_region
        // Predicated region
        $region41: #{tpu_custom_call.1} parent=39 // pred_check
          %p574 = pneg %p125
        $region42: #{tpu_custom_call.1} parent=39 // pred_check_branch
          %576 = sbr.rel (%p574) target = $region44
        $region43: #{tpu_custom_call.1} parent=39 // pred_region
          %p577 = scmp.lt.s32.totalorder %s42, 1
          %s578 = scalar_select %p577, %s42, 1
          %s579 = smul.addr %s578, 2
          %s580 = scalar_lea.vmem %s3, %s579
        $region44: #{tpu_custom_call.1} parent=39 // pred_fallthru
          _
        // Predicated region
        $region45: #{tpu_custom_call.1} parent=39 // pred_check
          %p581 = pneg %p151
        $region46: #{tpu_custom_call.1} parent=39 // pred_check_branch
          %583 = sbr.rel (%p581) target = $region48
        $region47: #{tpu_custom_call.1} parent=39 // pred_region
          %s584 = sand.u32 %s42, 1
          %s585 = scalar_lea.sflag [#allocation10], %s584
          %s586 = sand.u32 %s141, 1
          %s587 = smul.addr %s586, 2
          %s588 = scalar_lea.vmem [#allocation9], %s587
          %s590 = ssub.s32 32, 32
          %591 = vsyncadd %s585, %s590
          %s592 = smul.addr %s42, 2
          %s593 = smul.addr %s592, 16
          %s594 = scalar_lea.hbm %s4, %s593
          %s596 = sshll.u32 %s588, 4
          %s597 = int_to_ptr.vmem [resolvable:$true] %s596
          %599 = dma.hbm_to_vmem [thread:$0]  %s594, 32, %s597, %s585
        $region48: #{tpu_custom_call.1} parent=39 // pred_fallthru
          _
        // Predicated region
        $region49: #{tpu_custom_call.1} parent=39 // pred_check
          %p600 = pneg %p177
        $region50: #{tpu_custom_call.1} parent=39 // pred_check_branch
          %602 = sbr.rel (%p600) target = $region52
        $region51: #{tpu_custom_call.1} parent=39 // pred_region
          %s603 = sand.u32 %s42, 1
          %s604 = scalar_lea.sflag [#allocation10], %s603
          %s605 = sand.u32 %s167, 1
          %s606 = smul.addr %s605, 768
          %s607 = scalar_lea.vmem [#allocation11], %s606
          %s609 = ssub.s32 12288, 12288
          %610 = vsyncadd %s604, %s609
          %s611 = smul.addr %s42, 192
          %s612 = smul.addr %s611, 64
          %s613 = scalar_lea.hbm %s5, %s612
          %s614 = sshll.u32 %s607, 4
          %s615 = int_to_ptr.vmem [resolvable:$true] %s614
          %620 = dma.hbm_to_vmem [thread:$0]  %s613, 12288, %s615, %s604, 384, 384, 24
        $region52: #{tpu_custom_call.1} parent=39 // pred_fallthru
          _
        // Predicated region
        $region53: #{tpu_custom_call.1} parent=39 // pred_check
          %p621 = pneg %p203
        $region54: #{tpu_custom_call.1} parent=39 // pred_check_branch
          %623 = sbr.rel (%p621) target = $region56
        $region55: #{tpu_custom_call.1} parent=39 // pred_region
          %s624 = sand.u32 %s42, 1
          %s625 = scalar_lea.sflag [#allocation13], %s624
          %s626 = sand.u32 %s193, 1
          %s627 = smul.addr %s626, 6
          %s628 = scalar_lea.vmem [#allocation12], %s627
          %s630 = ssub.s32 96, 96
          %631 = vsyncadd %s625, %s630
          %s632 = smul.addr %s42, 6
          %s633 = smul.addr %s632, 16
          %s634 = scalar_lea.hbm %s6, %s633
          %s636 = sshll.u32 %s628, 4
          %s637 = int_to_ptr.vmem [resolvable:$true] %s636
          %639 = dma.hbm_to_vmem [thread:$0]  %s634, 96, %s637, %s625
        $region56: #{tpu_custom_call.1} parent=39 // pred_fallthru
          _
        // Predicated region
        $region57: #{tpu_custom_call.1} parent=39 // pred_check
          %p640 = pneg %p229
        $region58: #{tpu_custom_call.1} parent=39 // pred_check_branch
          %642 = sbr.rel (%p640) target = $region60
        $region59: #{tpu_custom_call.1} parent=39 // pred_region
          %s643 = sand.u32 %s42, 1
          %s644 = scalar_lea.sflag [#allocation13], %s643
          %s645 = sand.u32 %s219, 1
          %s646 = smul.addr %s645, 256
          %s647 = scalar_lea.vmem [#allocation14], %s646
          %s649 = ssub.s32 4096, 4096
          %650 = vsyncadd %s644, %s649
          %s651 = smul.addr %s42, 64
          %s652 = smul.addr %s651, 64
          %s653 = scalar_lea.hbm %s7, %s652
          %s654 = sshll.u32 %s647, 4
          %s655 = int_to_ptr.vmem [resolvable:$true] %s654
          %660 = dma.hbm_to_vmem [thread:$0]  %s653, 4096, %s655, %s644, 128, 128, 8
        $region60: #{tpu_custom_call.1} parent=39 // pred_fallthru
          _
        // Predicated region
        $region61: #{tpu_custom_call.1} parent=39 // pred_check
          %p661 = pneg %p255
        $region62: #{tpu_custom_call.1} parent=39 // pred_check_branch
          %663 = sbr.rel (%p661) target = $region64
        $region63: #{tpu_custom_call.1} parent=39 // pred_region
          %s664 = sand.u32 %s42, 1
          %s665 = scalar_lea.sflag [#allocation16], %s664
          %s666 = sand.u32 %s245, 1
          %s667 = smul.addr %s666, 2
          %s668 = scalar_lea.vmem [#allocation15], %s667
          %s670 = ssub.s32 32, 32
          %671 = vsyncadd %s665, %s670
          %s672 = smul.addr %s42, 2
          %s673 = smul.addr %s672, 16
          %s674 = scalar_lea.hbm %s8, %s673
          %s676 = sshll.u32 %s668, 4
          %s677 = int_to_ptr.vmem [resolvable:$true] %s676
          %679 = dma.hbm_to_vmem [thread:$0]  %s674, 32, %s677, %s665
        $region64: #{tpu_custom_call.1} parent=39 // pred_fallthru
          _
        // Predicated region
        $region65: #{tpu_custom_call.1} parent=39 // pred_check
          %p680 = pneg %p281
        $region66: #{tpu_custom_call.1} parent=39 // pred_check_branch
          %682 = sbr.rel (%p680) target = $region68
        $region67: #{tpu_custom_call.1} parent=39 // pred_region
          %s683 = sand.u32 %s42, 1
          %s684 = scalar_lea.sflag [#allocation16], %s683
          %s685 = sand.u32 %s271, 1
          %s686 = smul.addr %s685, 2
          %s687 = scalar_lea.vmem [#allocation17], %s686
          %s689 = ssub.s32 32, 32
          %690 = vsyncadd %s684, %s689
          %s691 = smul.addr %s42, 2
          %s692 = smul.addr %s691, 16
          %s693 = scalar_lea.hbm %s9, %s692
          %s695 = sshll.u32 %s687, 4
          %s696 = int_to_ptr.vmem [resolvable:$true] %s695
          %698 = dma.hbm_to_vmem [thread:$0]  %s693, 32, %s696, %s684
        $region68: #{tpu_custom_call.1} parent=39 // pred_fallthru
          _
        // Predicated region
        $region69: #{tpu_custom_call.1} parent=39 // pred_check
          %p699 = pneg %p307
        $region70: #{tpu_custom_call.1} parent=39 // pred_check_branch
          %701 = sbr.rel (%p699) target = $region72
        $region71: #{tpu_custom_call.1} parent=39 // pred_region
          %s702 = sand.u32 %s42, 1
          %s703 = scalar_lea.sflag [#allocation19], %s702
          %s704 = sand.u32 %s297, 1
          %s705 = smul.addr %s704, 2
          %s706 = scalar_lea.vmem [#allocation18], %s705
          %s708 = ssub.s32 32, 32
          %709 = vsyncadd %s703, %s708
          %s710 = smul.addr %s42, 2
          %s711 = smul.addr %s710, 16
          %s712 = scalar_lea.hbm %s10, %s711
          %s714 = sshll.u32 %s706, 4
          %s715 = int_to_ptr.vmem [resolvable:$true] %s714
          %717 = dma.hbm_to_vmem [thread:$0]  %s712, 32, %s715, %s703
        $region72: #{tpu_custom_call.1} parent=39 // pred_fallthru
          _
        // Predicated region
        $region73: #{tpu_custom_call.1} parent=39 // pred_check
          %p718 = pneg %p333
        $region74: #{tpu_custom_call.1} parent=39 // pred_check_branch
          %720 = sbr.rel (%p718) target = $region76
        $region75: #{tpu_custom_call.1} parent=39 // pred_region
          %s721 = sand.u32 %s42, 1
          %s722 = scalar_lea.sflag [#allocation19], %s721
          %s723 = sand.u32 %s323, 1
          %s724 = smul.addr %s723, 1024
          %s725 = scalar_lea.vmem [#allocation20], %s724
          %s727 = ssub.s32 16384, 16384
          %728 = vsyncadd %s722, %s727
          %s729 = smul.addr %s42, 256
          %s730 = smul.addr %s729, 64
          %s731 = scalar_lea.hbm %s11, %s730
          %s732 = sshll.u32 %s725, 4
          %s733 = int_to_ptr.vmem [resolvable:$true] %s732
          %738 = dma.hbm_to_vmem [thread:$0]  %s731, 16384, %s733, %s722, 512, 512, 32
        $region76: #{tpu_custom_call.1} parent=39 // pred_fallthru
          _
        // Predicated region
        $region77: #{tpu_custom_call.1} parent=39 // pred_check
          %p739 = pneg %p359
        $region78: #{tpu_custom_call.1} parent=39 // pred_check_branch
          %741 = sbr.rel (%p739) target = $region80
        $region79: #{tpu_custom_call.1} parent=39 // pred_region
          %p742 = scmp.lt.s32.totalorder %s42, 1
          %s743 = scalar_select %p742, %s42, 1
          %s744 = smul.addr %s743, 8
          %s745 = scalar_lea.vmem %s12, %s744
        $region80: #{tpu_custom_call.1} parent=39 // pred_fallthru
          _
        // Predicated region
        $region81: #{tpu_custom_call.1} parent=39 // pred_check
          %p746 = pneg %p385
        $region82: #{tpu_custom_call.1} parent=39 // pred_check_branch
          %748 = sbr.rel (%p746) target = $region84
        $region83: #{tpu_custom_call.1} parent=39 // pred_region
          %s749 = sand.u32 %s42, 1
          %s750 = scalar_lea.sflag [#allocation22], %s749
          %s751 = sand.u32 %s375, 1
          %s752 = smul.addr %s751, 1024
          %s753 = scalar_lea.vmem [#allocation21], %s752
          %s755 = ssub.s32 16384, 16384
          %756 = vsyncadd %s750, %s755
          %s757 = smul.addr %s42, 256
          %s758 = smul.addr %s757, 64
          %s759 = scalar_lea.hbm %s13, %s758
          %s760 = sshll.u32 %s753, 4
          %s761 = int_to_ptr.vmem [resolvable:$true] %s760
          %766 = dma.hbm_to_vmem [thread:$0]  %s759, 16384, %s761, %s750, 128, 128, 8
        $region84: #{tpu_custom_call.1} parent=39 // pred_fallthru
          _
        // Predicated region
        $region85: #{tpu_custom_call.1} parent=39 // pred_check
          %p767 = pneg %p411
        $region86: #{tpu_custom_call.1} parent=39 // pred_check_branch
          %769 = sbr.rel (%p767) target = $region88
        $region87: #{tpu_custom_call.1} parent=39 // pred_region
          %p770 = scmp.lt.s32.totalorder %s42, 1
          %s771 = scalar_select %p770, %s42, 1
          %s772 = smul.addr %s771, 2
          %s773 = scalar_lea.vmem %s14, %s772
        $region88: #{tpu_custom_call.1} parent=39 // pred_fallthru
          _
      $region40: #{tpu_custom_call.1} parent=5 // pred_fallthru
        _
      %p774 = scmp.le.s32.totalorder 1, %s42
      %p775 = scmp.lt.s32.totalorder %s42, 3
      %p776 = pnand %p774, %p775
      %p777 = pneg %p776
      // Predicated region
      $region89: #{tpu_custom_call.1} parent=5 // pred_check
        _
      $region90: #{tpu_custom_call.1} parent=5 // pred_check_branch
        %779 = sbr.rel (%p776) target = $region92
      $region91: #{tpu_custom_call.1} parent=5 // pred_region
        %s780 = ssub.s32 %s42, 1
        // Predicated region
        $region93: #{tpu_custom_call.1} parent=91 // pred_check
          %p781 = pneg %p63
        $region94: #{tpu_custom_call.1} parent=91 // pred_check_branch
          %783 = sbr.rel (%p781) target = $region96
        $region95: #{tpu_custom_call.1} parent=91 // pred_region
          %784 = dma.done [#allocation4], 1024
        $region96: #{tpu_custom_call.1} parent=91 // pred_fallthru
          _
        // Predicated region
        $region97: #{tpu_custom_call.1} parent=91 // pred_check
          %p785 = pneg %p84
        $region98: #{tpu_custom_call.1} parent=91 // pred_check_branch
          %787 = sbr.rel (%p785) target = $region100
        $region99: #{tpu_custom_call.1} parent=91 // pred_region
          %788 = dma.done [#allocation7], 32
        $region100: #{tpu_custom_call.1} parent=91 // pred_fallthru
          _
        // Predicated region
        $region101: #{tpu_custom_call.1} parent=91 // pred_check
          %p789 = pneg %p105
        $region102: #{tpu_custom_call.1} parent=91 // pred_check_branch
          %791 = sbr.rel (%p789) target = $region104
        $region103: #{tpu_custom_call.1} parent=91 // pred_region
          %792 = dma.done [#allocation7], 32
        $region104: #{tpu_custom_call.1} parent=91 // pred_fallthru
          _
        %s793 = sand.u32 %s47, 1
        %s794 = scalar_lea.sflag [#allocation10], %s793
        %s795 = sand.u32 %s144, 1
        %s796 = smul.addr %s795, 2
        %s797 = scalar_lea.vmem [#allocation9], %s796
        // Predicated region
        $region105: #{tpu_custom_call.1} parent=91 // pred_check
          %p798 = pneg %p157
        $region106: #{tpu_custom_call.1} parent=91 // pred_check_branch
          %800 = sbr.rel (%p798) target = $region108
        $region107: #{tpu_custom_call.1} parent=91 // pred_region
          %801 = dma.done %s794, 32
        $region108: #{tpu_custom_call.1} parent=91 // pred_fallthru
          _
        %s802 = sand.u32 %s47, 1
        %s803 = scalar_lea.sflag [#allocation10], %s802
        %s804 = sand.u32 %s170, 1
        %s805 = smul.addr %s804, 768
        %s806 = scalar_lea.vmem [#allocation11], %s805
        // Predicated region
        $region109: #{tpu_custom_call.1} parent=91 // pred_check
          %p807 = pneg %p183
        $region110: #{tpu_custom_call.1} parent=91 // pred_check_branch
          %809 = sbr.rel (%p807) target = $region112
        $region111: #{tpu_custom_call.1} parent=91 // pred_region
          %810 = dma.done %s803, 12288
        $region112: #{tpu_custom_call.1} parent=91 // pred_fallthru
          _
        %s811 = sand.u32 %s47, 1
        %s812 = scalar_lea.sflag [#allocation13], %s811
        %s813 = sand.u32 %s196, 1
        %s814 = smul.addr %s813, 6
        %s815 = scalar_lea.vmem [#allocation12], %s814
        // Predicated region
        $region113: #{tpu_custom_call.1} parent=91 // pred_check
          %p816 = pneg %p209
        $region114: #{tpu_custom_call.1} parent=91 // pred_check_branch
          %818 = sbr.rel (%p816) target = $region116
        $region115: #{tpu_custom_call.1} parent=91 // pred_region
          %819 = dma.done %s812, 96
        $region116: #{tpu_custom_call.1} parent=91 // pred_fallthru
          _
        %s820 = sand.u32 %s47, 1
        %s821 = scalar_lea.sflag [#allocation13], %s820
        %s822 = sand.u32 %s222, 1
        %s823 = smul.addr %s822, 256
        %s824 = scalar_lea.vmem [#allocation14], %s823
        // Predicated region
        $region117: #{tpu_custom_call.1} parent=91 // pred_check
          %p825 = pneg %p235
        $region118: #{tpu_custom_call.1} parent=91 // pred_check_branch
          %827 = sbr.rel (%p825) target = $region120
        $region119: #{tpu_custom_call.1} parent=91 // pred_region
          %828 = dma.done %s821, 4096
        $region120: #{tpu_custom_call.1} parent=91 // pred_fallthru
          _
        %s829 = sand.u32 %s47, 1
        %s830 = scalar_lea.sflag [#allocation16], %s829
        %s831 = sand.u32 %s248, 1
        %s832 = smul.addr %s831, 2
        %s833 = scalar_lea.vmem [#allocation15], %s832
        // Predicated region
        $region121: #{tpu_custom_call.1} parent=91 // pred_check
          %p834 = pneg %p261
        $region122: #{tpu_custom_call.1} parent=91 // pred_check_branch
          %836 = sbr.rel (%p834) target = $region124
        $region123: #{tpu_custom_call.1} parent=91 // pred_region
          %837 = dma.done %s830, 32
        $region124: #{tpu_custom_call.1} parent=91 // pred_fallthru
          _
        %s838 = sand.u32 %s47, 1
        %s839 = scalar_lea.sflag [#allocation16], %s838
        %s840 = sand.u32 %s274, 1
        %s841 = smul.addr %s840, 2
        %s842 = scalar_lea.vmem [#allocation17], %s841
        // Predicated region
        $region125: #{tpu_custom_call.1} parent=91 // pred_check
          %p843 = pneg %p287
        $region126: #{tpu_custom_call.1} parent=91 // pred_check_branch
          %845 = sbr.rel (%p843) target = $region128
        $region127: #{tpu_custom_call.1} parent=91 // pred_region
          %846 = dma.done %s839, 32
        $region128: #{tpu_custom_call.1} parent=91 // pred_fallthru
          _
        %s847 = sand.u32 %s47, 1
        %s848 = scalar_lea.sflag [#allocation19], %s847
        %s849 = sand.u32 %s300, 1
        %s850 = smul.addr %s849, 2
        %s851 = scalar_lea.vmem [#allocation18], %s850
        // Predicated region
        $region129: #{tpu_custom_call.1} parent=91 // pred_check
          %p852 = pneg %p313
        $region130: #{tpu_custom_call.1} parent=91 // pred_check_branch
          %854 = sbr.rel (%p852) target = $region132
        $region131: #{tpu_custom_call.1} parent=91 // pred_region
          %855 = dma.done %s848, 32
        $region132: #{tpu_custom_call.1} parent=91 // pred_fallthru
          _
        %s856 = sand.u32 %s47, 1
        %s857 = scalar_lea.sflag [#allocation19], %s856
        %s858 = sand.u32 %s326, 1
        %s859 = smul.addr %s858, 1024
        %s860 = scalar_lea.vmem [#allocation20], %s859
        // Predicated region
        $region133: #{tpu_custom_call.1} parent=91 // pred_check
          %p861 = pneg %p339
        $region134: #{tpu_custom_call.1} parent=91 // pred_check_branch
          %863 = sbr.rel (%p861) target = $region136
        $region135: #{tpu_custom_call.1} parent=91 // pred_region
          %864 = dma.done %s857, 16384
        $region136: #{tpu_custom_call.1} parent=91 // pred_fallthru
          _
        %s865 = sand.u32 %s47, 1
        %s866 = scalar_lea.sflag [#allocation22], %s865
        %s867 = sand.u32 %s378, 1
        %s868 = smul.addr %s867, 1024
        %s869 = scalar_lea.vmem [#allocation21], %s868
        // Predicated region
        $region137: #{tpu_custom_call.1} parent=91 // pred_check
          %p870 = pneg %p391
        $region138: #{tpu_custom_call.1} parent=91 // pred_check_branch
          %872 = sbr.rel (%p870) target = $region140
        $region139: #{tpu_custom_call.1} parent=91 // pred_region
          %873 = dma.done %s866, 16384
        $region140: #{tpu_custom_call.1} parent=91 // pred_fallthru
          _
        // Predicated region
        $region141: #{tpu_custom_call.1} parent=91 // pred_check
          %p874 = pneg %p480
        $region142: #{tpu_custom_call.1} parent=91 // pred_check_branch
          %876 = sbr.rel (%p874) target = $region144
        $region143: #{tpu_custom_call.1} parent=91 // pred_region
          %877 = dma.done [#allocation22], 4096
        $region144: #{tpu_custom_call.1} parent=91 // pred_fallthru
          _
        %p878 = pneg %p63
        %p879 = pneg %p60
        %p880 = pneg %p84
        %p881 = pneg %p81
        %p882 = pneg %p105
        %p883 = pneg %p102
        %p884 = scmp.lt.s32.totalorder %s47, 1
        %s885 = scalar_select %p884, %s47, 1
        %s886 = smul.addr %s885, 2
        %s887 = scalar_lea.vmem %s3, %s886
        %p888 = pneg %p131
        %p889 = pneg %p128
        %s890 = sand.u32 %s47, 1
        %s891 = scalar_lea.sflag [#allocation10], %s890
        %s892 = sand.u32 %s144, 1
        %s893 = smul.addr %s892, 2
        %s894 = scalar_lea.vmem [#allocation9], %s893
        %p895 = pneg %p157
        %p896 = pneg %p154
        %s897 = sand.u32 %s47, 1
        %s898 = scalar_lea.sflag [#allocation10], %s897
        %s899 = sand.u32 %s170, 1
        %s900 = smul.addr %s899, 768
        %s901 = scalar_lea.vmem [#allocation11], %s900
        %p902 = pneg %p183
        %p903 = pneg %p180
        %s904 = sand.u32 %s47, 1
        %s905 = scalar_lea.sflag [#allocation13], %s904
        %s906 = sand.u32 %s196, 1
        %s907 = smul.addr %s906, 6
        %s908 = scalar_lea.vmem [#allocation12], %s907
        %p909 = pneg %p209
        %p910 = pneg %p206
        %s911 = sand.u32 %s47, 1
        %s912 = scalar_lea.sflag [#allocation13], %s911
        %s913 = sand.u32 %s222, 1
        %s914 = smul.addr %s913, 256
        %s915 = scalar_lea.vmem [#allocation14], %s914
        %p916 = pneg %p235
        %p917 = pneg %p232
        %s918 = sand.u32 %s47, 1
        %s919 = scalar_lea.sflag [#allocation16], %s918
        %s920 = sand.u32 %s248, 1
        %s921 = smul.addr %s920, 2
        %s922 = scalar_lea.vmem [#allocation15], %s921
        %p923 = pneg %p261
        %p924 = pneg %p258
        %s925 = sand.u32 %s47, 1
        %s926 = scalar_lea.sflag [#allocation16], %s925
        %s927 = sand.u32 %s274, 1
        %s928 = smul.addr %s927, 2
        %s929 = scalar_lea.vmem [#allocation17], %s928
        %p930 = pneg %p287
        %p931 = pneg %p284
        %s932 = sand.u32 %s47, 1
        %s933 = scalar_lea.sflag [#allocation19], %s932
        %s934 = sand.u32 %s300, 1
        %s935 = smul.addr %s934, 2
        %s936 = scalar_lea.vmem [#allocation18], %s935
        %p937 = pneg %p313
        %p938 = pneg %p310
        %s939 = sand.u32 %s47, 1
        %s940 = scalar_lea.sflag [#allocation19], %s939
        %s941 = sand.u32 %s326, 1
        %s942 = smul.addr %s941, 1024
        %s943 = scalar_lea.vmem [#allocation20], %s942
        %p944 = pneg %p339
        %p945 = pneg %p336
        %p946 = scmp.lt.s32.totalorder %s47, 1
        %s947 = scalar_select %p946, %s47, 1
        %s948 = smul.addr %s947, 8
        %s949 = scalar_lea.vmem %s12, %s948
        %p950 = pneg %p365
        %p951 = pneg %p362
        %s952 = sand.u32 %s47, 1
        %s953 = scalar_lea.sflag [#allocation22], %s952
        %s954 = sand.u32 %s378, 1
        %s955 = smul.addr %s954, 1024
        %s956 = scalar_lea.vmem [#allocation21], %s955
        %p957 = pneg %p391
        %p958 = pneg %p388
        %p959 = scmp.lt.s32.totalorder %s47, 1
        %s960 = scalar_select %p959, %s47, 1
        %s961 = smul.addr %s960, 2
        %s962 = scalar_lea.vmem %s14, %s961
        %p963 = pneg %p417
        %p964 = pneg %p414
        %p965 = pneg %p438
        %p966 = pneg %p435
        %p967 = pneg %p459
        %p968 = pneg %p456
        %p969 = pneg %p480
        %p970 = pneg %p477
        %p971 = pneg %p501
        %p972 = pneg %p498
        %p973 = scmp.lt.s32.totalorder %s47, 1
        %s974 = scalar_select %p973, %s47, 1
        %s975 = smul.addr %s974, 2
        %s976 = scalar_lea.vmem %s3, %s975
        %p977 = scmp.lt.s32.totalorder %s47, 1
        %s978 = scalar_select %p977, %s47, 1
        %s979 = smul.addr %s978, 8
        %s980 = scalar_lea.vmem %s12, %s979
        %p981 = scmp.lt.s32.totalorder %s47, 1
        %s982 = scalar_select %p981, %s47, 1
        %s983 = smul.addr %s982, 2
        %s984 = scalar_lea.vmem %s14, %s983
        %p986 = scmp.eq.s32.totalorder %s47, 0
        // Predicated region
        $region145: #{tpu_custom_call.1} parent=91 // pred_check
          %p987 = pneg %p986
        $region146: #{tpu_custom_call.1} parent=91 // pred_check_branch
          %989 = sbr.rel (%p987) target = $region148
        $region147: #{tpu_custom_call.1} parent=91 // pred_region
          %v990 = vld [vmem:[#allocation3] sm:$0xff]
          %v991 = vld [vmem:[#allocation3 + $0x8] sm:$0xff]
          %v992 = vld [vmem:[#allocation3 + $0x10] sm:$0xff]
          %v993 = vld [vmem:[#allocation3 + $0x18] sm:$0xff]
          %v994 = vld [vmem:[#allocation3 + $0x20] sm:$0xff]
          %v995 = vld [vmem:[#allocation3 + $0x28] sm:$0xff]
          %v996 = vld [vmem:[#allocation3 + $0x30] sm:$0xff]
          %v997 = vld [vmem:[#allocation3 + $0x38] sm:$0xff]
          %v998 = vld [vmem:[#allocation6] sm:$0x3]
          %v999 = vld [vmem:[#allocation8] sm:$0x3]
          %v1000 = vadd.f32 %v990, %v991
          %1001 = vadd.xlane.f32.xlu0 %v1000
          %v1002 = vpop.xlane.xlu0 %1001
          %v1003 = vadd.f32 %v992, %v993
          %1004 = vadd.xlane.f32.xlu0 %v1003
          %v1005 = vpop.xlane.xlu0 %1004
          %v1006 = vadd.f32 %v994, %v995
          %1007 = vadd.xlane.f32.xlu0 %v1006
          %v1008 = vpop.xlane.xlu0 %1007
          %v1009 = vadd.f32 %v996, %v997
          %1010 = vadd.xlane.f32.xlu0 %v1009
          %v1011 = vpop.xlane.xlu0 %1010
          %v1012 = vrcp.pop 256.0
          %v1013 = vmul.f32 %v1002, %v1012
          %v1014 = vmul.f32 %v1005, %v1012
          %v1015 = vmul.f32 %v1008, %v1012
          %v1016 = vmul.f32 %v1011, %v1012
          %v1017 = vsub.f32 %v990, %v1013
          %v1018 = vsub.f32 %v991, %v1013
          %v1019 = vsub.f32 %v992, %v1014
          %v1020 = vsub.f32 %v993, %v1014
          %v1021 = vsub.f32 %v994, %v1015
          %v1022 = vsub.f32 %v995, %v1015
          %v1023 = vsub.f32 %v996, %v1016
          %v1024 = vsub.f32 %v997, %v1016
          %v1025 = vmul.f32 %v1017, %v1017
          %v1026 = vmul.f32 %v1018, %v1018
          %v1027 = vmul.f32 %v1019, %v1019
          %v1028 = vmul.f32 %v1020, %v1020
          %v1029 = vmul.f32 %v1021, %v1021
          %v1030 = vmul.f32 %v1022, %v1022
          %v1031 = vmul.f32 %v1023, %v1023
          %v1032 = vmul.f32 %v1024, %v1024
          %v1033 = vadd.f32 %v1025, %v1026
          %1034 = vadd.xlane.f32.xlu0 %v1033
          %v1035 = vpop.xlane.xlu0 %1034
          %v1036 = vadd.f32 %v1027, %v1028
          %1037 = vadd.xlane.f32.xlu0 %v1036
          %v1038 = vpop.xlane.xlu0 %1037
          %v1039 = vadd.f32 %v1029, %v1030
          %1040 = vadd.xlane.f32.xlu0 %v1039
          %v1041 = vpop.xlane.xlu0 %1040
          %v1042 = vadd.f32 %v1031, %v1032
          %1043 = vadd.xlane.f32.xlu0 %v1042
          %v1044 = vpop.xlane.xlu0 %1043
          %v1045 = vmul.f32 %v1035, %v1012
          %v1046 = vmul.f32 %v1038, %v1012
          %v1047 = vmul.f32 %v1041, %v1012
          %v1048 = vmul.f32 %v1044, %v1012
          %v1049 = vadd.f32 %v1045, 1e-05
          %v1050 = vadd.f32 %v1046, 1e-05
          %v1051 = vadd.f32 %v1047, 1e-05
          %v1052 = vadd.f32 %v1048, 1e-05
          %v1053 = vrsqrt.pop %v1049
          %v1054 = vrsqrt.pop %v1050
          %v1055 = vrsqrt.pop %v1051
          %v1056 = vrsqrt.pop %v1052
          %v1057 = vmul.f32 %v1017, %v1053
          %v1058 = vmul.f32 %v1018, %v1053
          %v1059 = vmul.f32 %v1019, %v1054
          %v1060 = vmul.f32 %v1020, %v1054
          %v1061 = vmul.f32 %v1021, %v1055
          %v1062 = vmul.f32 %v1022, %v1055
          %v1063 = vmul.f32 %v1023, %v1056
          %v1064 = vmul.f32 %v1024, %v1056
          %v1066 = vlaneseq
          %v1067 = vshrl.u32 %v1066, 7
          %v1068 = vsub.s32 0, %v1067
          %v1069 = vrot.slane %v998, %v1068
          %v1070 = vlaneseq
          %v1071 = vshrl.u32 %v1070, 7
          %v1072 = vsub.s32 1, %v1071
          %v1073 = vrot.slane %v998, %v1072
          %v1076 = vmul.f32 %v1057, %v1069
          %v1077 = vmul.f32 %v1058, %v1073
          %v1078 = vmul.f32 %v1059, %v1069
          %v1079 = vmul.f32 %v1060, %v1073
          %v1080 = vmul.f32 %v1061, %v1069
          %v1081 = vmul.f32 %v1062, %v1073
          %v1082 = vmul.f32 %v1063, %v1069
          %v1083 = vmul.f32 %v1064, %v1073
          %v1085 = vlaneseq
          %v1086 = vshrl.u32 %v1085, 7
          %v1087 = vsub.s32 0, %v1086
          %v1088 = vrot.slane %v999, %v1087
          %v1089 = vlaneseq
          %v1090 = vshrl.u32 %v1089, 7
          %v1091 = vsub.s32 1, %v1090
          %v1092 = vrot.slane %v999, %v1091
          %v1095 = vadd.f32 %v1076, %v1088
          %v1096 = vadd.f32 %v1077, %v1092
          %v1097 = vadd.f32 %v1078, %v1088
          %v1098 = vadd.f32 %v1079, %v1092
          %v1099 = vadd.f32 %v1080, %v1088
          %v1100 = vadd.f32 %v1081, %v1092
          %v1101 = vadd.f32 %v1082, %v1088
          %v1102 = vadd.f32 %v1083, %v1092
          %1103 = vst [vmem:[#allocation2] sm:$0xff] %v1095
          %1104 = vst [vmem:[#allocation2 + $0x8] sm:$0xff] %v1096
          %1105 = vst [vmem:[#allocation2 + $0x10] sm:$0xff] %v1097
          %1106 = vst [vmem:[#allocation2 + $0x18] sm:$0xff] %v1098
          %1107 = vst [vmem:[#allocation2 + $0x20] sm:$0xff] %v1099
          %1108 = vst [vmem:[#allocation2 + $0x28] sm:$0xff] %v1100
          %1109 = vst [vmem:[#allocation2 + $0x30] sm:$0xff] %v1101
          %1110 = vst [vmem:[#allocation2 + $0x38] sm:$0xff] %v1102
        $region148: #{tpu_custom_call.1} parent=91 // pred_fallthru
          _
        %v1111 = vld [vmem:[#allocation2] sm:$0xff]
        %v1112 = vld [vmem:[#allocation2 + $0x8] sm:$0xff]
        %v1113 = vld [vmem:[#allocation2 + $0x10] sm:$0xff]
        %v1114 = vld [vmem:[#allocation2 + $0x18] sm:$0xff]
        %v1115 = vld [vmem:[#allocation2 + $0x20] sm:$0xff]
        %v1116 = vld [vmem:[#allocation2 + $0x28] sm:$0xff]
        %v1117 = vld [vmem:[#allocation2 + $0x30] sm:$0xff]
        %v1118 = vld [vmem:[#allocation2 + $0x38] sm:$0xff]
        %v1119 = vld [vmem:[%s976] sm:$0x3]
        %v1120 = vld [vmem:[%s797] sm:$0x3]
        %v1121 = vadd.f32 %v1111, %v1112
        %1122 = vadd.xlane.f32.xlu0 %v1121
        %v1123 = vpop.xlane.xlu0 %1122
        %v1124 = vadd.f32 %v1113, %v1114
        %1125 = vadd.xlane.f32.xlu0 %v1124
        %v1126 = vpop.xlane.xlu0 %1125
        %v1127 = vadd.f32 %v1115, %v1116
        %1128 = vadd.xlane.f32.xlu0 %v1127
        %v1129 = vpop.xlane.xlu0 %1128
        %v1130 = vadd.f32 %v1117, %v1118
        %1131 = vadd.xlane.f32.xlu0 %v1130
        %v1132 = vpop.xlane.xlu0 %1131
        %v1133 = vrcp.pop 256.0
        %v1134 = vmul.f32 %v1123, %v1133
        %v1135 = vmul.f32 %v1126, %v1133
        %v1136 = vmul.f32 %v1129, %v1133
        %v1137 = vmul.f32 %v1132, %v1133
        %v1138 = vsub.f32 %v1111, %v1134
        %v1139 = vsub.f32 %v1112, %v1134
        %v1140 = vsub.f32 %v1113, %v1135
        %v1141 = vsub.f32 %v1114, %v1135
        %v1142 = vsub.f32 %v1115, %v1136
        %v1143 = vsub.f32 %v1116, %v1136
        %v1144 = vsub.f32 %v1117, %v1137
        %v1145 = vsub.f32 %v1118, %v1137
        %v1146 = vmul.f32 %v1138, %v1138
        %v1147 = vmul.f32 %v1139, %v1139
        %v1148 = vmul.f32 %v1140, %v1140
        %v1149 = vmul.f32 %v1141, %v1141
        %v1150 = vmul.f32 %v1142, %v1142
        %v1151 = vmul.f32 %v1143, %v1143
        %v1152 = vmul.f32 %v1144, %v1144
        %v1153 = vmul.f32 %v1145, %v1145
        %v1154 = vadd.f32 %v1146, %v1147
        %1155 = vadd.xlane.f32.xlu0 %v1154
        %v1156 = vpop.xlane.xlu0 %1155
        %v1157 = vadd.f32 %v1148, %v1149
        %1158 = vadd.xlane.f32.xlu0 %v1157
        %v1159 = vpop.xlane.xlu0 %1158
        %v1160 = vadd.f32 %v1150, %v1151
        %1161 = vadd.xlane.f32.xlu0 %v1160
        %v1162 = vpop.xlane.xlu0 %1161
        %v1163 = vadd.f32 %v1152, %v1153
        %1164 = vadd.xlane.f32.xlu0 %v1163
        %v1165 = vpop.xlane.xlu0 %1164
        %v1166 = vmul.f32 %v1156, %v1133
        %v1167 = vmul.f32 %v1159, %v1133
        %v1168 = vmul.f32 %v1162, %v1133
        %v1169 = vmul.f32 %v1165, %v1133
        %v1170 = vadd.f32 %v1166, 1e-05
        %v1171 = vadd.f32 %v1167, 1e-05
        %v1172 = vadd.f32 %v1168, 1e-05
        %v1173 = vadd.f32 %v1169, 1e-05
        %v1174 = vrsqrt.pop %v1170
        %v1175 = vrsqrt.pop %v1171
        %v1176 = vrsqrt.pop %v1172
        %v1177 = vrsqrt.pop %v1173
        %v1178 = vmul.f32 %v1138, %v1174
        %v1179 = vmul.f32 %v1139, %v1174
        %v1180 = vmul.f32 %v1140, %v1175
        %v1181 = vmul.f32 %v1141, %v1175
        %v1182 = vmul.f32 %v1142, %v1176
        %v1183 = vmul.f32 %v1143, %v1176
        %v1184 = vmul.f32 %v1144, %v1177
        %v1185 = vmul.f32 %v1145, %v1177
        %v1187 = vlaneseq
        %v1188 = vshrl.u32 %v1187, 7
        %v1189 = vsub.s32 0, %v1188
        %v1190 = vrot.slane %v1119, %v1189
        %v1191 = vlaneseq
        %v1192 = vshrl.u32 %v1191, 7
        %v1193 = vsub.s32 1, %v1192
        %v1194 = vrot.slane %v1119, %v1193
        %v1197 = vmul.f32 %v1178, %v1190
        %v1198 = vmul.f32 %v1179, %v1194
        %v1199 = vmul.f32 %v1180, %v1190
        %v1200 = vmul.f32 %v1181, %v1194
        %v1201 = vmul.f32 %v1182, %v1190
        %v1202 = vmul.f32 %v1183, %v1194
        %v1203 = vmul.f32 %v1184, %v1190
        %v1204 = vmul.f32 %v1185, %v1194
        %v1206 = vlaneseq
        %v1207 = vshrl.u32 %v1206, 7
        %v1208 = vsub.s32 0, %v1207
        %v1209 = vrot.slane %v1120, %v1208
        %v1210 = vlaneseq
        %v1211 = vshrl.u32 %v1210, 7
        %v1212 = vsub.s32 1, %v1211
        %v1213 = vrot.slane %v1120, %v1212
        %v1216 = vadd.f32 %v1197, %v1209
        %v1217 = vadd.f32 %v1198, %v1213
        %v1218 = vadd.f32 %v1199, %v1209
        %v1219 = vadd.f32 %v1200, %v1213
        %v1220 = vadd.f32 %v1201, %v1209
        %v1221 = vadd.f32 %v1202, %v1213
        %v1222 = vadd.f32 %v1203, %v1209
        %v1223 = vadd.f32 %v1204, %v1213
        %v1224 = vld [vmem:[%s806] sm:$0xff]
        %v1225 = vld [vmem:[%s806 + $0x8] sm:$0xff]
        %v1226 = vld [vmem:[%s806 + $0x10] sm:$0xff]
        %v1227 = vld [vmem:[%s806 + $0x18] sm:$0xff]
        %v1228 = vld [vmem:[%s806 + $0x20] sm:$0xff]
        %v1229 = vld [vmem:[%s806 + $0x28] sm:$0xff]
        %v1230 = vld [vmem:[%s806 + $0x30] sm:$0xff]
        %v1231 = vld [vmem:[%s806 + $0x38] sm:$0xff]
        %v1232 = vld [vmem:[%s806 + $0x40] sm:$0xff]
        %v1233 = vld [vmem:[%s806 + $0x48] sm:$0xff]
        %v1234 = vld [vmem:[%s806 + $0x50] sm:$0xff]
        %v1235 = vld [vmem:[%s806 + $0x58] sm:$0xff]
        %v1236 = vld [vmem:[%s806 + $0x60] sm:$0xff]
        %v1237 = vld [vmem:[%s806 + $0x68] sm:$0xff]
        %v1238 = vld [vmem:[%s806 + $0x70] sm:$0xff]
        %v1239 = vld [vmem:[%s806 + $0x78] sm:$0xff]
        %v1240 = vld [vmem:[%s806 + $0x80] sm:$0xff]
        %v1241 = vld [vmem:[%s806 + $0x88] sm:$0xff]
        %v1242 = vld [vmem:[%s806 + $0x90] sm:$0xff]
        %v1243 = vld [vmem:[%s806 + $0x98] sm:$0xff]
        %v1244 = vld [vmem:[%s806 + $0xa0] sm:$0xff]
        %v1245 = vld [vmem:[%s806 + $0xa8] sm:$0xff]
        %v1246 = vld [vmem:[%s806 + $0xb0] sm:$0xff]
        %v1247 = vld [vmem:[%s806 + $0xb8] sm:$0xff]
        %v1248 = vld [vmem:[%s806 + $0xc0] sm:$0xff]
        %v1249 = vld [vmem:[%s806 + $0xc8] sm:$0xff]
        %v1250 = vld [vmem:[%s806 + $0xd0] sm:$0xff]
        %v1251 = vld [vmem:[%s806 + $0xd8] sm:$0xff]
        %v1252 = vld [vmem:[%s806 + $0xe0] sm:$0xff]
        %v1253 = vld [vmem:[%s806 + $0xe8] sm:$0xff]
        %v1254 = vld [vmem:[%s806 + $0xf0] sm:$0xff]
        %v1255 = vld [vmem:[%s806 + $0xf8] sm:$0xff]
        %v1256 = vld [vmem:[%s806 + $0x100] sm:$0xff]
        %v1257 = vld [vmem:[%s806 + $0x108] sm:$0xff]
        %v1258 = vld [vmem:[%s806 + $0x110] sm:$0xff]
        %v1259 = vld [vmem:[%s806 + $0x118] sm:$0xff]
        %v1260 = vld [vmem:[%s806 + $0x120] sm:$0xff]
        %v1261 = vld [vmem:[%s806 + $0x128] sm:$0xff]
        %v1262 = vld [vmem:[%s806 + $0x130] sm:$0xff]
        %v1263 = vld [vmem:[%s806 + $0x138] sm:$0xff]
        %v1264 = vld [vmem:[%s806 + $0x140] sm:$0xff]
        %v1265 = vld [vmem:[%s806 + $0x148] sm:$0xff]
        %v1266 = vld [vmem:[%s806 + $0x150] sm:$0xff]
        %v1267 = vld [vmem:[%s806 + $0x158] sm:$0xff]
        %v1268 = vld [vmem:[%s806 + $0x160] sm:$0xff]
        %v1269 = vld [vmem:[%s806 + $0x168] sm:$0xff]
        %v1270 = vld [vmem:[%s806 + $0x170] sm:$0xff]
        %v1271 = vld [vmem:[%s806 + $0x178] sm:$0xff]
        %v1272 = vld [vmem:[%s806 + $0x180] sm:$0xff]
        %v1273 = vld [vmem:[%s806 + $0x188] sm:$0xff]
        %v1274 = vld [vmem:[%s806 + $0x190] sm:$0xff]
        %v1275 = vld [vmem:[%s806 + $0x198] sm:$0xff]
        %v1276 = vld [vmem:[%s806 + $0x1a0] sm:$0xff]
        %v1277 = vld [vmem:[%s806 + $0x1a8] sm:$0xff]
        %v1278 = vld [vmem:[%s806 + $0x1b0] sm:$0xff]
        %v1279 = vld [vmem:[%s806 + $0x1b8] sm:$0xff]
        %v1280 = vld [vmem:[%s806 + $0x1c0] sm:$0xff]
        %v1281 = vld [vmem:[%s806 + $0x1c8] sm:$0xff]
        %v1282 = vld [vmem:[%s806 + $0x1d0] sm:$0xff]
        %v1283 = vld [vmem:[%s806 + $0x1d8] sm:$0xff]
        %v1284 = vld [vmem:[%s806 + $0x1e0] sm:$0xff]
        %v1285 = vld [vmem:[%s806 + $0x1e8] sm:$0xff]
        %v1286 = vld [vmem:[%s806 + $0x1f0] sm:$0xff]
        %v1287 = vld [vmem:[%s806 + $0x1f8] sm:$0xff]
        %v1288 = vld [vmem:[%s806 + $0x200] sm:$0xff]
        %v1289 = vld [vmem:[%s806 + $0x208] sm:$0xff]
        %v1290 = vld [vmem:[%s806 + $0x210] sm:$0xff]
        %v1291 = vld [vmem:[%s806 + $0x218] sm:$0xff]
        %v1292 = vld [vmem:[%s806 + $0x220] sm:$0xff]
        %v1293 = vld [vmem:[%s806 + $0x228] sm:$0xff]
        %v1294 = vld [vmem:[%s806 + $0x230] sm:$0xff]
        %v1295 = vld [vmem:[%s806 + $0x238] sm:$0xff]
        %v1296 = vld [vmem:[%s806 + $0x240] sm:$0xff]
        %v1297 = vld [vmem:[%s806 + $0x248] sm:$0xff]
        %v1298 = vld [vmem:[%s806 + $0x250] sm:$0xff]
        %v1299 = vld [vmem:[%s806 + $0x258] sm:$0xff]
        %v1300 = vld [vmem:[%s806 + $0x260] sm:$0xff]
        %v1301 = vld [vmem:[%s806 + $0x268] sm:$0xff]
        %v1302 = vld [vmem:[%s806 + $0x270] sm:$0xff]
        %v1303 = vld [vmem:[%s806 + $0x278] sm:$0xff]
        %v1304 = vld [vmem:[%s806 + $0x280] sm:$0xff]
        %v1305 = vld [vmem:[%s806 + $0x288] sm:$0xff]
        %v1306 = vld [vmem:[%s806 + $0x290] sm:$0xff]
        %v1307 = vld [vmem:[%s806 + $0x298] sm:$0xff]
        %v1308 = vld [vmem:[%s806 + $0x2a0] sm:$0xff]
        %v1309 = vld [vmem:[%s806 + $0x2a8] sm:$0xff]
        %v1310 = vld [vmem:[%s806 + $0x2b0] sm:$0xff]
        %v1311 = vld [vmem:[%s806 + $0x2b8] sm:$0xff]
        %v1312 = vld [vmem:[%s806 + $0x2c0] sm:$0xff]
        %v1313 = vld [vmem:[%s806 + $0x2c8] sm:$0xff]
        %v1314 = vld [vmem:[%s806 + $0x2d0] sm:$0xff]
        %v1315 = vld [vmem:[%s806 + $0x2d8] sm:$0xff]
        %v1316 = vld [vmem:[%s806 + $0x2e0] sm:$0xff]
        %v1317 = vld [vmem:[%s806 + $0x2e8] sm:$0xff]
        %v1318 = vld [vmem:[%s806 + $0x2f0] sm:$0xff]
        %v1319 = vld [vmem:[%s806 + $0x2f8] sm:$0xff]
        %v1320 = vpack.c.bf16 %v1218, %v1216
        %v1321 = vpack.c.bf16 %v1219, %v1217
        %v1322 = vpack.c.bf16 %v1222, %v1220
        %v1323 = vpack.c.bf16 %v1223, %v1221
        %v1324 = vld [vmem:[%s815] sm:$0x3f]
        %v1326 = vlaneseq
        %v1327 = vshrl.u32 %v1326, 7
        %v1328 = vsub.s32 0, %v1327
        %v1329 = vrot.slane %v1324, %v1328
        %v1330 = vlaneseq
        %v1331 = vshrl.u32 %v1330, 7
        %v1332 = vsub.s32 1, %v1331
        %v1333 = vrot.slane %v1324, %v1332
        %v1334 = vlaneseq
        %v1335 = vshrl.u32 %v1334, 7
        %v1336 = vsub.s32 2, %v1335
        %v1337 = vrot.slane %v1324, %v1336
        %v1338 = vlaneseq
        %v1339 = vshrl.u32 %v1338, 7
        %v1340 = vsub.s32 3, %v1339
        %v1341 = vrot.slane %v1324, %v1340
        %v1342 = vlaneseq
        %v1343 = vshrl.u32 %v1342, 7
        %v1344 = vsub.s32 4, %v1343
        %v1345 = vrot.slane %v1324, %v1344
        %v1346 = vlaneseq
        %v1347 = vshrl.u32 %v1346, 7
        %v1348 = vsub.s32 5, %v1347
        %v1349 = vrot.slane %v1324, %v1348
        %v1452 = vunpack.c.l.b16 %v1224
        %v1453 = vunpack.c.h.b16 %v1224
        %v1454 = vunpack.c.l.b16 %v1225
        %v1455 = vunpack.c.h.b16 %v1225
        %v1456 = vunpack.c.l.b16 %v1226
        %v1457 = vunpack.c.h.b16 %v1226
        %v1458 = vunpack.c.l.b16 %v1227
        %v1459 = vunpack.c.h.b16 %v1227
        %v1460 = vunpack.c.l.b16 %v1228
        %v1461 = vunpack.c.h.b16 %v1228
        %v1462 = vunpack.c.l.b16 %v1229
        %v1463 = vunpack.c.h.b16 %v1229
        %v1464 = vunpack.c.l.b16 %v1230
        %v1465 = vunpack.c.h.b16 %v1230
        %v1466 = vunpack.c.l.b16 %v1231
        %v1467 = vunpack.c.h.b16 %v1231
        %v1468 = vunpack.c.l.b16 %v1232
        %v1469 = vunpack.c.h.b16 %v1232
        %v1470 = vunpack.c.l.b16 %v1233
        %v1471 = vunpack.c.h.b16 %v1233
        %v1472 = vunpack.c.l.b16 %v1234
        %v1473 = vunpack.c.h.b16 %v1234
        %v1474 = vunpack.c.l.b16 %v1235
        %v1475 = vunpack.c.h.b16 %v1235
        %v1476 = vunpack.c.l.b16 %v1236
        %v1477 = vunpack.c.h.b16 %v1236
        %v1478 = vunpack.c.l.b16 %v1237
        %v1479 = vunpack.c.h.b16 %v1237
        %v1480 = vunpack.c.l.b16 %v1238
        %v1481 = vunpack.c.h.b16 %v1238
        %v1482 = vunpack.c.l.b16 %v1239
        %v1483 = vunpack.c.h.b16 %v1239
        %v1484 = vunpack.c.l.b16 %v1240
        %v1485 = vunpack.c.h.b16 %v1240
        %v1486 = vunpack.c.l.b16 %v1241
        %v1487 = vunpack.c.h.b16 %v1241
        %v1488 = vunpack.c.l.b16 %v1242
        %v1489 = vunpack.c.h.b16 %v1242
        %v1490 = vunpack.c.l.b16 %v1243
        %v1491 = vunpack.c.h.b16 %v1243
        %v1492 = vunpack.c.l.b16 %v1244
        %v1493 = vunpack.c.h.b16 %v1244
        %v1494 = vunpack.c.l.b16 %v1245
        %v1495 = vunpack.c.h.b16 %v1245
        %v1496 = vunpack.c.l.b16 %v1246
        %v1497 = vunpack.c.h.b16 %v1246
        %v1498 = vunpack.c.l.b16 %v1247
        %v1499 = vunpack.c.h.b16 %v1247
        %v1500 = vunpack.c.l.b16 %v1248
        %v1501 = vunpack.c.h.b16 %v1248
        %v1502 = vunpack.c.l.b16 %v1249
        %v1503 = vunpack.c.h.b16 %v1249
        %v1504 = vunpack.c.l.b16 %v1250
        %v1505 = vunpack.c.h.b16 %v1250
        %v1506 = vunpack.c.l.b16 %v1251
        %v1507 = vunpack.c.h.b16 %v1251
        %v1508 = vunpack.c.l.b16 %v1252
        %v1509 = vunpack.c.h.b16 %v1252
        %v1510 = vunpack.c.l.b16 %v1253
        %v1511 = vunpack.c.h.b16 %v1253
        %v1512 = vunpack.c.l.b16 %v1254
        %v1513 = vunpack.c.h.b16 %v1254
        %v1514 = vunpack.c.l.b16 %v1255
        %v1515 = vunpack.c.h.b16 %v1255
        %v1516 = vunpack.c.l.b16 %v1256
        %v1517 = vunpack.c.h.b16 %v1256
        %v1518 = vunpack.c.l.b16 %v1257
        %v1519 = vunpack.c.h.b16 %v1257
        %v1520 = vunpack.c.l.b16 %v1258
        %v1521 = vunpack.c.h.b16 %v1258
        %v1522 = vunpack.c.l.b16 %v1259
        %v1523 = vunpack.c.h.b16 %v1259
        %v1524 = vunpack.c.l.b16 %v1260
        %v1525 = vunpack.c.h.b16 %v1260
        %v1526 = vunpack.c.l.b16 %v1261
        %v1527 = vunpack.c.h.b16 %v1261
        %v1528 = vunpack.c.l.b16 %v1262
        %v1529 = vunpack.c.h.b16 %v1262
        %v1530 = vunpack.c.l.b16 %v1263
        %v1531 = vunpack.c.h.b16 %v1263
        %v1532 = vunpack.c.l.b16 %v1264
        %v1533 = vunpack.c.h.b16 %v1264
        %v1534 = vunpack.c.l.b16 %v1265
        %v1535 = vunpack.c.h.b16 %v1265
        %v1536 = vunpack.c.l.b16 %v1266
        %v1537 = vunpack.c.h.b16 %v1266
        %v1538 = vunpack.c.l.b16 %v1267
        %v1539 = vunpack.c.h.b16 %v1267
        %v1540 = vunpack.c.l.b16 %v1268
        %v1541 = vunpack.c.h.b16 %v1268
        %v1542 = vunpack.c.l.b16 %v1269
        %v1543 = vunpack.c.h.b16 %v1269
        %v1544 = vunpack.c.l.b16 %v1270
        %v1545 = vunpack.c.h.b16 %v1270
        %v1546 = vunpack.c.l.b16 %v1271
        %v1547 = vunpack.c.h.b16 %v1271
        %v1548 = vunpack.c.l.b16 %v1272
        %v1549 = vunpack.c.h.b16 %v1272
        %v1550 = vunpack.c.l.b16 %v1273
        %v1551 = vunpack.c.h.b16 %v1273
        %v1552 = vunpack.c.l.b16 %v1274
        %v1553 = vunpack.c.h.b16 %v1274
        %v1554 = vunpack.c.l.b16 %v1275
        %v1555 = vunpack.c.h.b16 %v1275
        %v1556 = vunpack.c.l.b16 %v1276
        %v1557 = vunpack.c.h.b16 %v1276
        %v1558 = vunpack.c.l.b16 %v1277
        %v1559 = vunpack.c.h.b16 %v1277
        %v1560 = vunpack.c.l.b16 %v1278
        %v1561 = vunpack.c.h.b16 %v1278
        %v1562 = vunpack.c.l.b16 %v1279
        %v1563 = vunpack.c.h.b16 %v1279
        %v1564 = vunpack.c.l.b16 %v1280
        %v1565 = vunpack.c.h.b16 %v1280
        %v1566 = vunpack.c.l.b16 %v1281
        %v1567 = vunpack.c.h.b16 %v1281
        %v1568 = vunpack.c.l.b16 %v1282
        %v1569 = vunpack.c.h.b16 %v1282
        %v1570 = vunpack.c.l.b16 %v1283
        %v1571 = vunpack.c.h.b16 %v1283
        %v1572 = vunpack.c.l.b16 %v1284
        %v1573 = vunpack.c.h.b16 %v1284
        %v1574 = vunpack.c.l.b16 %v1285
        %v1575 = vunpack.c.h.b16 %v1285
        %v1576 = vunpack.c.l.b16 %v1286
        %v1577 = vunpack.c.h.b16 %v1286
        %v1578 = vunpack.c.l.b16 %v1287
        %v1579 = vunpack.c.h.b16 %v1287
        %v1580 = vunpack.c.l.b16 %v1288
        %v1581 = vunpack.c.h.b16 %v1288
        %v1582 = vunpack.c.l.b16 %v1289
        %v1583 = vunpack.c.h.b16 %v1289
        %v1584 = vunpack.c.l.b16 %v1290
        %v1585 = vunpack.c.h.b16 %v1290
        %v1586 = vunpack.c.l.b16 %v1291
        %v1587 = vunpack.c.h.b16 %v1291
        %v1588 = vunpack.c.l.b16 %v1292
        %v1589 = vunpack.c.h.b16 %v1292
        %v1590 = vunpack.c.l.b16 %v1293
        %v1591 = vunpack.c.h.b16 %v1293
        %v1592 = vunpack.c.l.b16 %v1294
        %v1593 = vunpack.c.h.b16 %v1294
        %v1594 = vunpack.c.l.b16 %v1295
        %v1595 = vunpack.c.h.b16 %v1295
        %v1596 = vunpack.c.l.b16 %v1296
        %v1597 = vunpack.c.h.b16 %v1296
        %v1598 = vunpack.c.l.b16 %v1297
        %v1599 = vunpack.c.h.b16 %v1297
        %v1600 = vunpack.c.l.b16 %v1298
        %v1601 = vunpack.c.h.b16 %v1298
        %v1602 = vunpack.c.l.b16 %v1299
        %v1603 = vunpack.c.h.b16 %v1299
        %v1604 = vunpack.c.l.b16 %v1300
        %v1605 = vunpack.c.h.b16 %v1300
        %v1606 = vunpack.c.l.b16 %v1301
        %v1607 = vunpack.c.h.b16 %v1301
        %v1608 = vunpack.c.l.b16 %v1302
        %v1609 = vunpack.c.h.b16 %v1302
        %v1610 = vunpack.c.l.b16 %v1303
        %v1611 = vunpack.c.h.b16 %v1303
        %v1612 = vunpack.c.l.b16 %v1304
        %v1613 = vunpack.c.h.b16 %v1304
        %v1614 = vunpack.c.l.b16 %v1305
        %v1615 = vunpack.c.h.b16 %v1305
        %v1616 = vunpack.c.l.b16 %v1306
        %v1617 = vunpack.c.h.b16 %v1306
        %v1618 = vunpack.c.l.b16 %v1307
        %v1619 = vunpack.c.h.b16 %v1307
        %v1620 = vunpack.c.l.b16 %v1308
        %v1621 = vunpack.c.h.b16 %v1308
        %v1622 = vunpack.c.l.b16 %v1309
        %v1623 = vunpack.c.h.b16 %v1309
        %v1624 = vunpack.c.l.b16 %v1310
        %v1625 = vunpack.c.h.b16 %v1310
        %v1626 = vunpack.c.l.b16 %v1311
        %v1627 = vunpack.c.h.b16 %v1311
        %v1628 = vunpack.c.l.b16 %v1312
        %v1629 = vunpack.c.h.b16 %v1312
        %v1630 = vunpack.c.l.b16 %v1313
        %v1631 = vunpack.c.h.b16 %v1313
        %v1632 = vunpack.c.l.b16 %v1314
        %v1633 = vunpack.c.h.b16 %v1314
        %v1634 = vunpack.c.l.b16 %v1315
        %v1635 = vunpack.c.h.b16 %v1315
        %v1636 = vunpack.c.l.b16 %v1316
        %v1637 = vunpack.c.h.b16 %v1316
        %v1638 = vunpack.c.l.b16 %v1317
        %v1639 = vunpack.c.h.b16 %v1317
        %v1640 = vunpack.c.l.b16 %v1318
        %v1641 = vunpack.c.h.b16 %v1318
        %v1642 = vunpack.c.l.b16 %v1319
        %v1643 = vunpack.c.h.b16 %v1319
        %v1644 = vpack.c.b16 %v1458, %v1452
        %v1645 = vpack.c.b16 %v1459, %v1453
        %v1646 = vpack.c.b16 %v1460, %v1454
        %v1647 = vpack.c.b16 %v1461, %v1455
        %v1648 = vpack.c.b16 %v1462, %v1456
        %v1649 = vpack.c.b16 %v1463, %v1457
        %v1650 = vpack.c.b16 %v1470, %v1464
        %v1651 = vpack.c.b16 %v1471, %v1465
        %v1652 = vpack.c.b16 %v1472, %v1466
        %v1653 = vpack.c.b16 %v1473, %v1467
        %v1654 = vpack.c.b16 %v1474, %v1468
        %v1655 = vpack.c.b16 %v1475, %v1469
        %v1656 = vpack.c.b16 %v1482, %v1476
        %v1657 = vpack.c.b16 %v1483, %v1477
        %v1658 = vpack.c.b16 %v1484, %v1478
        %v1659 = vpack.c.b16 %v1485, %v1479
        %v1660 = vpack.c.b16 %v1486, %v1480
        %v1661 = vpack.c.b16 %v1487, %v1481
        %v1662 = vpack.c.b16 %v1494, %v1488
        %v1663 = vpack.c.b16 %v1495, %v1489
        %v1664 = vpack.c.b16 %v1496, %v1490
        %v1665 = vpack.c.b16 %v1497, %v1491
        %v1666 = vpack.c.b16 %v1498, %v1492
        %v1667 = vpack.c.b16 %v1499, %v1493
        %v1668 = vpack.c.b16 %v1506, %v1500
        %v1669 = vpack.c.b16 %v1507, %v1501
        %v1670 = vpack.c.b16 %v1508, %v1502
        %v1671 = vpack.c.b16 %v1509, %v1503
        %v1672 = vpack.c.b16 %v1510, %v1504
        %v1673 = vpack.c.b16 %v1511, %v1505
        %v1674 = vpack.c.b16 %v1518, %v1512
        %v1675 = vpack.c.b16 %v1519, %v1513
        %v1676 = vpack.c.b16 %v1520, %v1514
        %v1677 = vpack.c.b16 %v1521, %v1515
        %v1678 = vpack.c.b16 %v1522, %v1516
        %v1679 = vpack.c.b16 %v1523, %v1517
        %v1680 = vpack.c.b16 %v1530, %v1524
        %v1681 = vpack.c.b16 %v1531, %v1525
        %v1682 = vpack.c.b16 %v1532, %v1526
        %v1683 = vpack.c.b16 %v1533, %v1527
        %v1684 = vpack.c.b16 %v1534, %v1528
        %v1685 = vpack.c.b16 %v1535, %v1529
        %v1686 = vpack.c.b16 %v1542, %v1536
        %v1687 = vpack.c.b16 %v1543, %v1537
        %v1688 = vpack.c.b16 %v1544, %v1538
        %v1689 = vpack.c.b16 %v1545, %v1539
        %v1690 = vpack.c.b16 %v1546, %v1540
        %v1691 = vpack.c.b16 %v1547, %v1541
        %v1692 = vpack.c.b16 %v1554, %v1548
        %v1693 = vpack.c.b16 %v1555, %v1549
        %v1694 = vpack.c.b16 %v1556, %v1550
        %v1695 = vpack.c.b16 %v1557, %v1551
        %v1696 = vpack.c.b16 %v1558, %v1552
        %v1697 = vpack.c.b16 %v1559, %v1553
        %v1698 = vpack.c.b16 %v1566, %v1560
        %v1699 = vpack.c.b16 %v1567, %v1561
        %v1700 = vpack.c.b16 %v1568, %v1562
        %v1701 = vpack.c.b16 %v1569, %v1563
        %v1702 = vpack.c.b16 %v1570, %v1564
        %v1703 = vpack.c.b16 %v1571, %v1565
        %v1704 = vpack.c.b16 %v1578, %v1572
        %v1705 = vpack.c.b16 %v1579, %v1573
        %v1706 = vpack.c.b16 %v1580, %v1574
        %v1707 = vpack.c.b16 %v1581, %v1575
        %v1708 = vpack.c.b16 %v1582, %v1576
        %v1709 = vpack.c.b16 %v1583, %v1577
        %v1710 = vpack.c.b16 %v1590, %v1584
        %v1711 = vpack.c.b16 %v1591, %v1585
        %v1712 = vpack.c.b16 %v1592, %v1586
        %v1713 = vpack.c.b16 %v1593, %v1587
        %v1714 = vpack.c.b16 %v1594, %v1588
        %v1715 = vpack.c.b16 %v1595, %v1589
        %v1716 = vpack.c.b16 %v1602, %v1596
        %v1717 = vpack.c.b16 %v1603, %v1597
        %v1718 = vpack.c.b16 %v1604, %v1598
        %v1719 = vpack.c.b16 %v1605, %v1599
        %v1720 = vpack.c.b16 %v1606, %v1600
        %v1721 = vpack.c.b16 %v1607, %v1601
        %v1722 = vpack.c.b16 %v1614, %v1608
        %v1723 = vpack.c.b16 %v1615, %v1609
        %v1724 = vpack.c.b16 %v1616, %v1610
        %v1725 = vpack.c.b16 %v1617, %v1611
        %v1726 = vpack.c.b16 %v1618, %v1612
        %v1727 = vpack.c.b16 %v1619, %v1613
        %v1728 = vpack.c.b16 %v1626, %v1620
        %v1729 = vpack.c.b16 %v1627, %v1621
        %v1730 = vpack.c.b16 %v1628, %v1622
        %v1731 = vpack.c.b16 %v1629, %v1623
        %v1732 = vpack.c.b16 %v1630, %v1624
        %v1733 = vpack.c.b16 %v1631, %v1625
        %v1734 = vpack.c.b16 %v1638, %v1632
        %v1735 = vpack.c.b16 %v1639, %v1633
        %v1736 = vpack.c.b16 %v1640, %v1634
        %v1737 = vpack.c.b16 %v1641, %v1635
        %v1738 = vpack.c.b16 %v1642, %v1636
        %v1739 = vpack.c.b16 %v1643, %v1637
        %1836 = vmatprep.subr.bf16.mxu0 %v1687
        %1837 = vmatpush1.bf16.msra.mxu0 %v1686
        %1838 = vmatprep.subr.bf16.mxu0 %v1681
        %1839 = vmatpush1.bf16.msra.mxu0 %v1680
        %1840 = vmatprep.subr.bf16.mxu0 %v1675
        %1841 = vmatpush1.bf16.msra.mxu0 %v1674
        %1842 = vmatprep.subr.bf16.mxu0 %v1669
        %1843 = vmatpush1.bf16.msra.mxu0 %v1668
        %1844 = vmatprep.subr.bf16.mxu0 %v1663
        %1845 = vmatpush1.bf16.msra.mxu0 %v1662
        %1846 = vmatprep.subr.bf16.mxu0 %v1657
        %1847 = vmatpush1.bf16.msra.mxu0 %v1656
        %1848 = vmatprep.subr.bf16.mxu0 %v1651
        %1849 = vmatpush1.bf16.msra.mxu0 %v1650
        %1850 = vmatprep.subr.bf16.mxu0 %v1645
        %1851 = vmatpush1.bf16.msra.mxu0 %v1644
        %1852 = vmatprep.subr.bf16.mxu0 %v1735
        %1853 = vmatpush2.bf16.msra.mxu0 %v1734
        %1854 = vmatprep.subr.bf16.mxu0 %v1729
        %1855 = vmatpush2.bf16.msra.mxu0 %v1728
        %1856 = vmatprep.subr.bf16.mxu0 %v1723
        %1857 = vmatpush2.bf16.msra.mxu0 %v1722
        %1858 = vmatprep.subr.bf16.mxu0 %v1717
        %1859 = vmatpush2.bf16.msra.mxu0 %v1716
        %1860 = vmatprep.subr.bf16.mxu0 %v1711
        %1861 = vmatpush2.bf16.msra.mxu0 %v1710
        %1862 = vmatprep.subr.bf16.mxu0 %v1705
        %1863 = vmatpush2.bf16.msra.mxu0 %v1704
        %1864 = vmatprep.subr.bf16.mxu0 %v1699
        %1865 = vmatpush2.bf16.msra.mxu0 %v1698
        %1866 = vmatprep.subr.bf16.mxu0 %v1693
        %1867 = vmatpush2.bf16.msra.mxu0 %v1692
        %1868 = vmatprep.mubr.bf16.mxu0 %v1321
        %1869 = vmatmul.mubr.bf16.gmra.mxu0 %v1320
        %v1870 = vpop.f32.mrf.mxu0
        %v1871 = vadd.f32 %v1329, %v1870
        %v1872 = vpop.f32.mrf.mxu0
        %v1873 = vadd.f32 %v1333, %v1872
        %v1874 = vpop.f32.mrf.mxu0
        %v1875 = vadd.f32 %v1329, %v1874
        %v1876 = vpop.f32.mrf.mxu0
        %v1877 = vadd.f32 %v1333, %v1876
        %1878 = vmatprep.mubr.bf16.mxu0 %v1323
        %1879 = vmatmul.mubr.bf16.gmra.mxu0 %v1322
        %v1880 = vpop.f32.mrf.mxu0
        %v1881 = vadd.f32 %v1329, %v1880
        %v1882 = vpop.f32.mrf.mxu0
        %v1883 = vadd.f32 %v1333, %v1882
        %v1884 = vpop.f32.mrf.mxu0
        %v1885 = vadd.f32 %v1329, %v1884
        %v1886 = vpop.f32.mrf.mxu0
        %v1887 = vadd.f32 %v1333, %v1886
        %1888 = vdwg.mxu0
        %1889 = vmatprep.subr.bf16.mxu0 %v1689
        %1890 = vmatpush1.bf16.msra.mxu0 %v1688
        %1891 = vmatprep.subr.bf16.mxu0 %v1683
        %1892 = vmatpush1.bf16.msra.mxu0 %v1682
        %1893 = vmatprep.subr.bf16.mxu0 %v1677
        %1894 = vmatpush1.bf16.msra.mxu0 %v1676
        %1895 = vmatprep.subr.bf16.mxu0 %v1671
        %1896 = vmatpush1.bf16.msra.mxu0 %v1670
        %1897 = vmatprep.subr.bf16.mxu0 %v1665
        %1898 = vmatpush1.bf16.msra.mxu0 %v1664
        %1899 = vmatprep.subr.bf16.mxu0 %v1659
        %1900 = vmatpush1.bf16.msra.mxu0 %v1658
        %1901 = vmatprep.subr.bf16.mxu0 %v1653
        %1902 = vmatpush1.bf16.msra.mxu0 %v1652
        %1903 = vmatprep.subr.bf16.mxu0 %v1647
        %1904 = vmatpush1.bf16.msra.mxu0 %v1646
        %1905 = vmatprep.subr.bf16.mxu0 %v1737
        %1906 = vmatpush2.bf16.msra.mxu0 %v1736
        %1907 = vmatprep.subr.bf16.mxu0 %v1731
        %1908 = vmatpush2.bf16.msra.mxu0 %v1730
        %1909 = vmatprep.subr.bf16.mxu0 %v1725
        %1910 = vmatpush2.bf16.msra.mxu0 %v1724
        %1911 = vmatprep.subr.bf16.mxu0 %v1719
        %1912 = vmatpush2.bf16.msra.mxu0 %v1718
        %1913 = vmatprep.subr.bf16.mxu0 %v1713
        %1914 = vmatpush2.bf16.msra.mxu0 %v1712
        %1915 = vmatprep.subr.bf16.mxu0 %v1707
        %1916 = vmatpush2.bf16.msra.mxu0 %v1706
        %1917 = vmatprep.subr.bf16.mxu0 %v1701
        %1918 = vmatpush2.bf16.msra.mxu0 %v1700
        %1919 = vmatprep.subr.bf16.mxu0 %v1695
        %1920 = vmatpush2.bf16.msra.mxu0 %v1694
        %1921 = vmatprep.mubr.bf16.mxu0 %v1321
        %1922 = vmatmul.mubr.bf16.gmra.mxu0 %v1320
        %v1923 = vpop.f32.mrf.mxu0
        %v1924 = vadd.f32 %v1337, %v1923
        %v1925 = vpop.f32.mrf.mxu0
        %v1926 = vadd.f32 %v1341, %v1925
        %v1927 = vpop.f32.mrf.mxu0
        %v1928 = vadd.f32 %v1337, %v1927
        %v1929 = vpop.f32.mrf.mxu0
        %v1930 = vadd.f32 %v1341, %v1929
        %1931 = vmatprep.mubr.bf16.mxu0 %v1323
        %1932 = vmatmul.mubr.bf16.gmra.mxu0 %v1322
        %v1933 = vpop.f32.mrf.mxu0
        %v1934 = vadd.f32 %v1337, %v1933
        %v1935 = vpop.f32.mrf.mxu0
        %v1936 = vadd.f32 %v1341, %v1935
        %v1937 = vpop.f32.mrf.mxu0
        %v1938 = vadd.f32 %v1337, %v1937
        %v1939 = vpop.f32.mrf.mxu0
        %v1940 = vadd.f32 %v1341, %v1939
        %1941 = vdwg.mxu0
        %1942 = vmatprep.subr.bf16.mxu0 %v1691
        %1943 = vmatpush1.bf16.msra.mxu0 %v1690
        %1944 = vmatprep.subr.bf16.mxu0 %v1685
        %1945 = vmatpush1.bf16.msra.mxu0 %v1684
        %1946 = vmatprep.subr.bf16.mxu0 %v1679
        %1947 = vmatpush1.bf16.msra.mxu0 %v1678
        %1948 = vmatprep.subr.bf16.mxu0 %v1673
        %1949 = vmatpush1.bf16.msra.mxu0 %v1672
        %1950 = vmatprep.subr.bf16.mxu0 %v1667
        %1951 = vmatpush1.bf16.msra.mxu0 %v1666
        %1952 = vmatprep.subr.bf16.mxu0 %v1661
        %1953 = vmatpush1.bf16.msra.mxu0 %v1660
        %1954 = vmatprep.subr.bf16.mxu0 %v1655
        %1955 = vmatpush1.bf16.msra.mxu0 %v1654
        %1956 = vmatprep.subr.bf16.mxu0 %v1649
        %1957 = vmatpush1.bf16.msra.mxu0 %v1648
        %1958 = vmatprep.subr.bf16.mxu0 %v1739
        %1959 = vmatpush2.bf16.msra.mxu0 %v1738
        %1960 = vmatprep.subr.bf16.mxu0 %v1733
        %1961 = vmatpush2.bf16.msra.mxu0 %v1732
        %1962 = vmatprep.subr.bf16.mxu0 %v1727
        %1963 = vmatpush2.bf16.msra.mxu0 %v1726
        %1964 = vmatprep.subr.bf16.mxu0 %v1721
        %1965 = vmatpush2.bf16.msra.mxu0 %v1720
        %1966 = vmatprep.subr.bf16.mxu0 %v1715
        %1967 = vmatpush2.bf16.msra.mxu0 %v1714
        %1968 = vmatprep.subr.bf16.mxu0 %v1709
        %1969 = vmatpush2.bf16.msra.mxu0 %v1708
        %1970 = vmatprep.subr.bf16.mxu0 %v1703
        %1971 = vmatpush2.bf16.msra.mxu0 %v1702
        %1972 = vmatprep.subr.bf16.mxu0 %v1697
        %1973 = vmatpush2.bf16.msra.mxu0 %v1696
        %1974 = vmatprep.mubr.bf16.mxu0 %v1321
        %1975 = vmatmul.mubr.bf16.gmra.mxu0 %v1320
        %v1976 = vpop.f32.mrf.mxu0
        %v1977 = vadd.f32 %v1345, %v1976
        %v1978 = vpop.f32.mrf.mxu0
        %v1979 = vadd.f32 %v1349, %v1978
        %v1980 = vpop.f32.mrf.mxu0
        %v1981 = vadd.f32 %v1345, %v1980
        %v1982 = vpop.f32.mrf.mxu0
        %v1983 = vadd.f32 %v1349, %v1982
        %1984 = vmatprep.mubr.bf16.mxu0 %v1323
        %1985 = vmatmul.mubr.bf16.gmra.mxu0 %v1322
        %v1986 = vpop.f32.mrf.mxu0
        %v1987 = vadd.f32 %v1345, %v1986
        %v1988 = vpop.f32.mrf.mxu0
        %v1989 = vadd.f32 %v1349, %v1988
        %v1990 = vpop.f32.mrf.mxu0
        %v1991 = vadd.f32 %v1345, %v1990
        %v1992 = vpop.f32.mrf.mxu0
        %v1993 = vadd.f32 %v1349, %v1992
        %1994 = vdwg.mxu0
        %v1995 = vmul.f32 %v1871, 0.088388346
        %v1996 = vmul.f32 %v1873, 0.088388346
        %v1997 = vmul.f32 %v1875, 0.088388346
        %v1998 = vmul.f32 %v1877, 0.088388346
        %v1999 = vmul.f32 %v1881, 0.088388346
        %v2000 = vmul.f32 %v1883, 0.088388346
        %v2001 = vmul.f32 %v1885, 0.088388346
        %v2002 = vmul.f32 %v1887, 0.088388346
        %v2003 = vpack.c.bf16 %v1997, %v1995
        %v2004 = vpack.c.bf16 %v2001, %v1999
        %v2005 = vpack.c.bf16 %v1998, %v1996
        %v2006 = vpack.c.bf16 %v2002, %v2000
        %v2007 = vpack.c.bf16 %v1928, %v1924
        %v2008 = vpack.c.bf16 %v1938, %v1934
        %v2009 = vpack.c.bf16 %v1930, %v1926
        %v2010 = vpack.c.bf16 %v1940, %v1936
        %v2011 = vpack.c.bf16 %v1981, %v1977
        %v2012 = vpack.c.bf16 %v1991, %v1987
        %v2013 = vpack.c.bf16 %v1983, %v1979
        %v2014 = vpack.c.bf16 %v1993, %v1989
        %2015 = vmatprep.subr.bf16.mxu0 0
        %2016 = vmatpush1.bf16.xpose.msra.mxu0 0
        %2017 = vmatprep.subr.bf16.mxu0 0
        %2018 = vmatpush1.bf16.xpose.msra.mxu0 0
        %2019 = vmatprep.subr.bf16.mxu0 0
        %2020 = vmatpush1.bf16.xpose.msra.mxu0 0
        %2021 = vmatprep.subr.bf16.mxu0 0
        %2022 = vmatpush1.bf16.xpose.msra.mxu0 0
        %2023 = vmatprep.subr.bf16.mxu0 0
        %2024 = vmatpush1.bf16.xpose.msra.mxu0 0
        %2025 = vmatprep.subr.bf16.mxu0 0
        %2026 = vmatpush1.bf16.xpose.msra.mxu0 0
        %2027 = vmatprep.subr.bf16.mxu0 0
        %2028 = vmatpush1.bf16.xpose.msra.mxu0 0
        %2029 = vmatprep.subr.bf16.mxu0 0
        %2030 = vmatpush1.bf16.xpose.msra.mxu0 %v2007
        %2031 = vmatprep.subr.bf16.mxu0 0
        %2032 = vmatpush2.bf16.xpose.msra.mxu0 0
        %2033 = vmatprep.subr.bf16.mxu0 0
        %2034 = vmatpush2.bf16.xpose.msra.mxu0 0
        %2035 = vmatprep.subr.bf16.mxu0 0
        %2036 = vmatpush2.bf16.xpose.msra.mxu0 0
        %2037 = vmatprep.subr.bf16.mxu0 0
        %2038 = vmatpush2.bf16.xpose.msra.mxu0 0
        %2039 = vmatprep.subr.bf16.mxu0 0
        %2040 = vmatpush2.bf16.xpose.msra.mxu0 0
        %2041 = vmatprep.subr.bf16.mxu0 0
        %2042 = vmatpush2.bf16.xpose.msra.mxu0 0
        %2043 = vmatprep.subr.bf16.mxu0 0
        %2044 = vmatpush2.bf16.xpose.msra.mxu0 0
        %2045 = vmatprep.subr.bf16.mxu0 0
        %2046 = vmatpush2.bf16.xpose.msra.mxu0 0
        %2047 = vmatprep.mubr.bf16.mxu0 0
        %2048 = vmatmul.mubr.bf16.gmra.mxu0 %v2003
        %v2049 = vpop.f32.mrf.mxu0
        %v2050 = vadd.f32 0.0, %v2049
        %v2051 = vpop.f32.mrf.mxu0
        %v2052 = vpop.f32.mrf.mxu0
        %v2053 = vadd.f32 0.0, %v2052
        %v2054 = vpop.f32.mrf.mxu0
        %2055 = vdwg.mxu0
        %2056 = vmatprep.subr.bf16.mxu0 0
        %2057 = vmatpush1.bf16.xpose.msra.mxu0 0
        %2058 = vmatprep.subr.bf16.mxu0 0
        %2059 = vmatpush1.bf16.xpose.msra.mxu0 0
        %2060 = vmatprep.subr.bf16.mxu0 0
        %2061 = vmatpush1.bf16.xpose.msra.mxu0 0
        %2062 = vmatprep.subr.bf16.mxu0 0
        %2063 = vmatpush1.bf16.xpose.msra.mxu0 0
        %2064 = vmatprep.subr.bf16.mxu0 0
        %2065 = vmatpush1.bf16.xpose.msra.mxu0 0
        %2066 = vmatprep.subr.bf16.mxu0 0
        %2067 = vmatpush1.bf16.xpose.msra.mxu0 0
        %2068 = vmatprep.subr.bf16.mxu0 0
        %2069 = vmatpush1.bf16.xpose.msra.mxu0 0
        %2070 = vmatprep.subr.bf16.mxu0 0
        %2071 = vmatpush1.bf16.xpose.msra.mxu0 %v2008
        %2072 = vmatprep.subr.bf16.mxu0 0
        %2073 = vmatpush2.bf16.xpose.msra.mxu0 0
        %2074 = vmatprep.subr.bf16.mxu0 0
        %2075 = vmatpush2.bf16.xpose.msra.mxu0 0
        %2076 = vmatprep.subr.bf16.mxu0 0
        %2077 = vmatpush2.bf16.xpose.msra.mxu0 0
        %2078 = vmatprep.subr.bf16.mxu0 0
        %2079 = vmatpush2.bf16.xpose.msra.mxu0 0
        %2080 = vmatprep.subr.bf16.mxu0 0
        %2081 = vmatpush2.bf16.xpose.msra.mxu0 0
        %2082 = vmatprep.subr.bf16.mxu0 0
        %2083 = vmatpush2.bf16.xpose.msra.mxu0 0
        %2084 = vmatprep.subr.bf16.mxu0 0
        %2085 = vmatpush2.bf16.xpose.msra.mxu0 0
        %2086 = vmatprep.subr.bf16.mxu0 0
        %2087 = vmatpush2.bf16.xpose.msra.mxu0 0
        %2088 = vmatprep.mubr.bf16.mxu0 0
        %2089 = vmatmul.mubr.bf16.gmra.mxu0 %v2004
        %v2090 = vpop.f32.mrf.mxu0
        %v2091 = vadd.f32 0.0, %v2090
        %v2092 = vpop.f32.mrf.mxu0
        %v2093 = vpop.f32.mrf.mxu0
        %v2094 = vadd.f32 0.0, %v2093
        %v2095 = vpop.f32.mrf.mxu0
        %2096 = vdwg.mxu0
        %2097 = vmatprep.subr.bf16.mxu0 0
        %2098 = vmatpush1.bf16.xpose.msra.mxu0 0
        %2099 = vmatprep.subr.bf16.mxu0 0
        %2100 = vmatpush1.bf16.xpose.msra.mxu0 0
        %2101 = vmatprep.subr.bf16.mxu0 0
        %2102 = vmatpush1.bf16.xpose.msra.mxu0 0
        %2103 = vmatprep.subr.bf16.mxu0 0
        %2104 = vmatpush1.bf16.xpose.msra.mxu0 0
        %2105 = vmatprep.subr.bf16.mxu0 0
        %2106 = vmatpush1.bf16.xpose.msra.mxu0 0
        %2107 = vmatprep.subr.bf16.mxu0 0
        %2108 = vmatpush1.bf16.xpose.msra.mxu0 0
        %2109 = vmatprep.subr.bf16.mxu0 0
        %2110 = vmatpush1.bf16.xpose.msra.mxu0 0
        %2111 = vmatprep.subr.bf16.mxu0 0
        %2112 = vmatpush1.bf16.xpose.msra.mxu0 %v2009
        %2113 = vmatprep.subr.bf16.mxu0 0
        %2114 = vmatpush2.bf16.xpose.msra.mxu0 0
        %2115 = vmatprep.subr.bf16.mxu0 0
        %2116 = vmatpush2.bf16.xpose.msra.mxu0 0
        %2117 = vmatprep.subr.bf16.mxu0 0
        %2118 = vmatpush2.bf16.xpose.msra.mxu0 0
        %2119 = vmatprep.subr.bf16.mxu0 0
        %2120 = vmatpush2.bf16.xpose.msra.mxu0 0
        %2121 = vmatprep.subr.bf16.mxu0 0
        %2122 = vmatpush2.bf16.xpose.msra.mxu0 0
        %2123 = vmatprep.subr.bf16.mxu0 0
        %2124 = vmatpush2.bf16.xpose.msra.mxu0 0
        %2125 = vmatprep.subr.bf16.mxu0 0
        %2126 = vmatpush2.bf16.xpose.msra.mxu0 0
        %2127 = vmatprep.subr.bf16.mxu0 0
        %2128 = vmatpush2.bf16.xpose.msra.mxu0 0
        %2129 = vmatprep.mubr.bf16.mxu0 0
        %2130 = vmatmul.mubr.bf16.gmra.mxu0 %v2005
        %v2131 = vpop.f32.mrf.mxu0
        %v2132 = vadd.f32 0.0, %v2131
        %v2133 = vpop.f32.mrf.mxu0
        %v2134 = vpop.f32.mrf.mxu0
        %v2135 = vadd.f32 0.0, %v2134
        %v2136 = vpop.f32.mrf.mxu0
        %2137 = vdwg.mxu0
        %2138 = vmatprep.subr.bf16.mxu0 0
        %2139 = vmatpush1.bf16.xpose.msra.mxu0 0
        %2140 = vmatprep.subr.bf16.mxu0 0
        %2141 = vmatpush1.bf16.xpose.msra.mxu0 0
        %2142 = vmatprep.subr.bf16.mxu0 0
        %2143 = vmatpush1.bf16.xpose.msra.mxu0 0
        %2144 = vmatprep.subr.bf16.mxu0 0
        %2145 = vmatpush1.bf16.xpose.msra.mxu0 0
        %2146 = vmatprep.subr.bf16.mxu0 0
        %2147 = vmatpush1.bf16.xpose.msra.mxu0 0
        %2148 = vmatprep.subr.bf16.mxu0 0
        %2149 = vmatpush1.bf16.xpose.msra.mxu0 0
        %2150 = vmatprep.subr.bf16.mxu0 0
        %2151 = vmatpush1.bf16.xpose.msra.mxu0 0
        %2152 = vmatprep.subr.bf16.mxu0 0
        %2153 = vmatpush1.bf16.xpose.msra.mxu0 %v2010
        %2154 = vmatprep.subr.bf16.mxu0 0
        %2155 = vmatpush2.bf16.xpose.msra.mxu0 0
        %2156 = vmatprep.subr.bf16.mxu0 0
        %2157 = vmatpush2.bf16.xpose.msra.mxu0 0
        %2158 = vmatprep.subr.bf16.mxu0 0
        %2159 = vmatpush2.bf16.xpose.msra.mxu0 0
        %2160 = vmatprep.subr.bf16.mxu0 0
        %2161 = vmatpush2.bf16.xpose.msra.mxu0 0
        %2162 = vmatprep.subr.bf16.mxu0 0
        %2163 = vmatpush2.bf16.xpose.msra.mxu0 0
        %2164 = vmatprep.subr.bf16.mxu0 0
        %2165 = vmatpush2.bf16.xpose.msra.mxu0 0
        %2166 = vmatprep.subr.bf16.mxu0 0
        %2167 = vmatpush2.bf16.xpose.msra.mxu0 0
        %2168 = vmatprep.subr.bf16.mxu0 0
        %2169 = vmatpush2.bf16.xpose.msra.mxu0 0
        %2170 = vmatprep.mubr.bf16.mxu0 0
        %2171 = vmatmul.mubr.bf16.gmra.mxu0 %v2006
        %v2172 = vpop.f32.mrf.mxu0
        %v2173 = vadd.f32 0.0, %v2172
        %v2174 = vpop.f32.mrf.mxu0
        %v2175 = vpop.f32.mrf.mxu0
        %v2176 = vadd.f32 0.0, %v2175
        %v2177 = vpop.f32.mrf.mxu0
        %2178 = vdwg.mxu0
        %vm2179 = vcmask 130048
        %v2180 = vsel %vm2179, %v2050, -inf
        %2181 = vmax.xlane.f32.xlu0 %v2180
        %v2182 = vpop.xlane.xlu0 %2181
        %v2183 = vsel %vm2179, %v2053, -inf
        %2184 = vmax.xlane.f32.xlu0 %v2183
        %v2185 = vpop.xlane.xlu0 %2184
        %v2186 = vsel %vm2179, %v2091, -inf
        %2187 = vmax.xlane.f32.xlu0 %v2186
        %v2188 = vpop.xlane.xlu0 %2187
        %v2189 = vsel %vm2179, %v2094, -inf
        %2190 = vmax.xlane.f32.xlu0 %v2189
        %v2191 = vpop.xlane.xlu0 %2190
        %v2192 = vsel %vm2179, %v2132, -inf
        %2193 = vmax.xlane.f32.xlu0 %v2192
        %v2194 = vpop.xlane.xlu0 %2193
        %v2195 = vsel %vm2179, %v2135, -inf
        %2196 = vmax.xlane.f32.xlu0 %v2195
        %v2197 = vpop.xlane.xlu0 %2196
        %v2198 = vsel %vm2179, %v2173, -inf
        %2199 = vmax.xlane.f32.xlu0 %v2198
        %v2200 = vpop.xlane.xlu0 %2199
        %v2201 = vsel %vm2179, %v2176, -inf
        %2202 = vmax.xlane.f32.xlu0 %v2201
        %v2203 = vpop.xlane.xlu0 %2202
        %v2204 = vsub.f32 %v2050, %v2182
        %v2205 = vsub.f32 %v2053, %v2185
        %v2206 = vsub.f32 %v2091, %v2188
        %v2207 = vsub.f32 %v2094, %v2191
        %v2208 = vsub.f32 %v2132, %v2194
        %v2209 = vsub.f32 %v2135, %v2197
        %v2210 = vsub.f32 %v2173, %v2200
        %v2211 = vsub.f32 %v2176, %v2203
        %v2212 = vmul.f32 %v2204, 1.442695
        %v2213 = vpow.pop %v2212
        %v2214 = vmul.f32 %v2205, 1.442695
        %v2215 = vpow.pop %v2214
        %v2216 = vmul.f32 %v2206, 1.442695
        %v2217 = vpow.pop %v2216
        %v2218 = vmul.f32 %v2207, 1.442695
        %v2219 = vpow.pop %v2218
        %v2220 = vmul.f32 %v2208, 1.442695
        %v2221 = vpow.pop %v2220
        %v2222 = vmul.f32 %v2209, 1.442695
        %v2223 = vpow.pop %v2222
        %v2224 = vmul.f32 %v2210, 1.442695
        %v2225 = vpow.pop %v2224
        %v2226 = vmul.f32 %v2211, 1.442695
        %v2227 = vpow.pop %v2226
        %v2228 = vsel %vm2179, %v2213, 0.0
        %2229 = vadd.xlane.f32.xlu0 %v2228
        %v2230 = vpop.xlane.xlu0 %2229
        %v2231 = vsel %vm2179, %v2215, 0.0
        %2232 = vadd.xlane.f32.xlu0 %v2231
        %v2233 = vpop.xlane.xlu0 %2232
        %v2234 = vsel %vm2179, %v2217, 0.0
        %2235 = vadd.xlane.f32.xlu0 %v2234
        %v2236 = vpop.xlane.xlu0 %2235
        %v2237 = vsel %vm2179, %v2219, 0.0
        %2238 = vadd.xlane.f32.xlu0 %v2237
        %v2239 = vpop.xlane.xlu0 %2238
        %v2240 = vsel %vm2179, %v2221, 0.0
        %2241 = vadd.xlane.f32.xlu0 %v2240
        %v2242 = vpop.xlane.xlu0 %2241
        %v2243 = vsel %vm2179, %v2223, 0.0
        %2244 = vadd.xlane.f32.xlu0 %v2243
        %v2245 = vpop.xlane.xlu0 %2244
        %v2246 = vsel %vm2179, %v2225, 0.0
        %2247 = vadd.xlane.f32.xlu0 %v2246
        %v2248 = vpop.xlane.xlu0 %2247
        %v2249 = vsel %vm2179, %v2227, 0.0
        %2250 = vadd.xlane.f32.xlu0 %v2249
        %v2251 = vpop.xlane.xlu0 %2250
        %v2252 = vrcp.pop %v2230
        %v2253 = vmul.f32 %v2213, %v2252
        %v2254 = vrcp.pop %v2233
        %v2255 = vmul.f32 %v2215, %v2254
        %v2256 = vrcp.pop %v2236
        %v2257 = vmul.f32 %v2217, %v2256
        %v2258 = vrcp.pop %v2239
        %v2259 = vmul.f32 %v2219, %v2258
        %v2260 = vrcp.pop %v2242
        %v2261 = vmul.f32 %v2221, %v2260
        %v2262 = vrcp.pop %v2245
        %v2263 = vmul.f32 %v2223, %v2262
        %v2264 = vrcp.pop %v2248
        %v2265 = vmul.f32 %v2225, %v2264
        %v2266 = vrcp.pop %v2251
        %v2267 = vmul.f32 %v2227, %v2266
        %v2268 = vpack.c.bf16 %v2255, %v2253
        %v2269 = vpack.c.bf16 %v2259, %v2257
        %v2270 = vpack.c.bf16 %v2263, %v2261
        %v2271 = vpack.c.bf16 %v2267, %v2265
        %v2273 = vsel %vm2179, %v2268, 0
        %2275 = vmatprep.subr.bf16.mxu0 0
        %2276 = vmatpush1.bf16.msra.mxu0 0
        %2277 = vmatprep.subr.bf16.mxu0 0
        %2278 = vmatpush1.bf16.msra.mxu0 0
        %2279 = vmatprep.subr.bf16.mxu0 0
        %2280 = vmatpush1.bf16.msra.mxu0 0
        %2281 = vmatprep.subr.bf16.mxu0 0
        %2282 = vmatpush1.bf16.msra.mxu0 0
        %2283 = vmatprep.subr.bf16.mxu0 0
        %2284 = vmatpush1.bf16.msra.mxu0 0
        %2285 = vmatprep.subr.bf16.mxu0 0
        %2286 = vmatpush1.bf16.msra.mxu0 0
        %2287 = vmatprep.subr.bf16.mxu0 0
        %2288 = vmatpush1.bf16.msra.mxu0 0
        %2289 = vmatprep.subr.bf16.mxu0 0
        %2290 = vmatpush1.bf16.msra.mxu0 %v2011
        %2291 = vmatprep.subr.bf16.mxu0 0
        %2292 = vmatpush2.bf16.msra.mxu0 0
        %2293 = vmatprep.subr.bf16.mxu0 0
        %2294 = vmatpush2.bf16.msra.mxu0 0
        %2295 = vmatprep.subr.bf16.mxu0 0
        %2296 = vmatpush2.bf16.msra.mxu0 0
        %2297 = vmatprep.subr.bf16.mxu0 0
        %2298 = vmatpush2.bf16.msra.mxu0 0
        %2299 = vmatprep.subr.bf16.mxu0 0
        %2300 = vmatpush2.bf16.msra.mxu0 0
        %2301 = vmatprep.subr.bf16.mxu0 0
        %2302 = vmatpush2.bf16.msra.mxu0 0
        %2303 = vmatprep.subr.bf16.mxu0 0
        %2304 = vmatpush2.bf16.msra.mxu0 0
        %2305 = vmatprep.subr.bf16.mxu0 0
        %2306 = vmatpush2.bf16.msra.mxu0 0
        %2307 = vmatprep.mubr.bf16.mxu0 0
        %2308 = vmatmul.mubr.bf16.gmra.mxu0 %v2273
        %v2309 = vpop.f32.mrf.mxu0
        %v2310 = vadd.f32 0.0, %v2309
        %v2311 = vpop.f32.mrf.mxu0
        %v2312 = vpop.f32.mrf.mxu0
        %v2313 = vadd.f32 0.0, %v2312
        %v2314 = vpop.f32.mrf.mxu0
        %2315 = vdwg.mxu0
        %v2317 = vsel %vm2179, %v2269, 0
        %2319 = vmatprep.subr.bf16.mxu0 0
        %2320 = vmatpush1.bf16.msra.mxu0 0
        %2321 = vmatprep.subr.bf16.mxu0 0
        %2322 = vmatpush1.bf16.msra.mxu0 0
        %2323 = vmatprep.subr.bf16.mxu0 0
        %2324 = vmatpush1.bf16.msra.mxu0 0
        %2325 = vmatprep.subr.bf16.mxu0 0
        %2326 = vmatpush1.bf16.msra.mxu0 0
        %2327 = vmatprep.subr.bf16.mxu0 0
        %2328 = vmatpush1.bf16.msra.mxu0 0
        %2329 = vmatprep.subr.bf16.mxu0 0
        %2330 = vmatpush1.bf16.msra.mxu0 0
        %2331 = vmatprep.subr.bf16.mxu0 0
        %2332 = vmatpush1.bf16.msra.mxu0 0
        %2333 = vmatprep.subr.bf16.mxu0 0
        %2334 = vmatpush1.bf16.msra.mxu0 %v2012
        %2335 = vmatprep.subr.bf16.mxu0 0
        %2336 = vmatpush2.bf16.msra.mxu0 0
        %2337 = vmatprep.subr.bf16.mxu0 0
        %2338 = vmatpush2.bf16.msra.mxu0 0
        %2339 = vmatprep.subr.bf16.mxu0 0
        %2340 = vmatpush2.bf16.msra.mxu0 0
        %2341 = vmatprep.subr.bf16.mxu0 0
        %2342 = vmatpush2.bf16.msra.mxu0 0
        %2343 = vmatprep.subr.bf16.mxu0 0
        %2344 = vmatpush2.bf16.msra.mxu0 0
        %2345 = vmatprep.subr.bf16.mxu0 0
        %2346 = vmatpush2.bf16.msra.mxu0 0
        %2347 = vmatprep.subr.bf16.mxu0 0
        %2348 = vmatpush2.bf16.msra.mxu0 0
        %2349 = vmatprep.subr.bf16.mxu0 0
        %2350 = vmatpush2.bf16.msra.mxu0 0
        %2351 = vmatprep.mubr.bf16.mxu0 0
        %2352 = vmatmul.mubr.bf16.gmra.mxu0 %v2317
        %v2353 = vpop.f32.mrf.mxu0
        %v2354 = vadd.f32 0.0, %v2353
        %v2355 = vpop.f32.mrf.mxu0
        %v2356 = vpop.f32.mrf.mxu0
        %v2357 = vadd.f32 0.0, %v2356
        %v2358 = vpop.f32.mrf.mxu0
        %2359 = vdwg.mxu0
        %v2361 = vsel %vm2179, %v2270, 0
        %2363 = vmatprep.subr.bf16.mxu0 0
        %2364 = vmatpush1.bf16.msra.mxu0 0
        %2365 = vmatprep.subr.bf16.mxu0 0
        %2366 = vmatpush1.bf16.msra.mxu0 0
        %2367 = vmatprep.subr.bf16.mxu0 0
        %2368 = vmatpush1.bf16.msra.mxu0 0
        %2369 = vmatprep.subr.bf16.mxu0 0
        %2370 = vmatpush1.bf16.msra.mxu0 0
        %2371 = vmatprep.subr.bf16.mxu0 0
        %2372 = vmatpush1.bf16.msra.mxu0 0
        %2373 = vmatprep.subr.bf16.mxu0 0
        %2374 = vmatpush1.bf16.msra.mxu0 0
        %2375 = vmatprep.subr.bf16.mxu0 0
        %2376 = vmatpush1.bf16.msra.mxu0 0
        %2377 = vmatprep.subr.bf16.mxu0 0
        %2378 = vmatpush1.bf16.msra.mxu0 %v2013
        %2379 = vmatprep.subr.bf16.mxu0 0
        %2380 = vmatpush2.bf16.msra.mxu0 0
        %2381 = vmatprep.subr.bf16.mxu0 0
        %2382 = vmatpush2.bf16.msra.mxu0 0
        %2383 = vmatprep.subr.bf16.mxu0 0
        %2384 = vmatpush2.bf16.msra.mxu0 0
        %2385 = vmatprep.subr.bf16.mxu0 0
        %2386 = vmatpush2.bf16.msra.mxu0 0
        %2387 = vmatprep.subr.bf16.mxu0 0
        %2388 = vmatpush2.bf16.msra.mxu0 0
        %2389 = vmatprep.subr.bf16.mxu0 0
        %2390 = vmatpush2.bf16.msra.mxu0 0
        %2391 = vmatprep.subr.bf16.mxu0 0
        %2392 = vmatpush2.bf16.msra.mxu0 0
        %2393 = vmatprep.subr.bf16.mxu0 0
        %2394 = vmatpush2.bf16.msra.mxu0 0
        %2395 = vmatprep.mubr.bf16.mxu0 0
        %2396 = vmatmul.mubr.bf16.gmra.mxu0 %v2361
        %v2397 = vpop.f32.mrf.mxu0
        %v2398 = vadd.f32 0.0, %v2397
        %v2399 = vpop.f32.mrf.mxu0
        %v2400 = vpop.f32.mrf.mxu0
        %v2401 = vadd.f32 0.0, %v2400
        %v2402 = vpop.f32.mrf.mxu0
        %2403 = vdwg.mxu0
        %v2405 = vsel %vm2179, %v2271, 0
        %2407 = vmatprep.subr.bf16.mxu0 0
        %2408 = vmatpush1.bf16.msra.mxu0 0
        %2409 = vmatprep.subr.bf16.mxu0 0
        %2410 = vmatpush1.bf16.msra.mxu0 0
        %2411 = vmatprep.subr.bf16.mxu0 0
        %2412 = vmatpush1.bf16.msra.mxu0 0
        %2413 = vmatprep.subr.bf16.mxu0 0
        %2414 = vmatpush1.bf16.msra.mxu0 0
        %2415 = vmatprep.subr.bf16.mxu0 0
        %2416 = vmatpush1.bf16.msra.mxu0 0
        %2417 = vmatprep.subr.bf16.mxu0 0
        %2418 = vmatpush1.bf16.msra.mxu0 0
        %2419 = vmatprep.subr.bf16.mxu0 0
        %2420 = vmatpush1.bf16.msra.mxu0 0
        %2421 = vmatprep.subr.bf16.mxu0 0
        %2422 = vmatpush1.bf16.msra.mxu0 %v2014
        %2423 = vmatprep.subr.bf16.mxu0 0
        %2424 = vmatpush2.bf16.msra.mxu0 0
        %2425 = vmatprep.subr.bf16.mxu0 0
        %2426 = vmatpush2.bf16.msra.mxu0 0
        %2427 = vmatprep.subr.bf16.mxu0 0
        %2428 = vmatpush2.bf16.msra.mxu0 0
        %2429 = vmatprep.subr.bf16.mxu0 0
        %2430 = vmatpush2.bf16.msra.mxu0 0
        %2431 = vmatprep.subr.bf16.mxu0 0
        %2432 = vmatpush2.bf16.msra.mxu0 0
        %2433 = vmatprep.subr.bf16.mxu0 0
        %2434 = vmatpush2.bf16.msra.mxu0 0
        %2435 = vmatprep.subr.bf16.mxu0 0
        %2436 = vmatpush2.bf16.msra.mxu0 0
        %2437 = vmatprep.subr.bf16.mxu0 0
        %2438 = vmatpush2.bf16.msra.mxu0 0
        %2439 = vmatprep.mubr.bf16.mxu0 0
        %2440 = vmatmul.mubr.bf16.gmra.mxu0 %v2405
        %v2441 = vpop.f32.mrf.mxu0
        %v2442 = vadd.f32 0.0, %v2441
        %v2443 = vpop.f32.mrf.mxu0
        %v2444 = vpop.f32.mrf.mxu0
        %v2445 = vadd.f32 0.0, %v2444
        %v2446 = vpop.f32.mrf.mxu0
        %2447 = vdwg.mxu0
        %v2448 = vld [vmem:[%s824] sm:$0xff]
        %v2449 = vld [vmem:[%s824 + $0x8] sm:$0xff]
        %v2450 = vld [vmem:[%s824 + $0x10] sm:$0xff]
        %v2451 = vld [vmem:[%s824 + $0x18] sm:$0xff]
        %v2452 = vld [vmem:[%s824 + $0x20] sm:$0xff]
        %v2453 = vld [vmem:[%s824 + $0x28] sm:$0xff]
        %v2454 = vld [vmem:[%s824 + $0x30] sm:$0xff]
        %v2455 = vld [vmem:[%s824 + $0x38] sm:$0xff]
        %v2456 = vld [vmem:[%s824 + $0x40] sm:$0xff]
        %v2457 = vld [vmem:[%s824 + $0x48] sm:$0xff]
        %v2458 = vld [vmem:[%s824 + $0x50] sm:$0xff]
        %v2459 = vld [vmem:[%s824 + $0x58] sm:$0xff]
        %v2460 = vld [vmem:[%s824 + $0x60] sm:$0xff]
        %v2461 = vld [vmem:[%s824 + $0x68] sm:$0xff]
        %v2462 = vld [vmem:[%s824 + $0x70] sm:$0xff]
        %v2463 = vld [vmem:[%s824 + $0x78] sm:$0xff]
        %v2464 = vld [vmem:[%s824 + $0x80] sm:$0xff]
        %v2465 = vld [vmem:[%s824 + $0x88] sm:$0xff]
        %v2466 = vld [vmem:[%s824 + $0x90] sm:$0xff]
        %v2467 = vld [vmem:[%s824 + $0x98] sm:$0xff]
        %v2468 = vld [vmem:[%s824 + $0xa0] sm:$0xff]
        %v2469 = vld [vmem:[%s824 + $0xa8] sm:$0xff]
        %v2470 = vld [vmem:[%s824 + $0xb0] sm:$0xff]
        %v2471 = vld [vmem:[%s824 + $0xb8] sm:$0xff]
        %v2472 = vld [vmem:[%s824 + $0xc0] sm:$0xff]
        %v2473 = vld [vmem:[%s824 + $0xc8] sm:$0xff]
        %v2474 = vld [vmem:[%s824 + $0xd0] sm:$0xff]
        %v2475 = vld [vmem:[%s824 + $0xd8] sm:$0xff]
        %v2476 = vld [vmem:[%s824 + $0xe0] sm:$0xff]
        %v2477 = vld [vmem:[%s824 + $0xe8] sm:$0xff]
        %v2478 = vld [vmem:[%s824 + $0xf0] sm:$0xff]
        %v2479 = vld [vmem:[%s824 + $0xf8] sm:$0xff]
        %v2480 = vpack.c.bf16 %v2313, %v2310
        %v2481 = vpack.c.bf16 %v2401, %v2398
        %v2482 = vpack.c.bf16 %v2357, %v2354
        %v2483 = vpack.c.bf16 %v2445, %v2442
        %v2516 = vunpack.c.l.b16 %v2448
        %v2517 = vunpack.c.h.b16 %v2448
        %v2518 = vunpack.c.l.b16 %v2449
        %v2519 = vunpack.c.h.b16 %v2449
        %v2520 = vunpack.c.l.b16 %v2450
        %v2521 = vunpack.c.h.b16 %v2450
        %v2522 = vunpack.c.l.b16 %v2451
        %v2523 = vunpack.c.h.b16 %v2451
        %v2524 = vunpack.c.l.b16 %v2452
        %v2525 = vunpack.c.h.b16 %v2452
        %v2526 = vunpack.c.l.b16 %v2453
        %v2527 = vunpack.c.h.b16 %v2453
        %v2528 = vunpack.c.l.b16 %v2454
        %v2529 = vunpack.c.h.b16 %v2454
        %v2530 = vunpack.c.l.b16 %v2455
        %v2531 = vunpack.c.h.b16 %v2455
        %v2532 = vunpack.c.l.b16 %v2456
        %v2533 = vunpack.c.h.b16 %v2456
        %v2534 = vunpack.c.l.b16 %v2457
        %v2535 = vunpack.c.h.b16 %v2457
        %v2536 = vunpack.c.l.b16 %v2458
        %v2537 = vunpack.c.h.b16 %v2458
        %v2538 = vunpack.c.l.b16 %v2459
        %v2539 = vunpack.c.h.b16 %v2459
        %v2540 = vunpack.c.l.b16 %v2460
        %v2541 = vunpack.c.h.b16 %v2460
        %v2542 = vunpack.c.l.b16 %v2461
        %v2543 = vunpack.c.h.b16 %v2461
        %v2544 = vunpack.c.l.b16 %v2462
        %v2545 = vunpack.c.h.b16 %v2462
        %v2546 = vunpack.c.l.b16 %v2463
        %v2547 = vunpack.c.h.b16 %v2463
        %v2548 = vunpack.c.l.b16 %v2464
        %v2549 = vunpack.c.h.b16 %v2464
        %v2550 = vunpack.c.l.b16 %v2465
        %v2551 = vunpack.c.h.b16 %v2465
        %v2552 = vunpack.c.l.b16 %v2466
        %v2553 = vunpack.c.h.b16 %v2466
        %v2554 = vunpack.c.l.b16 %v2467
        %v2555 = vunpack.c.h.b16 %v2467
        %v2556 = vunpack.c.l.b16 %v2468
        %v2557 = vunpack.c.h.b16 %v2468
        %v2558 = vunpack.c.l.b16 %v2469
        %v2559 = vunpack.c.h.b16 %v2469
        %v2560 = vunpack.c.l.b16 %v2470
        %v2561 = vunpack.c.h.b16 %v2470
        %v2562 = vunpack.c.l.b16 %v2471
        %v2563 = vunpack.c.h.b16 %v2471
        %v2564 = vunpack.c.l.b16 %v2472
        %v2565 = vunpack.c.h.b16 %v2472
        %v2566 = vunpack.c.l.b16 %v2473
        %v2567 = vunpack.c.h.b16 %v2473
        %v2568 = vunpack.c.l.b16 %v2474
        %v2569 = vunpack.c.h.b16 %v2474
        %v2570 = vunpack.c.l.b16 %v2475
        %v2571 = vunpack.c.h.b16 %v2475
        %v2572 = vunpack.c.l.b16 %v2476
        %v2573 = vunpack.c.h.b16 %v2476
        %v2574 = vunpack.c.l.b16 %v2477
        %v2575 = vunpack.c.h.b16 %v2477
        %v2576 = vunpack.c.l.b16 %v2478
        %v2577 = vunpack.c.h.b16 %v2478
        %v2578 = vunpack.c.l.b16 %v2479
        %v2579 = vunpack.c.h.b16 %v2479
        %v2580 = vpack.c.b16 %v2518, %v2516
        %v2581 = vpack.c.b16 %v2519, %v2517
        %v2582 = vpack.c.b16 %v2522, %v2520
        %v2583 = vpack.c.b16 %v2523, %v2521
        %v2584 = vpack.c.b16 %v2526, %v2524
        %v2585 = vpack.c.b16 %v2527, %v2525
        %v2586 = vpack.c.b16 %v2530, %v2528
        %v2587 = vpack.c.b16 %v2531, %v2529
        %v2588 = vpack.c.b16 %v2534, %v2532
        %v2589 = vpack.c.b16 %v2535, %v2533
        %v2590 = vpack.c.b16 %v2538, %v2536
        %v2591 = vpack.c.b16 %v2539, %v2537
        %v2592 = vpack.c.b16 %v2542, %v2540
        %v2593 = vpack.c.b16 %v2543, %v2541
        %v2594 = vpack.c.b16 %v2546, %v2544
        %v2595 = vpack.c.b16 %v2547, %v2545
        %v2596 = vpack.c.b16 %v2550, %v2548
        %v2597 = vpack.c.b16 %v2551, %v2549
        %v2598 = vpack.c.b16 %v2554, %v2552
        %v2599 = vpack.c.b16 %v2555, %v2553
        %v2600 = vpack.c.b16 %v2558, %v2556
        %v2601 = vpack.c.b16 %v2559, %v2557
        %v2602 = vpack.c.b16 %v2562, %v2560
        %v2603 = vpack.c.b16 %v2563, %v2561
        %v2604 = vpack.c.b16 %v2566, %v2564
        %v2605 = vpack.c.b16 %v2567, %v2565
        %v2606 = vpack.c.b16 %v2570, %v2568
        %v2607 = vpack.c.b16 %v2571, %v2569
        %v2608 = vpack.c.b16 %v2574, %v2572
        %v2609 = vpack.c.b16 %v2575, %v2573
        %v2610 = vpack.c.b16 %v2578, %v2576
        %v2611 = vpack.c.b16 %v2579, %v2577
        %2644 = vmatprep.subr.bf16.mxu0 %v2595
        %2645 = vmatpush1.bf16.msra.mxu0 %v2594
        %2646 = vmatprep.subr.bf16.mxu0 %v2593
        %2647 = vmatpush1.bf16.msra.mxu0 %v2592
        %2648 = vmatprep.subr.bf16.mxu0 %v2591
        %2649 = vmatpush1.bf16.msra.mxu0 %v2590
        %2650 = vmatprep.subr.bf16.mxu0 %v2589
        %2651 = vmatpush1.bf16.msra.mxu0 %v2588
        %2652 = vmatprep.subr.bf16.mxu0 %v2587
        %2653 = vmatpush1.bf16.msra.mxu0 %v2586
        %2654 = vmatprep.subr.bf16.mxu0 %v2585
        %2655 = vmatpush1.bf16.msra.mxu0 %v2584
        %2656 = vmatprep.subr.bf16.mxu0 %v2583
        %2657 = vmatpush1.bf16.msra.mxu0 %v2582
        %2658 = vmatprep.subr.bf16.mxu0 %v2581
        %2659 = vmatpush1.bf16.msra.mxu0 %v2580
        %2660 = vmatprep.subr.bf16.mxu0 %v2611
        %2661 = vmatpush2.bf16.msra.mxu0 %v2610
        %2662 = vmatprep.subr.bf16.mxu0 %v2609
        %2663 = vmatpush2.bf16.msra.mxu0 %v2608
        %2664 = vmatprep.subr.bf16.mxu0 %v2607
        %2665 = vmatpush2.bf16.msra.mxu0 %v2606
        %2666 = vmatprep.subr.bf16.mxu0 %v2605
        %2667 = vmatpush2.bf16.msra.mxu0 %v2604
        %2668 = vmatprep.subr.bf16.mxu0 %v2603
        %2669 = vmatpush2.bf16.msra.mxu0 %v2602
        %2670 = vmatprep.subr.bf16.mxu0 %v2601
        %2671 = vmatpush2.bf16.msra.mxu0 %v2600
        %2672 = vmatprep.subr.bf16.mxu0 %v2599
        %2673 = vmatpush2.bf16.msra.mxu0 %v2598
        %2674 = vmatprep.subr.bf16.mxu0 %v2597
        %2675 = vmatpush2.bf16.msra.mxu0 %v2596
        %2676 = vmatprep.mubr.bf16.mxu0 %v2481
        %2677 = vmatmul.mubr.bf16.gmra.mxu0 %v2480
        %v2678 = vpop.f32.mrf.mxu0
        %v2679 = vadd.f32 0.0, %v2678
        %v2680 = vpop.f32.mrf.mxu0
        %v2681 = vadd.f32 0.0, %v2680
        %v2682 = vpop.f32.mrf.mxu0
        %v2683 = vadd.f32 0.0, %v2682
        %v2684 = vpop.f32.mrf.mxu0
        %v2685 = vadd.f32 0.0, %v2684
        %2686 = vmatprep.mubr.bf16.mxu0 %v2483
        %2687 = vmatmul.mubr.bf16.gmra.mxu0 %v2482
        %v2688 = vpop.f32.mrf.mxu0
        %v2689 = vadd.f32 0.0, %v2688
        %v2690 = vpop.f32.mrf.mxu0
        %v2691 = vadd.f32 0.0, %v2690
        %v2692 = vpop.f32.mrf.mxu0
        %v2693 = vadd.f32 0.0, %v2692
        %v2694 = vpop.f32.mrf.mxu0
        %v2695 = vadd.f32 0.0, %v2694
        %2696 = vdwg.mxu0
        %v2697 = vadd.f32 %v1111, %v2679
        %v2698 = vadd.f32 %v1112, %v2681
        %v2699 = vadd.f32 %v1113, %v2683
        %v2700 = vadd.f32 %v1114, %v2685
        %v2701 = vadd.f32 %v1115, %v2689
        %v2702 = vadd.f32 %v1116, %v2691
        %v2703 = vadd.f32 %v1117, %v2693
        %v2704 = vadd.f32 %v1118, %v2695
        %v2705 = vld [vmem:[%s833] sm:$0x3]
        %v2707 = vlaneseq
        %v2708 = vshrl.u32 %v2707, 7
        %v2709 = vsub.s32 0, %v2708
        %v2710 = vrot.slane %v2705, %v2709
        %v2711 = vlaneseq
        %v2712 = vshrl.u32 %v2711, 7
        %v2713 = vsub.s32 1, %v2712
        %v2714 = vrot.slane %v2705, %v2713
        %v2717 = vadd.f32 %v2697, %v2710
        %v2718 = vadd.f32 %v2698, %v2714
        %v2719 = vadd.f32 %v2699, %v2710
        %v2720 = vadd.f32 %v2700, %v2714
        %v2721 = vadd.f32 %v2701, %v2710
        %v2722 = vadd.f32 %v2702, %v2714
        %v2723 = vadd.f32 %v2703, %v2710
        %v2724 = vadd.f32 %v2704, %v2714
        %v2725 = vld [vmem:[%s842] sm:$0x3]
        %v2726 = vld [vmem:[%s851] sm:$0x3]
        %v2727 = vadd.f32 %v2717, %v2718
        %2728 = vadd.xlane.f32.xlu0 %v2727
        %v2729 = vpop.xlane.xlu0 %2728
        %v2730 = vadd.f32 %v2719, %v2720
        %2731 = vadd.xlane.f32.xlu0 %v2730
        %v2732 = vpop.xlane.xlu0 %2731
        %v2733 = vadd.f32 %v2721, %v2722
        %2734 = vadd.xlane.f32.xlu0 %v2733
        %v2735 = vpop.xlane.xlu0 %2734
        %v2736 = vadd.f32 %v2723, %v2724
        %2737 = vadd.xlane.f32.xlu0 %v2736
        %v2738 = vpop.xlane.xlu0 %2737
        %v2739 = vmul.f32 %v2729, %v1133
        %v2740 = vmul.f32 %v2732, %v1133
        %v2741 = vmul.f32 %v2735, %v1133
        %v2742 = vmul.f32 %v2738, %v1133
        %v2743 = vsub.f32 %v2717, %v2739
        %v2744 = vsub.f32 %v2718, %v2739
        %v2745 = vsub.f32 %v2719, %v2740
        %v2746 = vsub.f32 %v2720, %v2740
        %v2747 = vsub.f32 %v2721, %v2741
        %v2748 = vsub.f32 %v2722, %v2741
        %v2749 = vsub.f32 %v2723, %v2742
        %v2750 = vsub.f32 %v2724, %v2742
        %v2751 = vmul.f32 %v2743, %v2743
        %v2752 = vmul.f32 %v2744, %v2744
        %v2753 = vmul.f32 %v2745, %v2745
        %v2754 = vmul.f32 %v2746, %v2746
        %v2755 = vmul.f32 %v2747, %v2747
        %v2756 = vmul.f32 %v2748, %v2748
        %v2757 = vmul.f32 %v2749, %v2749
        %v2758 = vmul.f32 %v2750, %v2750
        %v2759 = vadd.f32 %v2751, %v2752
        %2760 = vadd.xlane.f32.xlu0 %v2759
        %v2761 = vpop.xlane.xlu0 %2760
        %v2762 = vadd.f32 %v2753, %v2754
        %2763 = vadd.xlane.f32.xlu0 %v2762
        %v2764 = vpop.xlane.xlu0 %2763
        %v2765 = vadd.f32 %v2755, %v2756
        %2766 = vadd.xlane.f32.xlu0 %v2765
        %v2767 = vpop.xlane.xlu0 %2766
        %v2768 = vadd.f32 %v2757, %v2758
        %2769 = vadd.xlane.f32.xlu0 %v2768
        %v2770 = vpop.xlane.xlu0 %2769
        %v2771 = vmul.f32 %v2761, %v1133
        %v2772 = vmul.f32 %v2764, %v1133
        %v2773 = vmul.f32 %v2767, %v1133
        %v2774 = vmul.f32 %v2770, %v1133
        %v2775 = vadd.f32 %v2771, 1e-05
        %v2776 = vadd.f32 %v2772, 1e-05
        %v2777 = vadd.f32 %v2773, 1e-05
        %v2778 = vadd.f32 %v2774, 1e-05
        %v2779 = vrsqrt.pop %v2775
        %v2780 = vrsqrt.pop %v2776
        %v2781 = vrsqrt.pop %v2777
        %v2782 = vrsqrt.pop %v2778
        %v2783 = vmul.f32 %v2743, %v2779
        %v2784 = vmul.f32 %v2744, %v2779
        %v2785 = vmul.f32 %v2745, %v2780
        %v2786 = vmul.f32 %v2746, %v2780
        %v2787 = vmul.f32 %v2747, %v2781
        %v2788 = vmul.f32 %v2748, %v2781
        %v2789 = vmul.f32 %v2749, %v2782
        %v2790 = vmul.f32 %v2750, %v2782
        %v2792 = vlaneseq
        %v2793 = vshrl.u32 %v2792, 7
        %v2794 = vsub.s32 0, %v2793
        %v2795 = vrot.slane %v2725, %v2794
        %v2796 = vlaneseq
        %v2797 = vshrl.u32 %v2796, 7
        %v2798 = vsub.s32 1, %v2797
        %v2799 = vrot.slane %v2725, %v2798
        %v2802 = vmul.f32 %v2783, %v2795
        %v2803 = vmul.f32 %v2784, %v2799
        %v2804 = vmul.f32 %v2785, %v2795
        %v2805 = vmul.f32 %v2786, %v2799
        %v2806 = vmul.f32 %v2787, %v2795
        %v2807 = vmul.f32 %v2788, %v2799
        %v2808 = vmul.f32 %v2789, %v2795
        %v2809 = vmul.f32 %v2790, %v2799
        %v2811 = vlaneseq
        %v2812 = vshrl.u32 %v2811, 7
        %v2813 = vsub.s32 0, %v2812
        %v2814 = vrot.slane %v2726, %v2813
        %v2815 = vlaneseq
        %v2816 = vshrl.u32 %v2815, 7
        %v2817 = vsub.s32 1, %v2816
        %v2818 = vrot.slane %v2726, %v2817
        %v2821 = vadd.f32 %v2802, %v2814
        %v2822 = vadd.f32 %v2803, %v2818
        %v2823 = vadd.f32 %v2804, %v2814
        %v2824 = vadd.f32 %v2805, %v2818
        %v2825 = vadd.f32 %v2806, %v2814
        %v2826 = vadd.f32 %v2807, %v2818
        %v2827 = vadd.f32 %v2808, %v2814
        %v2828 = vadd.f32 %v2809, %v2818
        %v2829 = vld [vmem:[%s860] sm:$0xff]
        %v2830 = vld [vmem:[%s860 + $0x8] sm:$0xff]
        %v2831 = vld [vmem:[%s860 + $0x10] sm:$0xff]
        %v2832 = vld [vmem:[%s860 + $0x18] sm:$0xff]
        %v2833 = vld [vmem:[%s860 + $0x20] sm:$0xff]
        %v2834 = vld [vmem:[%s860 + $0x28] sm:$0xff]
        %v2835 = vld [vmem:[%s860 + $0x30] sm:$0xff]
        %v2836 = vld [vmem:[%s860 + $0x38] sm:$0xff]
        %v2837 = vld [vmem:[%s860 + $0x40] sm:$0xff]
        %v2838 = vld [vmem:[%s860 + $0x48] sm:$0xff]
        %v2839 = vld [vmem:[%s860 + $0x50] sm:$0xff]
        %v2840 = vld [vmem:[%s860 + $0x58] sm:$0xff]
        %v2841 = vld [vmem:[%s860 + $0x60] sm:$0xff]
        %v2842 = vld [vmem:[%s860 + $0x68] sm:$0xff]
        %v2843 = vld [vmem:[%s860 + $0x70] sm:$0xff]
        %v2844 = vld [vmem:[%s860 + $0x78] sm:$0xff]
        %v2845 = vld [vmem:[%s860 + $0x80] sm:$0xff]
        %v2846 = vld [vmem:[%s860 + $0x88] sm:$0xff]
        %v2847 = vld [vmem:[%s860 + $0x90] sm:$0xff]
        %v2848 = vld [vmem:[%s860 + $0x98] sm:$0xff]
        %v2849 = vld [vmem:[%s860 + $0xa0] sm:$0xff]
        %v2850 = vld [vmem:[%s860 + $0xa8] sm:$0xff]
        %v2851 = vld [vmem:[%s860 + $0xb0] sm:$0xff]
        %v2852 = vld [vmem:[%s860 + $0xb8] sm:$0xff]
        %v2853 = vld [vmem:[%s860 + $0xc0] sm:$0xff]
        %v2854 = vld [vmem:[%s860 + $0xc8] sm:$0xff]
        %v2855 = vld [vmem:[%s860 + $0xd0] sm:$0xff]
        %v2856 = vld [vmem:[%s860 + $0xd8] sm:$0xff]
        %v2857 = vld [vmem:[%s860 + $0xe0] sm:$0xff]
        %v2858 = vld [vmem:[%s860 + $0xe8] sm:$0xff]
        %v2859 = vld [vmem:[%s860 + $0xf0] sm:$0xff]
        %v2860 = vld [vmem:[%s860 + $0xf8] sm:$0xff]
        %v2861 = vld [vmem:[%s860 + $0x100] sm:$0xff]
        %v2862 = vld [vmem:[%s860 + $0x108] sm:$0xff]
        %v2863 = vld [vmem:[%s860 + $0x110] sm:$0xff]
        %v2864 = vld [vmem:[%s860 + $0x118] sm:$0xff]
        %v2865 = vld [vmem:[%s860 + $0x120] sm:$0xff]
        %v2866 = vld [vmem:[%s860 + $0x128] sm:$0xff]
        %v2867 = vld [vmem:[%s860 + $0x130] sm:$0xff]
        %v2868 = vld [vmem:[%s860 + $0x138] sm:$0xff]
        %v2869 = vld [vmem:[%s860 + $0x140] sm:$0xff]
        %v2870 = vld [vmem:[%s860 + $0x148] sm:$0xff]
        %v2871 = vld [vmem:[%s860 + $0x150] sm:$0xff]
        %v2872 = vld [vmem:[%s860 + $0x158] sm:$0xff]
        %v2873 = vld [vmem:[%s860 + $0x160] sm:$0xff]
        %v2874 = vld [vmem:[%s860 + $0x168] sm:$0xff]
        %v2875 = vld [vmem:[%s860 + $0x170] sm:$0xff]
        %v2876 = vld [vmem:[%s860 + $0x178] sm:$0xff]
        %v2877 = vld [vmem:[%s860 + $0x180] sm:$0xff]
        %v2878 = vld [vmem:[%s860 + $0x188] sm:$0xff]
        %v2879 = vld [vmem:[%s860 + $0x190] sm:$0xff]
        %v2880 = vld [vmem:[%s860 + $0x198] sm:$0xff]
        %v2881 = vld [vmem:[%s860 + $0x1a0] sm:$0xff]
        %v2882 = vld [vmem:[%s860 + $0x1a8] sm:$0xff]
        %v2883 = vld [vmem:[%s860 + $0x1b0] sm:$0xff]
        %v2884 = vld [vmem:[%s860 + $0x1b8] sm:$0xff]
        %v2885 = vld [vmem:[%s860 + $0x1c0] sm:$0xff]
        %v2886 = vld [vmem:[%s860 + $0x1c8] sm:$0xff]
        %v2887 = vld [vmem:[%s860 + $0x1d0] sm:$0xff]
        %v2888 = vld [vmem:[%s860 + $0x1d8] sm:$0xff]
        %v2889 = vld [vmem:[%s860 + $0x1e0] sm:$0xff]
        %v2890 = vld [vmem:[%s860 + $0x1e8] sm:$0xff]
        %v2891 = vld [vmem:[%s860 + $0x1f0] sm:$0xff]
        %v2892 = vld [vmem:[%s860 + $0x1f8] sm:$0xff]
        %v2893 = vld [vmem:[%s860 + $0x200] sm:$0xff]
        %v2894 = vld [vmem:[%s860 + $0x208] sm:$0xff]
        %v2895 = vld [vmem:[%s860 + $0x210] sm:$0xff]
        %v2896 = vld [vmem:[%s860 + $0x218] sm:$0xff]
        %v2897 = vld [vmem:[%s860 + $0x220] sm:$0xff]
        %v2898 = vld [vmem:[%s860 + $0x228] sm:$0xff]
        %v2899 = vld [vmem:[%s860 + $0x230] sm:$0xff]
        %v2900 = vld [vmem:[%s860 + $0x238] sm:$0xff]
        %v2901 = vld [vmem:[%s860 + $0x240] sm:$0xff]
        %v2902 = vld [vmem:[%s860 + $0x248] sm:$0xff]
        %v2903 = vld [vmem:[%s860 + $0x250] sm:$0xff]
        %v2904 = vld [vmem:[%s860 + $0x258] sm:$0xff]
        %v2905 = vld [vmem:[%s860 + $0x260] sm:$0xff]
        %v2906 = vld [vmem:[%s860 + $0x268] sm:$0xff]
        %v2907 = vld [vmem:[%s860 + $0x270] sm:$0xff]
        %v2908 = vld [vmem:[%s860 + $0x278] sm:$0xff]
        %v2909 = vld [vmem:[%s860 + $0x280] sm:$0xff]
        %v2910 = vld [vmem:[%s860 + $0x288] sm:$0xff]
        %v2911 = vld [vmem:[%s860 + $0x290] sm:$0xff]
        %v2912 = vld [vmem:[%s860 + $0x298] sm:$0xff]
        %v2913 = vld [vmem:[%s860 + $0x2a0] sm:$0xff]
        %v2914 = vld [vmem:[%s860 + $0x2a8] sm:$0xff]
        %v2915 = vld [vmem:[%s860 + $0x2b0] sm:$0xff]
        %v2916 = vld [vmem:[%s860 + $0x2b8] sm:$0xff]
        %v2917 = vld [vmem:[%s860 + $0x2c0] sm:$0xff]
        %v2918 = vld [vmem:[%s860 + $0x2c8] sm:$0xff]
        %v2919 = vld [vmem:[%s860 + $0x2d0] sm:$0xff]
        %v2920 = vld [vmem:[%s860 + $0x2d8] sm:$0xff]
        %v2921 = vld [vmem:[%s860 + $0x2e0] sm:$0xff]
        %v2922 = vld [vmem:[%s860 + $0x2e8] sm:$0xff]
        %v2923 = vld [vmem:[%s860 + $0x2f0] sm:$0xff]
        %v2924 = vld [vmem:[%s860 + $0x2f8] sm:$0xff]
        %v2925 = vld [vmem:[%s860 + $0x300] sm:$0xff]
        %v2926 = vld [vmem:[%s860 + $0x308] sm:$0xff]
        %v2927 = vld [vmem:[%s860 + $0x310] sm:$0xff]
        %v2928 = vld [vmem:[%s860 + $0x318] sm:$0xff]
        %v2929 = vld [vmem:[%s860 + $0x320] sm:$0xff]
        %v2930 = vld [vmem:[%s860 + $0x328] sm:$0xff]
        %v2931 = vld [vmem:[%s860 + $0x330] sm:$0xff]
        %v2932 = vld [vmem:[%s860 + $0x338] sm:$0xff]
        %v2933 = vld [vmem:[%s860 + $0x340] sm:$0xff]
        %v2934 = vld [vmem:[%s860 + $0x348] sm:$0xff]
        %v2935 = vld [vmem:[%s860 + $0x350] sm:$0xff]
        %v2936 = vld [vmem:[%s860 + $0x358] sm:$0xff]
        %v2937 = vld [vmem:[%s860 + $0x360] sm:$0xff]
        %v2938 = vld [vmem:[%s860 + $0x368] sm:$0xff]
        %v2939 = vld [vmem:[%s860 + $0x370] sm:$0xff]
        %v2940 = vld [vmem:[%s860 + $0x378] sm:$0xff]
        %v2941 = vld [vmem:[%s860 + $0x380] sm:$0xff]
        %v2942 = vld [vmem:[%s860 + $0x388] sm:$0xff]
        %v2943 = vld [vmem:[%s860 + $0x390] sm:$0xff]
        %v2944 = vld [vmem:[%s860 + $0x398] sm:$0xff]
        %v2945 = vld [vmem:[%s860 + $0x3a0] sm:$0xff]
        %v2946 = vld [vmem:[%s860 + $0x3a8] sm:$0xff]
        %v2947 = vld [vmem:[%s860 + $0x3b0] sm:$0xff]
        %v2948 = vld [vmem:[%s860 + $0x3b8] sm:$0xff]
        %v2949 = vld [vmem:[%s860 + $0x3c0] sm:$0xff]
        %v2950 = vld [vmem:[%s860 + $0x3c8] sm:$0xff]
        %v2951 = vld [vmem:[%s860 + $0x3d0] sm:$0xff]
        %v2952 = vld [vmem:[%s860 + $0x3d8] sm:$0xff]
        %v2953 = vld [vmem:[%s860 + $0x3e0] sm:$0xff]
        %v2954 = vld [vmem:[%s860 + $0x3e8] sm:$0xff]
        %v2955 = vld [vmem:[%s860 + $0x3f0] sm:$0xff]
        %v2956 = vld [vmem:[%s860 + $0x3f8] sm:$0xff]
        %v2957 = vpack.c.bf16 %v2823, %v2821
        %v2958 = vpack.c.bf16 %v2824, %v2822
        %v2959 = vpack.c.bf16 %v2827, %v2825
        %v2960 = vpack.c.bf16 %v2828, %v2826
        %v2961 = vld [vmem:[%s980] sm:$0xff]
        %v2963 = vlaneseq
        %v2964 = vshrl.u32 %v2963, 7
        %v2965 = vsub.s32 0, %v2964
        %v2966 = vrot.slane %v2961, %v2965
        %v2967 = vlaneseq
        %v2968 = vshrl.u32 %v2967, 7
        %v2969 = vsub.s32 1, %v2968
        %v2970 = vrot.slane %v2961, %v2969
        %v2971 = vlaneseq
        %v2972 = vshrl.u32 %v2971, 7
        %v2973 = vsub.s32 2, %v2972
        %v2974 = vrot.slane %v2961, %v2973
        %v2975 = vlaneseq
        %v2976 = vshrl.u32 %v2975, 7
        %v2977 = vsub.s32 3, %v2976
        %v2978 = vrot.slane %v2961, %v2977
        %v2979 = vlaneseq
        %v2980 = vshrl.u32 %v2979, 7
        %v2981 = vsub.s32 4, %v2980
        %v2982 = vrot.slane %v2961, %v2981
        %v2983 = vlaneseq
        %v2984 = vshrl.u32 %v2983, 7
        %v2985 = vsub.s32 5, %v2984
        %v2986 = vrot.slane %v2961, %v2985
        %v2987 = vlaneseq
        %v2988 = vshrl.u32 %v2987, 7
        %v2989 = vsub.s32 6, %v2988
        %v2990 = vrot.slane %v2961, %v2989
        %v2991 = vlaneseq
        %v2992 = vshrl.u32 %v2991, 7
        %v2993 = vsub.s32 7, %v2992
        %v2994 = vrot.slane %v2961, %v2993
        %v3131 = vunpack.c.l.b16 %v2829
        %v3132 = vunpack.c.h.b16 %v2829
        %v3133 = vunpack.c.l.b16 %v2830
        %v3134 = vunpack.c.h.b16 %v2830
        %v3135 = vunpack.c.l.b16 %v2831
        %v3136 = vunpack.c.h.b16 %v2831
        %v3137 = vunpack.c.l.b16 %v2832
        %v3138 = vunpack.c.h.b16 %v2832
        %v3139 = vunpack.c.l.b16 %v2833
        %v3140 = vunpack.c.h.b16 %v2833
        %v3141 = vunpack.c.l.b16 %v2834
        %v3142 = vunpack.c.h.b16 %v2834
        %v3143 = vunpack.c.l.b16 %v2835
        %v3144 = vunpack.c.h.b16 %v2835
        %v3145 = vunpack.c.l.b16 %v2836
        %v3146 = vunpack.c.h.b16 %v2836
        %v3147 = vunpack.c.l.b16 %v2837
        %v3148 = vunpack.c.h.b16 %v2837
        %v3149 = vunpack.c.l.b16 %v2838
        %v3150 = vunpack.c.h.b16 %v2838
        %v3151 = vunpack.c.l.b16 %v2839
        %v3152 = vunpack.c.h.b16 %v2839
        %v3153 = vunpack.c.l.b16 %v2840
        %v3154 = vunpack.c.h.b16 %v2840
        %v3155 = vunpack.c.l.b16 %v2841
        %v3156 = vunpack.c.h.b16 %v2841
        %v3157 = vunpack.c.l.b16 %v2842
        %v3158 = vunpack.c.h.b16 %v2842
        %v3159 = vunpack.c.l.b16 %v2843
        %v3160 = vunpack.c.h.b16 %v2843
        %v3161 = vunpack.c.l.b16 %v2844
        %v3162 = vunpack.c.h.b16 %v2844
        %v3163 = vunpack.c.l.b16 %v2845
        %v3164 = vunpack.c.h.b16 %v2845
        %v3165 = vunpack.c.l.b16 %v2846
        %v3166 = vunpack.c.h.b16 %v2846
        %v3167 = vunpack.c.l.b16 %v2847
        %v3168 = vunpack.c.h.b16 %v2847
        %v3169 = vunpack.c.l.b16 %v2848
        %v3170 = vunpack.c.h.b16 %v2848
        %v3171 = vunpack.c.l.b16 %v2849
        %v3172 = vunpack.c.h.b16 %v2849
        %v3173 = vunpack.c.l.b16 %v2850
        %v3174 = vunpack.c.h.b16 %v2850
        %v3175 = vunpack.c.l.b16 %v2851
        %v3176 = vunpack.c.h.b16 %v2851
        %v3177 = vunpack.c.l.b16 %v2852
        %v3178 = vunpack.c.h.b16 %v2852
        %v3179 = vunpack.c.l.b16 %v2853
        %v3180 = vunpack.c.h.b16 %v2853
        %v3181 = vunpack.c.l.b16 %v2854
        %v3182 = vunpack.c.h.b16 %v2854
        %v3183 = vunpack.c.l.b16 %v2855
        %v3184 = vunpack.c.h.b16 %v2855
        %v3185 = vunpack.c.l.b16 %v2856
        %v3186 = vunpack.c.h.b16 %v2856
        %v3187 = vunpack.c.l.b16 %v2857
        %v3188 = vunpack.c.h.b16 %v2857
        %v3189 = vunpack.c.l.b16 %v2858
        %v3190 = vunpack.c.h.b16 %v2858
        %v3191 = vunpack.c.l.b16 %v2859
        %v3192 = vunpack.c.h.b16 %v2859
        %v3193 = vunpack.c.l.b16 %v2860
        %v3194 = vunpack.c.h.b16 %v2860
        %v3195 = vunpack.c.l.b16 %v2861
        %v3196 = vunpack.c.h.b16 %v2861
        %v3197 = vunpack.c.l.b16 %v2862
        %v3198 = vunpack.c.h.b16 %v2862
        %v3199 = vunpack.c.l.b16 %v2863
        %v3200 = vunpack.c.h.b16 %v2863
        %v3201 = vunpack.c.l.b16 %v2864
        %v3202 = vunpack.c.h.b16 %v2864
        %v3203 = vunpack.c.l.b16 %v2865
        %v3204 = vunpack.c.h.b16 %v2865
        %v3205 = vunpack.c.l.b16 %v2866
        %v3206 = vunpack.c.h.b16 %v2866
        %v3207 = vunpack.c.l.b16 %v2867
        %v3208 = vunpack.c.h.b16 %v2867
        %v3209 = vunpack.c.l.b16 %v2868
        %v3210 = vunpack.c.h.b16 %v2868
        %v3211 = vunpack.c.l.b16 %v2869
        %v3212 = vunpack.c.h.b16 %v2869
        %v3213 = vunpack.c.l.b16 %v2870
        %v3214 = vunpack.c.h.b16 %v2870
        %v3215 = vunpack.c.l.b16 %v2871
        %v3216 = vunpack.c.h.b16 %v2871
        %v3217 = vunpack.c.l.b16 %v2872
        %v3218 = vunpack.c.h.b16 %v2872
        %v3219 = vunpack.c.l.b16 %v2873
        %v3220 = vunpack.c.h.b16 %v2873
        %v3221 = vunpack.c.l.b16 %v2874
        %v3222 = vunpack.c.h.b16 %v2874
        %v3223 = vunpack.c.l.b16 %v2875
        %v3224 = vunpack.c.h.b16 %v2875
        %v3225 = vunpack.c.l.b16 %v2876
        %v3226 = vunpack.c.h.b16 %v2876
        %v3227 = vunpack.c.l.b16 %v2877
        %v3228 = vunpack.c.h.b16 %v2877
        %v3229 = vunpack.c.l.b16 %v2878
        %v3230 = vunpack.c.h.b16 %v2878
        %v3231 = vunpack.c.l.b16 %v2879
        %v3232 = vunpack.c.h.b16 %v2879
        %v3233 = vunpack.c.l.b16 %v2880
        %v3234 = vunpack.c.h.b16 %v2880
        %v3235 = vunpack.c.l.b16 %v2881
        %v3236 = vunpack.c.h.b16 %v2881
        %v3237 = vunpack.c.l.b16 %v2882
        %v3238 = vunpack.c.h.b16 %v2882
        %v3239 = vunpack.c.l.b16 %v2883
        %v3240 = vunpack.c.h.b16 %v2883
        %v3241 = vunpack.c.l.b16 %v2884
        %v3242 = vunpack.c.h.b16 %v2884
        %v3243 = vunpack.c.l.b16 %v2885
        %v3244 = vunpack.c.h.b16 %v2885
        %v3245 = vunpack.c.l.b16 %v2886
        %v3246 = vunpack.c.h.b16 %v2886
        %v3247 = vunpack.c.l.b16 %v2887
        %v3248 = vunpack.c.h.b16 %v2887
        %v3249 = vunpack.c.l.b16 %v2888
        %v3250 = vunpack.c.h.b16 %v2888
        %v3251 = vunpack.c.l.b16 %v2889
        %v3252 = vunpack.c.h.b16 %v2889
        %v3253 = vunpack.c.l.b16 %v2890
        %v3254 = vunpack.c.h.b16 %v2890
        %v3255 = vunpack.c.l.b16 %v2891
        %v3256 = vunpack.c.h.b16 %v2891
        %v3257 = vunpack.c.l.b16 %v2892
        %v3258 = vunpack.c.h.b16 %v2892
        %v3259 = vunpack.c.l.b16 %v2893
        %v3260 = vunpack.c.h.b16 %v2893
        %v3261 = vunpack.c.l.b16 %v2894
        %v3262 = vunpack.c.h.b16 %v2894
        %v3263 = vunpack.c.l.b16 %v2895
        %v3264 = vunpack.c.h.b16 %v2895
        %v3265 = vunpack.c.l.b16 %v2896
        %v3266 = vunpack.c.h.b16 %v2896
        %v3267 = vunpack.c.l.b16 %v2897
        %v3268 = vunpack.c.h.b16 %v2897
        %v3269 = vunpack.c.l.b16 %v2898
        %v3270 = vunpack.c.h.b16 %v2898
        %v3271 = vunpack.c.l.b16 %v2899
        %v3272 = vunpack.c.h.b16 %v2899
        %v3273 = vunpack.c.l.b16 %v2900
        %v3274 = vunpack.c.h.b16 %v2900
        %v3275 = vunpack.c.l.b16 %v2901
        %v3276 = vunpack.c.h.b16 %v2901
        %v3277 = vunpack.c.l.b16 %v2902
        %v3278 = vunpack.c.h.b16 %v2902
        %v3279 = vunpack.c.l.b16 %v2903
        %v3280 = vunpack.c.h.b16 %v2903
        %v3281 = vunpack.c.l.b16 %v2904
        %v3282 = vunpack.c.h.b16 %v2904
        %v3283 = vunpack.c.l.b16 %v2905
        %v3284 = vunpack.c.h.b16 %v2905
        %v3285 = vunpack.c.l.b16 %v2906
        %v3286 = vunpack.c.h.b16 %v2906
        %v3287 = vunpack.c.l.b16 %v2907
        %v3288 = vunpack.c.h.b16 %v2907
        %v3289 = vunpack.c.l.b16 %v2908
        %v3290 = vunpack.c.h.b16 %v2908
        %v3291 = vunpack.c.l.b16 %v2909
        %v3292 = vunpack.c.h.b16 %v2909
        %v3293 = vunpack.c.l.b16 %v2910
        %v3294 = vunpack.c.h.b16 %v2910
        %v3295 = vunpack.c.l.b16 %v2911
        %v3296 = vunpack.c.h.b16 %v2911
        %v3297 = vunpack.c.l.b16 %v2912
        %v3298 = vunpack.c.h.b16 %v2912
        %v3299 = vunpack.c.l.b16 %v2913
        %v3300 = vunpack.c.h.b16 %v2913
        %v3301 = vunpack.c.l.b16 %v2914
        %v3302 = vunpack.c.h.b16 %v2914
        %v3303 = vunpack.c.l.b16 %v2915
        %v3304 = vunpack.c.h.b16 %v2915
        %v3305 = vunpack.c.l.b16 %v2916
        %v3306 = vunpack.c.h.b16 %v2916
        %v3307 = vunpack.c.l.b16 %v2917
        %v3308 = vunpack.c.h.b16 %v2917
        %v3309 = vunpack.c.l.b16 %v2918
        %v3310 = vunpack.c.h.b16 %v2918
        %v3311 = vunpack.c.l.b16 %v2919
        %v3312 = vunpack.c.h.b16 %v2919
        %v3313 = vunpack.c.l.b16 %v2920
        %v3314 = vunpack.c.h.b16 %v2920
        %v3315 = vunpack.c.l.b16 %v2921
        %v3316 = vunpack.c.h.b16 %v2921
        %v3317 = vunpack.c.l.b16 %v2922
        %v3318 = vunpack.c.h.b16 %v2922
        %v3319 = vunpack.c.l.b16 %v2923
        %v3320 = vunpack.c.h.b16 %v2923
        %v3321 = vunpack.c.l.b16 %v2924
        %v3322 = vunpack.c.h.b16 %v2924
        %v3323 = vunpack.c.l.b16 %v2925
        %v3324 = vunpack.c.h.b16 %v2925
        %v3325 = vunpack.c.l.b16 %v2926
        %v3326 = vunpack.c.h.b16 %v2926
        %v3327 = vunpack.c.l.b16 %v2927
        %v3328 = vunpack.c.h.b16 %v2927
        %v3329 = vunpack.c.l.b16 %v2928
        %v3330 = vunpack.c.h.b16 %v2928
        %v3331 = vunpack.c.l.b16 %v2929
        %v3332 = vunpack.c.h.b16 %v2929
        %v3333 = vunpack.c.l.b16 %v2930
        %v3334 = vunpack.c.h.b16 %v2930
        %v3335 = vunpack.c.l.b16 %v2931
        %v3336 = vunpack.c.h.b16 %v2931
        %v3337 = vunpack.c.l.b16 %v2932
        %v3338 = vunpack.c.h.b16 %v2932
        %v3339 = vunpack.c.l.b16 %v2933
        %v3340 = vunpack.c.h.b16 %v2933
        %v3341 = vunpack.c.l.b16 %v2934
        %v3342 = vunpack.c.h.b16 %v2934
        %v3343 = vunpack.c.l.b16 %v2935
        %v3344 = vunpack.c.h.b16 %v2935
        %v3345 = vunpack.c.l.b16 %v2936
        %v3346 = vunpack.c.h.b16 %v2936
        %v3347 = vunpack.c.l.b16 %v2937
        %v3348 = vunpack.c.h.b16 %v2937
        %v3349 = vunpack.c.l.b16 %v2938
        %v3350 = vunpack.c.h.b16 %v2938
        %v3351 = vunpack.c.l.b16 %v2939
        %v3352 = vunpack.c.h.b16 %v2939
        %v3353 = vunpack.c.l.b16 %v2940
        %v3354 = vunpack.c.h.b16 %v2940
        %v3355 = vunpack.c.l.b16 %v2941
        %v3356 = vunpack.c.h.b16 %v2941
        %v3357 = vunpack.c.l.b16 %v2942
        %v3358 = vunpack.c.h.b16 %v2942
        %v3359 = vunpack.c.l.b16 %v2943
        %v3360 = vunpack.c.h.b16 %v2943
        %v3361 = vunpack.c.l.b16 %v2944
        %v3362 = vunpack.c.h.b16 %v2944
        %v3363 = vunpack.c.l.b16 %v2945
        %v3364 = vunpack.c.h.b16 %v2945
        %v3365 = vunpack.c.l.b16 %v2946
        %v3366 = vunpack.c.h.b16 %v2946
        %v3367 = vunpack.c.l.b16 %v2947
        %v3368 = vunpack.c.h.b16 %v2947
        %v3369 = vunpack.c.l.b16 %v2948
        %v3370 = vunpack.c.h.b16 %v2948
        %v3371 = vunpack.c.l.b16 %v2949
        %v3372 = vunpack.c.h.b16 %v2949
        %v3373 = vunpack.c.l.b16 %v2950
        %v3374 = vunpack.c.h.b16 %v2950
        %v3375 = vunpack.c.l.b16 %v2951
        %v3376 = vunpack.c.h.b16 %v2951
        %v3377 = vunpack.c.l.b16 %v2952
        %v3378 = vunpack.c.h.b16 %v2952
        %v3379 = vunpack.c.l.b16 %v2953
        %v3380 = vunpack.c.h.b16 %v2953
        %v3381 = vunpack.c.l.b16 %v2954
        %v3382 = vunpack.c.h.b16 %v2954
        %v3383 = vunpack.c.l.b16 %v2955
        %v3384 = vunpack.c.h.b16 %v2955
        %v3385 = vunpack.c.l.b16 %v2956
        %v3386 = vunpack.c.h.b16 %v2956
        %v3387 = vpack.c.b16 %v3139, %v3131
        %v3388 = vpack.c.b16 %v3140, %v3132
        %v3389 = vpack.c.b16 %v3141, %v3133
        %v3390 = vpack.c.b16 %v3142, %v3134
        %v3391 = vpack.c.b16 %v3143, %v3135
        %v3392 = vpack.c.b16 %v3144, %v3136
        %v3393 = vpack.c.b16 %v3145, %v3137
        %v3394 = vpack.c.b16 %v3146, %v3138
        %v3395 = vpack.c.b16 %v3155, %v3147
        %v3396 = vpack.c.b16 %v3156, %v3148
        %v3397 = vpack.c.b16 %v3157, %v3149
        %v3398 = vpack.c.b16 %v3158, %v3150
        %v3399 = vpack.c.b16 %v3159, %v3151
        %v3400 = vpack.c.b16 %v3160, %v3152
        %v3401 = vpack.c.b16 %v3161, %v3153
        %v3402 = vpack.c.b16 %v3162, %v3154
        %v3403 = vpack.c.b16 %v3171, %v3163
        %v3404 = vpack.c.b16 %v3172, %v3164
        %v3405 = vpack.c.b16 %v3173, %v3165
        %v3406 = vpack.c.b16 %v3174, %v3166
        %v3407 = vpack.c.b16 %v3175, %v3167
        %v3408 = vpack.c.b16 %v3176, %v3168
        %v3409 = vpack.c.b16 %v3177, %v3169
        %v3410 = vpack.c.b16 %v3178, %v3170
        %v3411 = vpack.c.b16 %v3187, %v3179
        %v3412 = vpack.c.b16 %v3188, %v3180
        %v3413 = vpack.c.b16 %v3189, %v3181
        %v3414 = vpack.c.b16 %v3190, %v3182
        %v3415 = vpack.c.b16 %v3191, %v3183
        %v3416 = vpack.c.b16 %v3192, %v3184
        %v3417 = vpack.c.b16 %v3193, %v3185
        %v3418 = vpack.c.b16 %v3194, %v3186
        %v3419 = vpack.c.b16 %v3203, %v3195
        %v3420 = vpack.c.b16 %v3204, %v3196
        %v3421 = vpack.c.b16 %v3205, %v3197
        %v3422 = vpack.c.b16 %v3206, %v3198
        %v3423 = vpack.c.b16 %v3207, %v3199
        %v3424 = vpack.c.b16 %v3208, %v3200
        %v3425 = vpack.c.b16 %v3209, %v3201
        %v3426 = vpack.c.b16 %v3210, %v3202
        %v3427 = vpack.c.b16 %v3219, %v3211
        %v3428 = vpack.c.b16 %v3220, %v3212
        %v3429 = vpack.c.b16 %v3221, %v3213
        %v3430 = vpack.c.b16 %v3222, %v3214
        %v3431 = vpack.c.b16 %v3223, %v3215
        %v3432 = vpack.c.b16 %v3224, %v3216
        %v3433 = vpack.c.b16 %v3225, %v3217
        %v3434 = vpack.c.b16 %v3226, %v3218
        %v3435 = vpack.c.b16 %v3235, %v3227
        %v3436 = vpack.c.b16 %v3236, %v3228
        %v3437 = vpack.c.b16 %v3237, %v3229
        %v3438 = vpack.c.b16 %v3238, %v3230
        %v3439 = vpack.c.b16 %v3239, %v3231
        %v3440 = vpack.c.b16 %v3240, %v3232
        %v3441 = vpack.c.b16 %v3241, %v3233
        %v3442 = vpack.c.b16 %v3242, %v3234
        %v3443 = vpack.c.b16 %v3251, %v3243
        %v3444 = vpack.c.b16 %v3252, %v3244
        %v3445 = vpack.c.b16 %v3253, %v3245
        %v3446 = vpack.c.b16 %v3254, %v3246
        %v3447 = vpack.c.b16 %v3255, %v3247
        %v3448 = vpack.c.b16 %v3256, %v3248
        %v3449 = vpack.c.b16 %v3257, %v3249
        %v3450 = vpack.c.b16 %v3258, %v3250
        %v3451 = vpack.c.b16 %v3267, %v3259
        %v3452 = vpack.c.b16 %v3268, %v3260
        %v3453 = vpack.c.b16 %v3269, %v3261
        %v3454 = vpack.c.b16 %v3270, %v3262
        %v3455 = vpack.c.b16 %v3271, %v3263
        %v3456 = vpack.c.b16 %v3272, %v3264
        %v3457 = vpack.c.b16 %v3273, %v3265
        %v3458 = vpack.c.b16 %v3274, %v3266
        %v3459 = vpack.c.b16 %v3283, %v3275
        %v3460 = vpack.c.b16 %v3284, %v3276
        %v3461 = vpack.c.b16 %v3285, %v3277
        %v3462 = vpack.c.b16 %v3286, %v3278
        %v3463 = vpack.c.b16 %v3287, %v3279
        %v3464 = vpack.c.b16 %v3288, %v3280
        %v3465 = vpack.c.b16 %v3289, %v3281
        %v3466 = vpack.c.b16 %v3290, %v3282
        %v3467 = vpack.c.b16 %v3299, %v3291
        %v3468 = vpack.c.b16 %v3300, %v3292
        %v3469 = vpack.c.b16 %v3301, %v3293
        %v3470 = vpack.c.b16 %v3302, %v3294
        %v3471 = vpack.c.b16 %v3303, %v3295
        %v3472 = vpack.c.b16 %v3304, %v3296
        %v3473 = vpack.c.b16 %v3305, %v3297
        %v3474 = vpack.c.b16 %v3306, %v3298
        %v3475 = vpack.c.b16 %v3315, %v3307
        %v3476 = vpack.c.b16 %v3316, %v3308
        %v3477 = vpack.c.b16 %v3317, %v3309
        %v3478 = vpack.c.b16 %v3318, %v3310
        %v3479 = vpack.c.b16 %v3319, %v3311
        %v3480 = vpack.c.b16 %v3320, %v3312
        %v3481 = vpack.c.b16 %v3321, %v3313
        %v3482 = vpack.c.b16 %v3322, %v3314
        %v3483 = vpack.c.b16 %v3331, %v3323
        %v3484 = vpack.c.b16 %v3332, %v3324
        %v3485 = vpack.c.b16 %v3333, %v3325
        %v3486 = vpack.c.b16 %v3334, %v3326
        %v3487 = vpack.c.b16 %v3335, %v3327
        %v3488 = vpack.c.b16 %v3336, %v3328
        %v3489 = vpack.c.b16 %v3337, %v3329
        %v3490 = vpack.c.b16 %v3338, %v3330
        %v3491 = vpack.c.b16 %v3347, %v3339
        %v3492 = vpack.c.b16 %v3348, %v3340
        %v3493 = vpack.c.b16 %v3349, %v3341
        %v3494 = vpack.c.b16 %v3350, %v3342
        %v3495 = vpack.c.b16 %v3351, %v3343
        %v3496 = vpack.c.b16 %v3352, %v3344
        %v3497 = vpack.c.b16 %v3353, %v3345
        %v3498 = vpack.c.b16 %v3354, %v3346
        %v3499 = vpack.c.b16 %v3363, %v3355
        %v3500 = vpack.c.b16 %v3364, %v3356
        %v3501 = vpack.c.b16 %v3365, %v3357
        %v3502 = vpack.c.b16 %v3366, %v3358
        %v3503 = vpack.c.b16 %v3367, %v3359
        %v3504 = vpack.c.b16 %v3368, %v3360
        %v3505 = vpack.c.b16 %v3369, %v3361
        %v3506 = vpack.c.b16 %v3370, %v3362
        %v3507 = vpack.c.b16 %v3379, %v3371
        %v3508 = vpack.c.b16 %v3380, %v3372
        %v3509 = vpack.c.b16 %v3381, %v3373
        %v3510 = vpack.c.b16 %v3382, %v3374
        %v3511 = vpack.c.b16 %v3383, %v3375
        %v3512 = vpack.c.b16 %v3384, %v3376
        %v3513 = vpack.c.b16 %v3385, %v3377
        %v3514 = vpack.c.b16 %v3386, %v3378
        %3643 = vmatprep.subr.bf16.mxu0 %v3444
        %3644 = vmatpush1.bf16.msra.mxu0 %v3443
        %3645 = vmatprep.subr.bf16.mxu0 %v3436
        %3646 = vmatpush1.bf16.msra.mxu0 %v3435
        %3647 = vmatprep.subr.bf16.mxu0 %v3428
        %3648 = vmatpush1.bf16.msra.mxu0 %v3427
        %3649 = vmatprep.subr.bf16.mxu0 %v3420
        %3650 = vmatpush1.bf16.msra.mxu0 %v3419
        %3651 = vmatprep.subr.bf16.mxu0 %v3412
        %3652 = vmatpush1.bf16.msra.mxu0 %v3411
        %3653 = vmatprep.subr.bf16.mxu0 %v3404
        %3654 = vmatpush1.bf16.msra.mxu0 %v3403
        %3655 = vmatprep.subr.bf16.mxu0 %v3396
        %3656 = vmatpush1.bf16.msra.mxu0 %v3395
        %3657 = vmatprep.subr.bf16.mxu0 %v3388
        %3658 = vmatpush1.bf16.msra.mxu0 %v3387
        %3659 = vmatprep.subr.bf16.mxu0 %v3508
        %3660 = vmatpush2.bf16.msra.mxu0 %v3507
        %3661 = vmatprep.subr.bf16.mxu0 %v3500
        %3662 = vmatpush2.bf16.msra.mxu0 %v3499
        %3663 = vmatprep.subr.bf16.mxu0 %v3492
        %3664 = vmatpush2.bf16.msra.mxu0 %v3491
        %3665 = vmatprep.subr.bf16.mxu0 %v3484
        %3666 = vmatpush2.bf16.msra.mxu0 %v3483
        %3667 = vmatprep.subr.bf16.mxu0 %v3476
        %3668 = vmatpush2.bf16.msra.mxu0 %v3475
        %3669 = vmatprep.subr.bf16.mxu0 %v3468
        %3670 = vmatpush2.bf16.msra.mxu0 %v3467
        %3671 = vmatprep.subr.bf16.mxu0 %v3460
        %3672 = vmatpush2.bf16.msra.mxu0 %v3459
        %3673 = vmatprep.subr.bf16.mxu0 %v3452
        %3674 = vmatpush2.bf16.msra.mxu0 %v3451
        %3675 = vmatprep.mubr.bf16.mxu0 %v2958
        %3676 = vmatmul.mubr.bf16.gmra.mxu0 %v2957
        %v3677 = vpop.f32.mrf.mxu0
        %v3678 = vadd.f32 %v2966, %v3677
        %v3679 = vpop.f32.mrf.mxu0
        %v3680 = vadd.f32 %v2970, %v3679
        %v3681 = vpop.f32.mrf.mxu0
        %v3682 = vadd.f32 %v2966, %v3681
        %v3683 = vpop.f32.mrf.mxu0
        %v3684 = vadd.f32 %v2970, %v3683
        %3685 = vmatprep.mubr.bf16.mxu0 %v2960
        %3686 = vmatmul.mubr.bf16.gmra.mxu0 %v2959
        %v3687 = vpop.f32.mrf.mxu0
        %v3688 = vadd.f32 %v2966, %v3687
        %v3689 = vpop.f32.mrf.mxu0
        %v3690 = vadd.f32 %v2970, %v3689
        %v3691 = vpop.f32.mrf.mxu0
        %v3692 = vadd.f32 %v2966, %v3691
        %v3693 = vpop.f32.mrf.mxu0
        %v3694 = vadd.f32 %v2970, %v3693
        %3695 = vdwg.mxu0
        %3696 = vmatprep.subr.bf16.mxu0 %v3446
        %3697 = vmatpush1.bf16.msra.mxu0 %v3445
        %3698 = vmatprep.subr.bf16.mxu0 %v3438
        %3699 = vmatpush1.bf16.msra.mxu0 %v3437
        %3700 = vmatprep.subr.bf16.mxu0 %v3430
        %3701 = vmatpush1.bf16.msra.mxu0 %v3429
        %3702 = vmatprep.subr.bf16.mxu0 %v3422
        %3703 = vmatpush1.bf16.msra.mxu0 %v3421
        %3704 = vmatprep.subr.bf16.mxu0 %v3414
        %3705 = vmatpush1.bf16.msra.mxu0 %v3413
        %3706 = vmatprep.subr.bf16.mxu0 %v3406
        %3707 = vmatpush1.bf16.msra.mxu0 %v3405
        %3708 = vmatprep.subr.bf16.mxu0 %v3398
        %3709 = vmatpush1.bf16.msra.mxu0 %v3397
        %3710 = vmatprep.subr.bf16.mxu0 %v3390
        %3711 = vmatpush1.bf16.msra.mxu0 %v3389
        %3712 = vmatprep.subr.bf16.mxu0 %v3510
        %3713 = vmatpush2.bf16.msra.mxu0 %v3509
        %3714 = vmatprep.subr.bf16.mxu0 %v3502
        %3715 = vmatpush2.bf16.msra.mxu0 %v3501
        %3716 = vmatprep.subr.bf16.mxu0 %v3494
        %3717 = vmatpush2.bf16.msra.mxu0 %v3493
        %3718 = vmatprep.subr.bf16.mxu0 %v3486
        %3719 = vmatpush2.bf16.msra.mxu0 %v3485
        %3720 = vmatprep.subr.bf16.mxu0 %v3478
        %3721 = vmatpush2.bf16.msra.mxu0 %v3477
        %3722 = vmatprep.subr.bf16.mxu0 %v3470
        %3723 = vmatpush2.bf16.msra.mxu0 %v3469
        %3724 = vmatprep.subr.bf16.mxu0 %v3462
        %3725 = vmatpush2.bf16.msra.mxu0 %v3461
        %3726 = vmatprep.subr.bf16.mxu0 %v3454
        %3727 = vmatpush2.bf16.msra.mxu0 %v3453
        %3728 = vmatprep.mubr.bf16.mxu0 %v2958
        %3729 = vmatmul.mubr.bf16.gmra.mxu0 %v2957
        %v3730 = vpop.f32.mrf.mxu0
        %v3731 = vadd.f32 %v2974, %v3730
        %v3732 = vpop.f32.mrf.mxu0
        %v3733 = vadd.f32 %v2978, %v3732
        %v3734 = vpop.f32.mrf.mxu0
        %v3735 = vadd.f32 %v2974, %v3734
        %v3736 = vpop.f32.mrf.mxu0
        %v3737 = vadd.f32 %v2978, %v3736
        %3738 = vmatprep.mubr.bf16.mxu0 %v2960
        %3739 = vmatmul.mubr.bf16.gmra.mxu0 %v2959
        %v3740 = vpop.f32.mrf.mxu0
        %v3741 = vadd.f32 %v2974, %v3740
        %v3742 = vpop.f32.mrf.mxu0
        %v3743 = vadd.f32 %v2978, %v3742
        %v3744 = vpop.f32.mrf.mxu0
        %v3745 = vadd.f32 %v2974, %v3744
        %v3746 = vpop.f32.mrf.mxu0
        %v3747 = vadd.f32 %v2978, %v3746
        %3748 = vdwg.mxu0
        %3749 = vmatprep.subr.bf16.mxu0 %v3448
        %3750 = vmatpush1.bf16.msra.mxu0 %v3447
        %3751 = vmatprep.subr.bf16.mxu0 %v3440
        %3752 = vmatpush1.bf16.msra.mxu0 %v3439
        %3753 = vmatprep.subr.bf16.mxu0 %v3432
        %3754 = vmatpush1.bf16.msra.mxu0 %v3431
        %3755 = vmatprep.subr.bf16.mxu0 %v3424
        %3756 = vmatpush1.bf16.msra.mxu0 %v3423
        %3757 = vmatprep.subr.bf16.mxu0 %v3416
        %3758 = vmatpush1.bf16.msra.mxu0 %v3415
        %3759 = vmatprep.subr.bf16.mxu0 %v3408
        %3760 = vmatpush1.bf16.msra.mxu0 %v3407
        %3761 = vmatprep.subr.bf16.mxu0 %v3400
        %3762 = vmatpush1.bf16.msra.mxu0 %v3399
        %3763 = vmatprep.subr.bf16.mxu0 %v3392
        %3764 = vmatpush1.bf16.msra.mxu0 %v3391
        %3765 = vmatprep.subr.bf16.mxu0 %v3512
        %3766 = vmatpush2.bf16.msra.mxu0 %v3511
        %3767 = vmatprep.subr.bf16.mxu0 %v3504
        %3768 = vmatpush2.bf16.msra.mxu0 %v3503
        %3769 = vmatprep.subr.bf16.mxu0 %v3496
        %3770 = vmatpush2.bf16.msra.mxu0 %v3495
        %3771 = vmatprep.subr.bf16.mxu0 %v3488
        %3772 = vmatpush2.bf16.msra.mxu0 %v3487
        %3773 = vmatprep.subr.bf16.mxu0 %v3480
        %3774 = vmatpush2.bf16.msra.mxu0 %v3479
        %3775 = vmatprep.subr.bf16.mxu0 %v3472
        %3776 = vmatpush2.bf16.msra.mxu0 %v3471
        %3777 = vmatprep.subr.bf16.mxu0 %v3464
        %3778 = vmatpush2.bf16.msra.mxu0 %v3463
        %3779 = vmatprep.subr.bf16.mxu0 %v3456
        %3780 = vmatpush2.bf16.msra.mxu0 %v3455
        %3781 = vmatprep.mubr.bf16.mxu0 %v2958
        %3782 = vmatmul.mubr.bf16.gmra.mxu0 %v2957
        %v3783 = vpop.f32.mrf.mxu0
        %v3784 = vadd.f32 %v2982, %v3783
        %v3785 = vpop.f32.mrf.mxu0
        %v3786 = vadd.f32 %v2986, %v3785
        %v3787 = vpop.f32.mrf.mxu0
        %v3788 = vadd.f32 %v2982, %v3787
        %v3789 = vpop.f32.mrf.mxu0
        %v3790 = vadd.f32 %v2986, %v3789
        %3791 = vmatprep.mubr.bf16.mxu0 %v2960
        %3792 = vmatmul.mubr.bf16.gmra.mxu0 %v2959
        %v3793 = vpop.f32.mrf.mxu0
        %v3794 = vadd.f32 %v2982, %v3793
        %v3795 = vpop.f32.mrf.mxu0
        %v3796 = vadd.f32 %v2986, %v3795
        %v3797 = vpop.f32.mrf.mxu0
        %v3798 = vadd.f32 %v2982, %v3797
        %v3799 = vpop.f32.mrf.mxu0
        %v3800 = vadd.f32 %v2986, %v3799
        %3801 = vdwg.mxu0
        %3802 = vmatprep.subr.bf16.mxu0 %v3450
        %3803 = vmatpush1.bf16.msra.mxu0 %v3449
        %3804 = vmatprep.subr.bf16.mxu0 %v3442
        %3805 = vmatpush1.bf16.msra.mxu0 %v3441
        %3806 = vmatprep.subr.bf16.mxu0 %v3434
        %3807 = vmatpush1.bf16.msra.mxu0 %v3433
        %3808 = vmatprep.subr.bf16.mxu0 %v3426
        %3809 = vmatpush1.bf16.msra.mxu0 %v3425
        %3810 = vmatprep.subr.bf16.mxu0 %v3418
        %3811 = vmatpush1.bf16.msra.mxu0 %v3417
        %3812 = vmatprep.subr.bf16.mxu0 %v3410
        %3813 = vmatpush1.bf16.msra.mxu0 %v3409
        %3814 = vmatprep.subr.bf16.mxu0 %v3402
        %3815 = vmatpush1.bf16.msra.mxu0 %v3401
        %3816 = vmatprep.subr.bf16.mxu0 %v3394
        %3817 = vmatpush1.bf16.msra.mxu0 %v3393
        %3818 = vmatprep.subr.bf16.mxu0 %v3514
        %3819 = vmatpush2.bf16.msra.mxu0 %v3513
        %3820 = vmatprep.subr.bf16.mxu0 %v3506
        %3821 = vmatpush2.bf16.msra.mxu0 %v3505
        %3822 = vmatprep.subr.bf16.mxu0 %v3498
        %3823 = vmatpush2.bf16.msra.mxu0 %v3497
        %3824 = vmatprep.subr.bf16.mxu0 %v3490
        %3825 = vmatpush2.bf16.msra.mxu0 %v3489
        %3826 = vmatprep.subr.bf16.mxu0 %v3482
        %3827 = vmatpush2.bf16.msra.mxu0 %v3481
        %3828 = vmatprep.subr.bf16.mxu0 %v3474
        %3829 = vmatpush2.bf16.msra.mxu0 %v3473
        %3830 = vmatprep.subr.bf16.mxu0 %v3466
        %3831 = vmatpush2.bf16.msra.mxu0 %v3465
        %3832 = vmatprep.subr.bf16.mxu0 %v3458
        %3833 = vmatpush2.bf16.msra.mxu0 %v3457
        %3834 = vmatprep.mubr.bf16.mxu0 %v2958
        %3835 = vmatmul.mubr.bf16.gmra.mxu0 %v2957
        %v3836 = vpop.f32.mrf.mxu0
        %v3837 = vadd.f32 %v2990, %v3836
        %v3838 = vpop.f32.mrf.mxu0
        %v3839 = vadd.f32 %v2994, %v3838
        %v3840 = vpop.f32.mrf.mxu0
        %v3841 = vadd.f32 %v2990, %v3840
        %v3842 = vpop.f32.mrf.mxu0
        %v3843 = vadd.f32 %v2994, %v3842
        %3844 = vmatprep.mubr.bf16.mxu0 %v2960
        %3845 = vmatmul.mubr.bf16.gmra.mxu0 %v2959
        %v3846 = vpop.f32.mrf.mxu0
        %v3847 = vadd.f32 %v2990, %v3846
        %v3848 = vpop.f32.mrf.mxu0
        %v3849 = vadd.f32 %v2994, %v3848
        %v3850 = vpop.f32.mrf.mxu0
        %v3851 = vadd.f32 %v2990, %v3850
        %v3852 = vpop.f32.mrf.mxu0
        %v3853 = vadd.f32 %v2994, %v3852
        %3854 = vdwg.mxu0
        %v3855 = vmul.f32 %v3678, 1.702
        %v3856 = vmul.f32 %v3680, 1.702
        %v3857 = vmul.f32 %v3731, 1.702
        %v3858 = vmul.f32 %v3733, 1.702
        %v3859 = vmul.f32 %v3784, 1.702
        %v3860 = vmul.f32 %v3786, 1.702
        %v3861 = vmul.f32 %v3837, 1.702
        %v3862 = vmul.f32 %v3839, 1.702
        %v3863 = vmul.f32 %v3682, 1.702
        %v3864 = vmul.f32 %v3684, 1.702
        %v3865 = vmul.f32 %v3735, 1.702
        %v3866 = vmul.f32 %v3737, 1.702
        %v3867 = vmul.f32 %v3788, 1.702
        %v3868 = vmul.f32 %v3790, 1.702
        %v3869 = vmul.f32 %v3841, 1.702
        %v3870 = vmul.f32 %v3843, 1.702
        %v3871 = vmul.f32 %v3688, 1.702
        %v3872 = vmul.f32 %v3690, 1.702
        %v3873 = vmul.f32 %v3741, 1.702
        %v3874 = vmul.f32 %v3743, 1.702
        %v3875 = vmul.f32 %v3794, 1.702
        %v3876 = vmul.f32 %v3796, 1.702
        %v3877 = vmul.f32 %v3847, 1.702
        %v3878 = vmul.f32 %v3849, 1.702
        %v3879 = vmul.f32 %v3692, 1.702
        %v3880 = vmul.f32 %v3694, 1.702
        %v3881 = vmul.f32 %v3745, 1.702
        %v3882 = vmul.f32 %v3747, 1.702
        %v3883 = vmul.f32 %v3798, 1.702
        %v3884 = vmul.f32 %v3800, 1.702
        %v3885 = vmul.f32 %v3851, 1.702
        %v3886 = vmul.f32 %v3853, 1.702
        %v3887 = vxor.u32 %v3855, 2147483648
        %v3888 = vxor.u32 %v3856, 2147483648
        %v3889 = vxor.u32 %v3857, 2147483648
        %v3890 = vxor.u32 %v3858, 2147483648
        %v3891 = vxor.u32 %v3859, 2147483648
        %v3892 = vxor.u32 %v3860, 2147483648
        %v3893 = vxor.u32 %v3861, 2147483648
        %v3894 = vxor.u32 %v3862, 2147483648
        %v3895 = vxor.u32 %v3863, 2147483648
        %v3896 = vxor.u32 %v3864, 2147483648
        %v3897 = vxor.u32 %v3865, 2147483648
        %v3898 = vxor.u32 %v3866, 2147483648
        %v3899 = vxor.u32 %v3867, 2147483648
        %v3900 = vxor.u32 %v3868, 2147483648
        %v3901 = vxor.u32 %v3869, 2147483648
        %v3902 = vxor.u32 %v3870, 2147483648
        %v3903 = vxor.u32 %v3871, 2147483648
        %v3904 = vxor.u32 %v3872, 2147483648
        %v3905 = vxor.u32 %v3873, 2147483648
        %v3906 = vxor.u32 %v3874, 2147483648
        %v3907 = vxor.u32 %v3875, 2147483648
        %v3908 = vxor.u32 %v3876, 2147483648
        %v3909 = vxor.u32 %v3877, 2147483648
        %v3910 = vxor.u32 %v3878, 2147483648
        %v3911 = vxor.u32 %v3879, 2147483648
        %v3912 = vxor.u32 %v3880, 2147483648
        %v3913 = vxor.u32 %v3881, 2147483648
        %v3914 = vxor.u32 %v3882, 2147483648
        %v3915 = vxor.u32 %v3883, 2147483648
        %v3916 = vxor.u32 %v3884, 2147483648
        %v3917 = vxor.u32 %v3885, 2147483648
        %v3918 = vxor.u32 %v3886, 2147483648
        %v3919 = vmul.f32 %v3887, 1.442695
        %v3920 = vpow.pop %v3919
        %v3921 = vmul.f32 %v3888, 1.442695
        %v3922 = vpow.pop %v3921
        %v3923 = vmul.f32 %v3889, 1.442695
        %v3924 = vpow.pop %v3923
        %v3925 = vmul.f32 %v3890, 1.442695
        %v3926 = vpow.pop %v3925
        %v3927 = vmul.f32 %v3891, 1.442695
        %v3928 = vpow.pop %v3927
        %v3929 = vmul.f32 %v3892, 1.442695
        %v3930 = vpow.pop %v3929
        %v3931 = vmul.f32 %v3893, 1.442695
        %v3932 = vpow.pop %v3931
        %v3933 = vmul.f32 %v3894, 1.442695
        %v3934 = vpow.pop %v3933
        %v3935 = vmul.f32 %v3895, 1.442695
        %v3936 = vpow.pop %v3935
        %v3937 = vmul.f32 %v3896, 1.442695
        %v3938 = vpow.pop %v3937
        %v3939 = vmul.f32 %v3897, 1.442695
        %v3940 = vpow.pop %v3939
        %v3941 = vmul.f32 %v3898, 1.442695
        %v3942 = vpow.pop %v3941
        %v3943 = vmul.f32 %v3899, 1.442695
        %v3944 = vpow.pop %v3943
        %v3945 = vmul.f32 %v3900, 1.442695
        %v3946 = vpow.pop %v3945
        %v3947 = vmul.f32 %v3901, 1.442695
        %v3948 = vpow.pop %v3947
        %v3949 = vmul.f32 %v3902, 1.442695
        %v3950 = vpow.pop %v3949
        %v3951 = vmul.f32 %v3903, 1.442695
        %v3952 = vpow.pop %v3951
        %v3953 = vmul.f32 %v3904, 1.442695
        %v3954 = vpow.pop %v3953
        %v3955 = vmul.f32 %v3905, 1.442695
        %v3956 = vpow.pop %v3955
        %v3957 = vmul.f32 %v3906, 1.442695
        %v3958 = vpow.pop %v3957
        %v3959 = vmul.f32 %v3907, 1.442695
        %v3960 = vpow.pop %v3959
        %v3961 = vmul.f32 %v3908, 1.442695
        %v3962 = vpow.pop %v3961
        %v3963 = vmul.f32 %v3909, 1.442695
        %v3964 = vpow.pop %v3963
        %v3965 = vmul.f32 %v3910, 1.442695
        %v3966 = vpow.pop %v3965
        %v3967 = vmul.f32 %v3911, 1.442695
        %v3968 = vpow.pop %v3967
        %v3969 = vmul.f32 %v3912, 1.442695
        %v3970 = vpow.pop %v3969
        %v3971 = vmul.f32 %v3913, 1.442695
        %v3972 = vpow.pop %v3971
        %v3973 = vmul.f32 %v3914, 1.442695
        %v3974 = vpow.pop %v3973
        %v3975 = vmul.f32 %v3915, 1.442695
        %v3976 = vpow.pop %v3975
        %v3977 = vmul.f32 %v3916, 1.442695
        %v3978 = vpow.pop %v3977
        %v3979 = vmul.f32 %v3917, 1.442695
        %v3980 = vpow.pop %v3979
        %v3981 = vmul.f32 %v3918, 1.442695
        %v3982 = vpow.pop %v3981
        %v3983 = vadd.f32 %v3920, 1.0
        %v3984 = vadd.f32 %v3922, 1.0
        %v3985 = vadd.f32 %v3924, 1.0
        %v3986 = vadd.f32 %v3926, 1.0
        %v3987 = vadd.f32 %v3928, 1.0
        %v3988 = vadd.f32 %v3930, 1.0
        %v3989 = vadd.f32 %v3932, 1.0
        %v3990 = vadd.f32 %v3934, 1.0
        %v3991 = vadd.f32 %v3936, 1.0
        %v3992 = vadd.f32 %v3938, 1.0
        %v3993 = vadd.f32 %v3940, 1.0
        %v3994 = vadd.f32 %v3942, 1.0
        %v3995 = vadd.f32 %v3944, 1.0
        %v3996 = vadd.f32 %v3946, 1.0
        %v3997 = vadd.f32 %v3948, 1.0
        %v3998 = vadd.f32 %v3950, 1.0
        %v3999 = vadd.f32 %v3952, 1.0
        %v4000 = vadd.f32 %v3954, 1.0
        %v4001 = vadd.f32 %v3956, 1.0
        %v4002 = vadd.f32 %v3958, 1.0
        %v4003 = vadd.f32 %v3960, 1.0
        %v4004 = vadd.f32 %v3962, 1.0
        %v4005 = vadd.f32 %v3964, 1.0
        %v4006 = vadd.f32 %v3966, 1.0
        %v4007 = vadd.f32 %v3968, 1.0
        %v4008 = vadd.f32 %v3970, 1.0
        %v4009 = vadd.f32 %v3972, 1.0
        %v4010 = vadd.f32 %v3974, 1.0
        %v4011 = vadd.f32 %v3976, 1.0
        %v4012 = vadd.f32 %v3978, 1.0
        %v4013 = vadd.f32 %v3980, 1.0
        %v4014 = vadd.f32 %v3982, 1.0
        %v4015 = vrcp.pop %v3983
        %v4016 = vmul.f32 1.0, %v4015
        %v4017 = vrcp.pop %v3984
        %v4018 = vmul.f32 1.0, %v4017
        %v4019 = vrcp.pop %v3985
        %v4020 = vmul.f32 1.0, %v4019
        %v4021 = vrcp.pop %v3986
        %v4022 = vmul.f32 1.0, %v4021
        %v4023 = vrcp.pop %v3987
        %v4024 = vmul.f32 1.0, %v4023
        %v4025 = vrcp.pop %v3988
        %v4026 = vmul.f32 1.0, %v4025
        %v4027 = vrcp.pop %v3989
        %v4028 = vmul.f32 1.0, %v4027
        %v4029 = vrcp.pop %v3990
        %v4030 = vmul.f32 1.0, %v4029
        %v4031 = vrcp.pop %v3991
        %v4032 = vmul.f32 1.0, %v4031
        %v4033 = vrcp.pop %v3992
        %v4034 = vmul.f32 1.0, %v4033
        %v4035 = vrcp.pop %v3993
        %v4036 = vmul.f32 1.0, %v4035
        %v4037 = vrcp.pop %v3994
        %v4038 = vmul.f32 1.0, %v4037
        %v4039 = vrcp.pop %v3995
        %v4040 = vmul.f32 1.0, %v4039
        %v4041 = vrcp.pop %v3996
        %v4042 = vmul.f32 1.0, %v4041
        %v4043 = vrcp.pop %v3997
        %v4044 = vmul.f32 1.0, %v4043
        %v4045 = vrcp.pop %v3998
        %v4046 = vmul.f32 1.0, %v4045
        %v4047 = vrcp.pop %v3999
        %v4048 = vmul.f32 1.0, %v4047
        %v4049 = vrcp.pop %v4000
        %v4050 = vmul.f32 1.0, %v4049
        %v4051 = vrcp.pop %v4001
        %v4052 = vmul.f32 1.0, %v4051
        %v4053 = vrcp.pop %v4002
        %v4054 = vmul.f32 1.0, %v4053
        %v4055 = vrcp.pop %v4003
        %v4056 = vmul.f32 1.0, %v4055
        %v4057 = vrcp.pop %v4004
        %v4058 = vmul.f32 1.0, %v4057
        %v4059 = vrcp.pop %v4005
        %v4060 = vmul.f32 1.0, %v4059
        %v4061 = vrcp.pop %v4006
        %v4062 = vmul.f32 1.0, %v4061
        %v4063 = vrcp.pop %v4007
        %v4064 = vmul.f32 1.0, %v4063
        %v4065 = vrcp.pop %v4008
        %v4066 = vmul.f32 1.0, %v4065
        %v4067 = vrcp.pop %v4009
        %v4068 = vmul.f32 1.0, %v4067
        %v4069 = vrcp.pop %v4010
        %v4070 = vmul.f32 1.0, %v4069
        %v4071 = vrcp.pop %v4011
        %v4072 = vmul.f32 1.0, %v4071
        %v4073 = vrcp.pop %v4012
        %v4074 = vmul.f32 1.0, %v4073
        %v4075 = vrcp.pop %v4013
        %v4076 = vmul.f32 1.0, %v4075
        %v4077 = vrcp.pop %v4014
        %v4078 = vmul.f32 1.0, %v4077
        %v4079 = vmul.f32 %v3678, %v4016
        %v4080 = vmul.f32 %v3680, %v4018
        %v4081 = vmul.f32 %v3731, %v4020
        %v4082 = vmul.f32 %v3733, %v4022
        %v4083 = vmul.f32 %v3784, %v4024
        %v4084 = vmul.f32 %v3786, %v4026
        %v4085 = vmul.f32 %v3837, %v4028
        %v4086 = vmul.f32 %v3839, %v4030
        %v4087 = vmul.f32 %v3682, %v4032
        %v4088 = vmul.f32 %v3684, %v4034
        %v4089 = vmul.f32 %v3735, %v4036
        %v4090 = vmul.f32 %v3737, %v4038
        %v4091 = vmul.f32 %v3788, %v4040
        %v4092 = vmul.f32 %v3790, %v4042
        %v4093 = vmul.f32 %v3841, %v4044
        %v4094 = vmul.f32 %v3843, %v4046
        %v4095 = vmul.f32 %v3688, %v4048
        %v4096 = vmul.f32 %v3690, %v4050
        %v4097 = vmul.f32 %v3741, %v4052
        %v4098 = vmul.f32 %v3743, %v4054
        %v4099 = vmul.f32 %v3794, %v4056
        %v4100 = vmul.f32 %v3796, %v4058
        %v4101 = vmul.f32 %v3847, %v4060
        %v4102 = vmul.f32 %v3849, %v4062
        %v4103 = vmul.f32 %v3692, %v4064
        %v4104 = vmul.f32 %v3694, %v4066
        %v4105 = vmul.f32 %v3745, %v4068
        %v4106 = vmul.f32 %v3747, %v4070
        %v4107 = vmul.f32 %v3798, %v4072
        %v4108 = vmul.f32 %v3800, %v4074
        %v4109 = vmul.f32 %v3851, %v4076
        %v4110 = vmul.f32 %v3853, %v4078
        %v4111 = vld [vmem:[%s869] sm:$0xff]
        %v4112 = vld [vmem:[%s869 + $0x8] sm:$0xff]
        %v4113 = vld [vmem:[%s869 + $0x10] sm:$0xff]
        %v4114 = vld [vmem:[%s869 + $0x18] sm:$0xff]
        %v4115 = vld [vmem:[%s869 + $0x20] sm:$0xff]
        %v4116 = vld [vmem:[%s869 + $0x28] sm:$0xff]
        %v4117 = vld [vmem:[%s869 + $0x30] sm:$0xff]
        %v4118 = vld [vmem:[%s869 + $0x38] sm:$0xff]
        %v4119 = vld [vmem:[%s869 + $0x40] sm:$0xff]
        %v4120 = vld [vmem:[%s869 + $0x48] sm:$0xff]
        %v4121 = vld [vmem:[%s869 + $0x50] sm:$0xff]
        %v4122 = vld [vmem:[%s869 + $0x58] sm:$0xff]
        %v4123 = vld [vmem:[%s869 + $0x60] sm:$0xff]
        %v4124 = vld [vmem:[%s869 + $0x68] sm:$0xff]
        %v4125 = vld [vmem:[%s869 + $0x70] sm:$0xff]
        %v4126 = vld [vmem:[%s869 + $0x78] sm:$0xff]
        %v4127 = vld [vmem:[%s869 + $0x80] sm:$0xff]
        %v4128 = vld [vmem:[%s869 + $0x88] sm:$0xff]
        %v4129 = vld [vmem:[%s869 + $0x90] sm:$0xff]
        %v4130 = vld [vmem:[%s869 + $0x98] sm:$0xff]
        %v4131 = vld [vmem:[%s869 + $0xa0] sm:$0xff]
        %v4132 = vld [vmem:[%s869 + $0xa8] sm:$0xff]
        %v4133 = vld [vmem:[%s869 + $0xb0] sm:$0xff]
        %v4134 = vld [vmem:[%s869 + $0xb8] sm:$0xff]
        %v4135 = vld [vmem:[%s869 + $0xc0] sm:$0xff]
        %v4136 = vld [vmem:[%s869 + $0xc8] sm:$0xff]
        %v4137 = vld [vmem:[%s869 + $0xd0] sm:$0xff]
        %v4138 = vld [vmem:[%s869 + $0xd8] sm:$0xff]
        %v4139 = vld [vmem:[%s869 + $0xe0] sm:$0xff]
        %v4140 = vld [vmem:[%s869 + $0xe8] sm:$0xff]
        %v4141 = vld [vmem:[%s869 + $0xf0] sm:$0xff]
        %v4142 = vld [vmem:[%s869 + $0xf8] sm:$0xff]
        %v4143 = vld [vmem:[%s869 + $0x100] sm:$0xff]
        %v4144 = vld [vmem:[%s869 + $0x108] sm:$0xff]
        %v4145 = vld [vmem:[%s869 + $0x110] sm:$0xff]
        %v4146 = vld [vmem:[%s869 + $0x118] sm:$0xff]
        %v4147 = vld [vmem:[%s869 + $0x120] sm:$0xff]
        %v4148 = vld [vmem:[%s869 + $0x128] sm:$0xff]
        %v4149 = vld [vmem:[%s869 + $0x130] sm:$0xff]
        %v4150 = vld [vmem:[%s869 + $0x138] sm:$0xff]
        %v4151 = vld [vmem:[%s869 + $0x140] sm:$0xff]
        %v4152 = vld [vmem:[%s869 + $0x148] sm:$0xff]
        %v4153 = vld [vmem:[%s869 + $0x150] sm:$0xff]
        %v4154 = vld [vmem:[%s869 + $0x158] sm:$0xff]
        %v4155 = vld [vmem:[%s869 + $0x160] sm:$0xff]
        %v4156 = vld [vmem:[%s869 + $0x168] sm:$0xff]
        %v4157 = vld [vmem:[%s869 + $0x170] sm:$0xff]
        %v4158 = vld [vmem:[%s869 + $0x178] sm:$0xff]
        %v4159 = vld [vmem:[%s869 + $0x180] sm:$0xff]
        %v4160 = vld [vmem:[%s869 + $0x188] sm:$0xff]
        %v4161 = vld [vmem:[%s869 + $0x190] sm:$0xff]
        %v4162 = vld [vmem:[%s869 + $0x198] sm:$0xff]
        %v4163 = vld [vmem:[%s869 + $0x1a0] sm:$0xff]
        %v4164 = vld [vmem:[%s869 + $0x1a8] sm:$0xff]
        %v4165 = vld [vmem:[%s869 + $0x1b0] sm:$0xff]
        %v4166 = vld [vmem:[%s869 + $0x1b8] sm:$0xff]
        %v4167 = vld [vmem:[%s869 + $0x1c0] sm:$0xff]
        %v4168 = vld [vmem:[%s869 + $0x1c8] sm:$0xff]
        %v4169 = vld [vmem:[%s869 + $0x1d0] sm:$0xff]
        %v4170 = vld [vmem:[%s869 + $0x1d8] sm:$0xff]
        %v4171 = vld [vmem:[%s869 + $0x1e0] sm:$0xff]
        %v4172 = vld [vmem:[%s869 + $0x1e8] sm:$0xff]
        %v4173 = vld [vmem:[%s869 + $0x1f0] sm:$0xff]
        %v4174 = vld [vmem:[%s869 + $0x1f8] sm:$0xff]
        %v4175 = vld [vmem:[%s869 + $0x200] sm:$0xff]
        %v4176 = vld [vmem:[%s869 + $0x208] sm:$0xff]
        %v4177 = vld [vmem:[%s869 + $0x210] sm:$0xff]
        %v4178 = vld [vmem:[%s869 + $0x218] sm:$0xff]
        %v4179 = vld [vmem:[%s869 + $0x220] sm:$0xff]
        %v4180 = vld [vmem:[%s869 + $0x228] sm:$0xff]
        %v4181 = vld [vmem:[%s869 + $0x230] sm:$0xff]
        %v4182 = vld [vmem:[%s869 + $0x238] sm:$0xff]
        %v4183 = vld [vmem:[%s869 + $0x240] sm:$0xff]
        %v4184 = vld [vmem:[%s869 + $0x248] sm:$0xff]
        %v4185 = vld [vmem:[%s869 + $0x250] sm:$0xff]
        %v4186 = vld [vmem:[%s869 + $0x258] sm:$0xff]
        %v4187 = vld [vmem:[%s869 + $0x260] sm:$0xff]
        %v4188 = vld [vmem:[%s869 + $0x268] sm:$0xff]
        %v4189 = vld [vmem:[%s869 + $0x270] sm:$0xff]
        %v4190 = vld [vmem:[%s869 + $0x278] sm:$0xff]
        %v4191 = vld [vmem:[%s869 + $0x280] sm:$0xff]
        %v4192 = vld [vmem:[%s869 + $0x288] sm:$0xff]
        %v4193 = vld [vmem:[%s869 + $0x290] sm:$0xff]
        %v4194 = vld [vmem:[%s869 + $0x298] sm:$0xff]
        %v4195 = vld [vmem:[%s869 + $0x2a0] sm:$0xff]
        %v4196 = vld [vmem:[%s869 + $0x2a8] sm:$0xff]
        %v4197 = vld [vmem:[%s869 + $0x2b0] sm:$0xff]
        %v4198 = vld [vmem:[%s869 + $0x2b8] sm:$0xff]
        %v4199 = vld [vmem:[%s869 + $0x2c0] sm:$0xff]
        %v4200 = vld [vmem:[%s869 + $0x2c8] sm:$0xff]
        %v4201 = vld [vmem:[%s869 + $0x2d0] sm:$0xff]
        %v4202 = vld [vmem:[%s869 + $0x2d8] sm:$0xff]
        %v4203 = vld [vmem:[%s869 + $0x2e0] sm:$0xff]
        %v4204 = vld [vmem:[%s869 + $0x2e8] sm:$0xff]
        %v4205 = vld [vmem:[%s869 + $0x2f0] sm:$0xff]
        %v4206 = vld [vmem:[%s869 + $0x2f8] sm:$0xff]
        %v4207 = vld [vmem:[%s869 + $0x300] sm:$0xff]
        %v4208 = vld [vmem:[%s869 + $0x308] sm:$0xff]
        %v4209 = vld [vmem:[%s869 + $0x310] sm:$0xff]
        %v4210 = vld [vmem:[%s869 + $0x318] sm:$0xff]
        %v4211 = vld [vmem:[%s869 + $0x320] sm:$0xff]
        %v4212 = vld [vmem:[%s869 + $0x328] sm:$0xff]
        %v4213 = vld [vmem:[%s869 + $0x330] sm:$0xff]
        %v4214 = vld [vmem:[%s869 + $0x338] sm:$0xff]
        %v4215 = vld [vmem:[%s869 + $0x340] sm:$0xff]
        %v4216 = vld [vmem:[%s869 + $0x348] sm:$0xff]
        %v4217 = vld [vmem:[%s869 + $0x350] sm:$0xff]
        %v4218 = vld [vmem:[%s869 + $0x358] sm:$0xff]
        %v4219 = vld [vmem:[%s869 + $0x360] sm:$0xff]
        %v4220 = vld [vmem:[%s869 + $0x368] sm:$0xff]
        %v4221 = vld [vmem:[%s869 + $0x370] sm:$0xff]
        %v4222 = vld [vmem:[%s869 + $0x378] sm:$0xff]
        %v4223 = vld [vmem:[%s869 + $0x380] sm:$0xff]
        %v4224 = vld [vmem:[%s869 + $0x388] sm:$0xff]
        %v4225 = vld [vmem:[%s869 + $0x390] sm:$0xff]
        %v4226 = vld [vmem:[%s869 + $0x398] sm:$0xff]
        %v4227 = vld [vmem:[%s869 + $0x3a0] sm:$0xff]
        %v4228 = vld [vmem:[%s869 + $0x3a8] sm:$0xff]
        %v4229 = vld [vmem:[%s869 + $0x3b0] sm:$0xff]
        %v4230 = vld [vmem:[%s869 + $0x3b8] sm:$0xff]
        %v4231 = vld [vmem:[%s869 + $0x3c0] sm:$0xff]
        %v4232 = vld [vmem:[%s869 + $0x3c8] sm:$0xff]
        %v4233 = vld [vmem:[%s869 + $0x3d0] sm:$0xff]
        %v4234 = vld [vmem:[%s869 + $0x3d8] sm:$0xff]
        %v4235 = vld [vmem:[%s869 + $0x3e0] sm:$0xff]
        %v4236 = vld [vmem:[%s869 + $0x3e8] sm:$0xff]
        %v4237 = vld [vmem:[%s869 + $0x3f0] sm:$0xff]
        %v4238 = vld [vmem:[%s869 + $0x3f8] sm:$0xff]
        %v4239 = vpack.c.bf16 %v4087, %v4079
        %v4240 = vpack.c.bf16 %v4088, %v4080
        %v4241 = vpack.c.bf16 %v4089, %v4081
        %v4242 = vpack.c.bf16 %v4090, %v4082
        %v4243 = vpack.c.bf16 %v4091, %v4083
        %v4244 = vpack.c.bf16 %v4092, %v4084
        %v4245 = vpack.c.bf16 %v4093, %v4085
        %v4246 = vpack.c.bf16 %v4094, %v4086
        %v4247 = vpack.c.bf16 %v4103, %v4095
        %v4248 = vpack.c.bf16 %v4104, %v4096
        %v4249 = vpack.c.bf16 %v4105, %v4097
        %v4250 = vpack.c.bf16 %v4106, %v4098
        %v4251 = vpack.c.bf16 %v4107, %v4099
        %v4252 = vpack.c.bf16 %v4108, %v4100
        %v4253 = vpack.c.bf16 %v4109, %v4101
        %v4254 = vpack.c.bf16 %v4110, %v4102
        %v4383 = vunpack.c.l.b16 %v4111
        %v4384 = vunpack.c.h.b16 %v4111
        %v4385 = vunpack.c.l.b16 %v4112
        %v4386 = vunpack.c.h.b16 %v4112
        %v4387 = vunpack.c.l.b16 %v4113
        %v4388 = vunpack.c.h.b16 %v4113
        %v4389 = vunpack.c.l.b16 %v4114
        %v4390 = vunpack.c.h.b16 %v4114
        %v4391 = vunpack.c.l.b16 %v4115
        %v4392 = vunpack.c.h.b16 %v4115
        %v4393 = vunpack.c.l.b16 %v4116
        %v4394 = vunpack.c.h.b16 %v4116
        %v4395 = vunpack.c.l.b16 %v4117
        %v4396 = vunpack.c.h.b16 %v4117
        %v4397 = vunpack.c.l.b16 %v4118
        %v4398 = vunpack.c.h.b16 %v4118
        %v4399 = vunpack.c.l.b16 %v4119
        %v4400 = vunpack.c.h.b16 %v4119
        %v4401 = vunpack.c.l.b16 %v4120
        %v4402 = vunpack.c.h.b16 %v4120
        %v4403 = vunpack.c.l.b16 %v4121
        %v4404 = vunpack.c.h.b16 %v4121
        %v4405 = vunpack.c.l.b16 %v4122
        %v4406 = vunpack.c.h.b16 %v4122
        %v4407 = vunpack.c.l.b16 %v4123
        %v4408 = vunpack.c.h.b16 %v4123
        %v4409 = vunpack.c.l.b16 %v4124
        %v4410 = vunpack.c.h.b16 %v4124
        %v4411 = vunpack.c.l.b16 %v4125
        %v4412 = vunpack.c.h.b16 %v4125
        %v4413 = vunpack.c.l.b16 %v4126
        %v4414 = vunpack.c.h.b16 %v4126
        %v4415 = vunpack.c.l.b16 %v4127
        %v4416 = vunpack.c.h.b16 %v4127
        %v4417 = vunpack.c.l.b16 %v4128
        %v4418 = vunpack.c.h.b16 %v4128
        %v4419 = vunpack.c.l.b16 %v4129
        %v4420 = vunpack.c.h.b16 %v4129
        %v4421 = vunpack.c.l.b16 %v4130
        %v4422 = vunpack.c.h.b16 %v4130
        %v4423 = vunpack.c.l.b16 %v4131
        %v4424 = vunpack.c.h.b16 %v4131
        %v4425 = vunpack.c.l.b16 %v4132
        %v4426 = vunpack.c.h.b16 %v4132
        %v4427 = vunpack.c.l.b16 %v4133
        %v4428 = vunpack.c.h.b16 %v4133
        %v4429 = vunpack.c.l.b16 %v4134
        %v4430 = vunpack.c.h.b16 %v4134
        %v4431 = vunpack.c.l.b16 %v4135
        %v4432 = vunpack.c.h.b16 %v4135
        %v4433 = vunpack.c.l.b16 %v4136
        %v4434 = vunpack.c.h.b16 %v4136
        %v4435 = vunpack.c.l.b16 %v4137
        %v4436 = vunpack.c.h.b16 %v4137
        %v4437 = vunpack.c.l.b16 %v4138
        %v4438 = vunpack.c.h.b16 %v4138
        %v4439 = vunpack.c.l.b16 %v4139
        %v4440 = vunpack.c.h.b16 %v4139
        %v4441 = vunpack.c.l.b16 %v4140
        %v4442 = vunpack.c.h.b16 %v4140
        %v4443 = vunpack.c.l.b16 %v4141
        %v4444 = vunpack.c.h.b16 %v4141
        %v4445 = vunpack.c.l.b16 %v4142
        %v4446 = vunpack.c.h.b16 %v4142
        %v4447 = vunpack.c.l.b16 %v4143
        %v4448 = vunpack.c.h.b16 %v4143
        %v4449 = vunpack.c.l.b16 %v4144
        %v4450 = vunpack.c.h.b16 %v4144
        %v4451 = vunpack.c.l.b16 %v4145
        %v4452 = vunpack.c.h.b16 %v4145
        %v4453 = vunpack.c.l.b16 %v4146
        %v4454 = vunpack.c.h.b16 %v4146
        %v4455 = vunpack.c.l.b16 %v4147
        %v4456 = vunpack.c.h.b16 %v4147
        %v4457 = vunpack.c.l.b16 %v4148
        %v4458 = vunpack.c.h.b16 %v4148
        %v4459 = vunpack.c.l.b16 %v4149
        %v4460 = vunpack.c.h.b16 %v4149
        %v4461 = vunpack.c.l.b16 %v4150
        %v4462 = vunpack.c.h.b16 %v4150
        %v4463 = vunpack.c.l.b16 %v4151
        %v4464 = vunpack.c.h.b16 %v4151
        %v4465 = vunpack.c.l.b16 %v4152
        %v4466 = vunpack.c.h.b16 %v4152
        %v4467 = vunpack.c.l.b16 %v4153
        %v4468 = vunpack.c.h.b16 %v4153
        %v4469 = vunpack.c.l.b16 %v4154
        %v4470 = vunpack.c.h.b16 %v4154
        %v4471 = vunpack.c.l.b16 %v4155
        %v4472 = vunpack.c.h.b16 %v4155
        %v4473 = vunpack.c.l.b16 %v4156
        %v4474 = vunpack.c.h.b16 %v4156
        %v4475 = vunpack.c.l.b16 %v4157
        %v4476 = vunpack.c.h.b16 %v4157
        %v4477 = vunpack.c.l.b16 %v4158
        %v4478 = vunpack.c.h.b16 %v4158
        %v4479 = vunpack.c.l.b16 %v4159
        %v4480 = vunpack.c.h.b16 %v4159
        %v4481 = vunpack.c.l.b16 %v4160
        %v4482 = vunpack.c.h.b16 %v4160
        %v4483 = vunpack.c.l.b16 %v4161
        %v4484 = vunpack.c.h.b16 %v4161
        %v4485 = vunpack.c.l.b16 %v4162
        %v4486 = vunpack.c.h.b16 %v4162
        %v4487 = vunpack.c.l.b16 %v4163
        %v4488 = vunpack.c.h.b16 %v4163
        %v4489 = vunpack.c.l.b16 %v4164
        %v4490 = vunpack.c.h.b16 %v4164
        %v4491 = vunpack.c.l.b16 %v4165
        %v4492 = vunpack.c.h.b16 %v4165
        %v4493 = vunpack.c.l.b16 %v4166
        %v4494 = vunpack.c.h.b16 %v4166
        %v4495 = vunpack.c.l.b16 %v4167
        %v4496 = vunpack.c.h.b16 %v4167
        %v4497 = vunpack.c.l.b16 %v4168
        %v4498 = vunpack.c.h.b16 %v4168
        %v4499 = vunpack.c.l.b16 %v4169
        %v4500 = vunpack.c.h.b16 %v4169
        %v4501 = vunpack.c.l.b16 %v4170
        %v4502 = vunpack.c.h.b16 %v4170
        %v4503 = vunpack.c.l.b16 %v4171
        %v4504 = vunpack.c.h.b16 %v4171
        %v4505 = vunpack.c.l.b16 %v4172
        %v4506 = vunpack.c.h.b16 %v4172
        %v4507 = vunpack.c.l.b16 %v4173
        %v4508 = vunpack.c.h.b16 %v4173
        %v4509 = vunpack.c.l.b16 %v4174
        %v4510 = vunpack.c.h.b16 %v4174
        %v4511 = vunpack.c.l.b16 %v4175
        %v4512 = vunpack.c.h.b16 %v4175
        %v4513 = vunpack.c.l.b16 %v4176
        %v4514 = vunpack.c.h.b16 %v4176
        %v4515 = vunpack.c.l.b16 %v4177
        %v4516 = vunpack.c.h.b16 %v4177
        %v4517 = vunpack.c.l.b16 %v4178
        %v4518 = vunpack.c.h.b16 %v4178
        %v4519 = vunpack.c.l.b16 %v4179
        %v4520 = vunpack.c.h.b16 %v4179
        %v4521 = vunpack.c.l.b16 %v4180
        %v4522 = vunpack.c.h.b16 %v4180
        %v4523 = vunpack.c.l.b16 %v4181
        %v4524 = vunpack.c.h.b16 %v4181
        %v4525 = vunpack.c.l.b16 %v4182
        %v4526 = vunpack.c.h.b16 %v4182
        %v4527 = vunpack.c.l.b16 %v4183
        %v4528 = vunpack.c.h.b16 %v4183
        %v4529 = vunpack.c.l.b16 %v4184
        %v4530 = vunpack.c.h.b16 %v4184
        %v4531 = vunpack.c.l.b16 %v4185
        %v4532 = vunpack.c.h.b16 %v4185
        %v4533 = vunpack.c.l.b16 %v4186
        %v4534 = vunpack.c.h.b16 %v4186
        %v4535 = vunpack.c.l.b16 %v4187
        %v4536 = vunpack.c.h.b16 %v4187
        %v4537 = vunpack.c.l.b16 %v4188
        %v4538 = vunpack.c.h.b16 %v4188
        %v4539 = vunpack.c.l.b16 %v4189
        %v4540 = vunpack.c.h.b16 %v4189
        %v4541 = vunpack.c.l.b16 %v4190
        %v4542 = vunpack.c.h.b16 %v4190
        %v4543 = vunpack.c.l.b16 %v4191
        %v4544 = vunpack.c.h.b16 %v4191
        %v4545 = vunpack.c.l.b16 %v4192
        %v4546 = vunpack.c.h.b16 %v4192
        %v4547 = vunpack.c.l.b16 %v4193
        %v4548 = vunpack.c.h.b16 %v4193
        %v4549 = vunpack.c.l.b16 %v4194
        %v4550 = vunpack.c.h.b16 %v4194
        %v4551 = vunpack.c.l.b16 %v4195
        %v4552 = vunpack.c.h.b16 %v4195
        %v4553 = vunpack.c.l.b16 %v4196
        %v4554 = vunpack.c.h.b16 %v4196
        %v4555 = vunpack.c.l.b16 %v4197
        %v4556 = vunpack.c.h.b16 %v4197
        %v4557 = vunpack.c.l.b16 %v4198
        %v4558 = vunpack.c.h.b16 %v4198
        %v4559 = vunpack.c.l.b16 %v4199
        %v4560 = vunpack.c.h.b16 %v4199
        %v4561 = vunpack.c.l.b16 %v4200
        %v4562 = vunpack.c.h.b16 %v4200
        %v4563 = vunpack.c.l.b16 %v4201
        %v4564 = vunpack.c.h.b16 %v4201
        %v4565 = vunpack.c.l.b16 %v4202
        %v4566 = vunpack.c.h.b16 %v4202
        %v4567 = vunpack.c.l.b16 %v4203
        %v4568 = vunpack.c.h.b16 %v4203
        %v4569 = vunpack.c.l.b16 %v4204
        %v4570 = vunpack.c.h.b16 %v4204
        %v4571 = vunpack.c.l.b16 %v4205
        %v4572 = vunpack.c.h.b16 %v4205
        %v4573 = vunpack.c.l.b16 %v4206
        %v4574 = vunpack.c.h.b16 %v4206
        %v4575 = vunpack.c.l.b16 %v4207
        %v4576 = vunpack.c.h.b16 %v4207
        %v4577 = vunpack.c.l.b16 %v4208
        %v4578 = vunpack.c.h.b16 %v4208
        %v4579 = vunpack.c.l.b16 %v4209
        %v4580 = vunpack.c.h.b16 %v4209
        %v4581 = vunpack.c.l.b16 %v4210
        %v4582 = vunpack.c.h.b16 %v4210
        %v4583 = vunpack.c.l.b16 %v4211
        %v4584 = vunpack.c.h.b16 %v4211
        %v4585 = vunpack.c.l.b16 %v4212
        %v4586 = vunpack.c.h.b16 %v4212
        %v4587 = vunpack.c.l.b16 %v4213
        %v4588 = vunpack.c.h.b16 %v4213
        %v4589 = vunpack.c.l.b16 %v4214
        %v4590 = vunpack.c.h.b16 %v4214
        %v4591 = vunpack.c.l.b16 %v4215
        %v4592 = vunpack.c.h.b16 %v4215
        %v4593 = vunpack.c.l.b16 %v4216
        %v4594 = vunpack.c.h.b16 %v4216
        %v4595 = vunpack.c.l.b16 %v4217
        %v4596 = vunpack.c.h.b16 %v4217
        %v4597 = vunpack.c.l.b16 %v4218
        %v4598 = vunpack.c.h.b16 %v4218
        %v4599 = vunpack.c.l.b16 %v4219
        %v4600 = vunpack.c.h.b16 %v4219
        %v4601 = vunpack.c.l.b16 %v4220
        %v4602 = vunpack.c.h.b16 %v4220
        %v4603 = vunpack.c.l.b16 %v4221
        %v4604 = vunpack.c.h.b16 %v4221
        %v4605 = vunpack.c.l.b16 %v4222
        %v4606 = vunpack.c.h.b16 %v4222
        %v4607 = vunpack.c.l.b16 %v4223
        %v4608 = vunpack.c.h.b16 %v4223
        %v4609 = vunpack.c.l.b16 %v4224
        %v4610 = vunpack.c.h.b16 %v4224
        %v4611 = vunpack.c.l.b16 %v4225
        %v4612 = vunpack.c.h.b16 %v4225
        %v4613 = vunpack.c.l.b16 %v4226
        %v4614 = vunpack.c.h.b16 %v4226
        %v4615 = vunpack.c.l.b16 %v4227
        %v4616 = vunpack.c.h.b16 %v4227
        %v4617 = vunpack.c.l.b16 %v4228
        %v4618 = vunpack.c.h.b16 %v4228
        %v4619 = vunpack.c.l.b16 %v4229
        %v4620 = vunpack.c.h.b16 %v4229
        %v4621 = vunpack.c.l.b16 %v4230
        %v4622 = vunpack.c.h.b16 %v4230
        %v4623 = vunpack.c.l.b16 %v4231
        %v4624 = vunpack.c.h.b16 %v4231
        %v4625 = vunpack.c.l.b16 %v4232
        %v4626 = vunpack.c.h.b16 %v4232
        %v4627 = vunpack.c.l.b16 %v4233
        %v4628 = vunpack.c.h.b16 %v4233
        %v4629 = vunpack.c.l.b16 %v4234
        %v4630 = vunpack.c.h.b16 %v4234
        %v4631 = vunpack.c.l.b16 %v4235
        %v4632 = vunpack.c.h.b16 %v4235
        %v4633 = vunpack.c.l.b16 %v4236
        %v4634 = vunpack.c.h.b16 %v4236
        %v4635 = vunpack.c.l.b16 %v4237
        %v4636 = vunpack.c.h.b16 %v4237
        %v4637 = vunpack.c.l.b16 %v4238
        %v4638 = vunpack.c.h.b16 %v4238
        %v4639 = vpack.c.b16 %v4385, %v4383
        %v4640 = vpack.c.b16 %v4386, %v4384
        %v4641 = vpack.c.b16 %v4389, %v4387
        %v4642 = vpack.c.b16 %v4390, %v4388
        %v4643 = vpack.c.b16 %v4393, %v4391
        %v4644 = vpack.c.b16 %v4394, %v4392
        %v4645 = vpack.c.b16 %v4397, %v4395
        %v4646 = vpack.c.b16 %v4398, %v4396
        %v4647 = vpack.c.b16 %v4401, %v4399
        %v4648 = vpack.c.b16 %v4402, %v4400
        %v4649 = vpack.c.b16 %v4405, %v4403
        %v4650 = vpack.c.b16 %v4406, %v4404
        %v4651 = vpack.c.b16 %v4409, %v4407
        %v4652 = vpack.c.b16 %v4410, %v4408
        %v4653 = vpack.c.b16 %v4413, %v4411
        %v4654 = vpack.c.b16 %v4414, %v4412
        %v4655 = vpack.c.b16 %v4417, %v4415
        %v4656 = vpack.c.b16 %v4418, %v4416
        %v4657 = vpack.c.b16 %v4421, %v4419
        %v4658 = vpack.c.b16 %v4422, %v4420
        %v4659 = vpack.c.b16 %v4425, %v4423
        %v4660 = vpack.c.b16 %v4426, %v4424
        %v4661 = vpack.c.b16 %v4429, %v4427
        %v4662 = vpack.c.b16 %v4430, %v4428
        %v4663 = vpack.c.b16 %v4433, %v4431
        %v4664 = vpack.c.b16 %v4434, %v4432
        %v4665 = vpack.c.b16 %v4437, %v4435
        %v4666 = vpack.c.b16 %v4438, %v4436
        %v4667 = vpack.c.b16 %v4441, %v4439
        %v4668 = vpack.c.b16 %v4442, %v4440
        %v4669 = vpack.c.b16 %v4445, %v4443
        %v4670 = vpack.c.b16 %v4446, %v4444
        %v4671 = vpack.c.b16 %v4449, %v4447
        %v4672 = vpack.c.b16 %v4450, %v4448
        %v4673 = vpack.c.b16 %v4453, %v4451
        %v4674 = vpack.c.b16 %v4454, %v4452
        %v4675 = vpack.c.b16 %v4457, %v4455
        %v4676 = vpack.c.b16 %v4458, %v4456
        %v4677 = vpack.c.b16 %v4461, %v4459
        %v4678 = vpack.c.b16 %v4462, %v4460
        %v4679 = vpack.c.b16 %v4465, %v4463
        %v4680 = vpack.c.b16 %v4466, %v4464
        %v4681 = vpack.c.b16 %v4469, %v4467
        %v4682 = vpack.c.b16 %v4470, %v4468
        %v4683 = vpack.c.b16 %v4473, %v4471
        %v4684 = vpack.c.b16 %v4474, %v4472
        %v4685 = vpack.c.b16 %v4477, %v4475
        %v4686 = vpack.c.b16 %v4478, %v4476
        %v4687 = vpack.c.b16 %v4481, %v4479
        %v4688 = vpack.c.b16 %v4482, %v4480
        %v4689 = vpack.c.b16 %v4485, %v4483
        %v4690 = vpack.c.b16 %v4486, %v4484
        %v4691 = vpack.c.b16 %v4489, %v4487
        %v4692 = vpack.c.b16 %v4490, %v4488
        %v4693 = vpack.c.b16 %v4493, %v4491
        %v4694 = vpack.c.b16 %v4494, %v4492
        %v4695 = vpack.c.b16 %v4497, %v4495
        %v4696 = vpack.c.b16 %v4498, %v4496
        %v4697 = vpack.c.b16 %v4501, %v4499
        %v4698 = vpack.c.b16 %v4502, %v4500
        %v4699 = vpack.c.b16 %v4505, %v4503
        %v4700 = vpack.c.b16 %v4506, %v4504
        %v4701 = vpack.c.b16 %v4509, %v4507
        %v4702 = vpack.c.b16 %v4510, %v4508
        %v4703 = vpack.c.b16 %v4513, %v4511
        %v4704 = vpack.c.b16 %v4514, %v4512
        %v4705 = vpack.c.b16 %v4517, %v4515
        %v4706 = vpack.c.b16 %v4518, %v4516
        %v4707 = vpack.c.b16 %v4521, %v4519
        %v4708 = vpack.c.b16 %v4522, %v4520
        %v4709 = vpack.c.b16 %v4525, %v4523
        %v4710 = vpack.c.b16 %v4526, %v4524
        %v4711 = vpack.c.b16 %v4529, %v4527
        %v4712 = vpack.c.b16 %v4530, %v4528
        %v4713 = vpack.c.b16 %v4533, %v4531
        %v4714 = vpack.c.b16 %v4534, %v4532
        %v4715 = vpack.c.b16 %v4537, %v4535
        %v4716 = vpack.c.b16 %v4538, %v4536
        %v4717 = vpack.c.b16 %v4541, %v4539
        %v4718 = vpack.c.b16 %v4542, %v4540
        %v4719 = vpack.c.b16 %v4545, %v4543
        %v4720 = vpack.c.b16 %v4546, %v4544
        %v4721 = vpack.c.b16 %v4549, %v4547
        %v4722 = vpack.c.b16 %v4550, %v4548
        %v4723 = vpack.c.b16 %v4553, %v4551
        %v4724 = vpack.c.b16 %v4554, %v4552
        %v4725 = vpack.c.b16 %v4557, %v4555
        %v4726 = vpack.c.b16 %v4558, %v4556
        %v4727 = vpack.c.b16 %v4561, %v4559
        %v4728 = vpack.c.b16 %v4562, %v4560
        %v4729 = vpack.c.b16 %v4565, %v4563
        %v4730 = vpack.c.b16 %v4566, %v4564
        %v4731 = vpack.c.b16 %v4569, %v4567
        %v4732 = vpack.c.b16 %v4570, %v4568
        %v4733 = vpack.c.b16 %v4573, %v4571
        %v4734 = vpack.c.b16 %v4574, %v4572
        %v4735 = vpack.c.b16 %v4577, %v4575
        %v4736 = vpack.c.b16 %v4578, %v4576
        %v4737 = vpack.c.b16 %v4581, %v4579
        %v4738 = vpack.c.b16 %v4582, %v4580
        %v4739 = vpack.c.b16 %v4585, %v4583
        %v4740 = vpack.c.b16 %v4586, %v4584
        %v4741 = vpack.c.b16 %v4589, %v4587
        %v4742 = vpack.c.b16 %v4590, %v4588
        %v4743 = vpack.c.b16 %v4593, %v4591
        %v4744 = vpack.c.b16 %v4594, %v4592
        %v4745 = vpack.c.b16 %v4597, %v4595
        %v4746 = vpack.c.b16 %v4598, %v4596
        %v4747 = vpack.c.b16 %v4601, %v4599
        %v4748 = vpack.c.b16 %v4602, %v4600
        %v4749 = vpack.c.b16 %v4605, %v4603
        %v4750 = vpack.c.b16 %v4606, %v4604
        %v4751 = vpack.c.b16 %v4609, %v4607
        %v4752 = vpack.c.b16 %v4610, %v4608
        %v4753 = vpack.c.b16 %v4613, %v4611
        %v4754 = vpack.c.b16 %v4614, %v4612
        %v4755 = vpack.c.b16 %v4617, %v4615
        %v4756 = vpack.c.b16 %v4618, %v4616
        %v4757 = vpack.c.b16 %v4621, %v4619
        %v4758 = vpack.c.b16 %v4622, %v4620
        %v4759 = vpack.c.b16 %v4625, %v4623
        %v4760 = vpack.c.b16 %v4626, %v4624
        %v4761 = vpack.c.b16 %v4629, %v4627
        %v4762 = vpack.c.b16 %v4630, %v4628
        %v4763 = vpack.c.b16 %v4633, %v4631
        %v4764 = vpack.c.b16 %v4634, %v4632
        %v4765 = vpack.c.b16 %v4637, %v4635
        %v4766 = vpack.c.b16 %v4638, %v4636
        %4895 = vmatprep.subr.bf16.mxu0 %v4654
        %4896 = vmatpush1.bf16.msra.mxu0 %v4653
        %4897 = vmatprep.subr.bf16.mxu0 %v4652
        %4898 = vmatpush1.bf16.msra.mxu0 %v4651
        %4899 = vmatprep.subr.bf16.mxu0 %v4650
        %4900 = vmatpush1.bf16.msra.mxu0 %v4649
        %4901 = vmatprep.subr.bf16.mxu0 %v4648
        %4902 = vmatpush1.bf16.msra.mxu0 %v4647
        %4903 = vmatprep.subr.bf16.mxu0 %v4646
        %4904 = vmatpush1.bf16.msra.mxu0 %v4645
        %4905 = vmatprep.subr.bf16.mxu0 %v4644
        %4906 = vmatpush1.bf16.msra.mxu0 %v4643
        %4907 = vmatprep.subr.bf16.mxu0 %v4642
        %4908 = vmatpush1.bf16.msra.mxu0 %v4641
        %4909 = vmatprep.subr.bf16.mxu0 %v4640
        %4910 = vmatpush1.bf16.msra.mxu0 %v4639
        %4911 = vmatprep.subr.bf16.mxu0 %v4670
        %4912 = vmatpush2.bf16.msra.mxu0 %v4669
        %4913 = vmatprep.subr.bf16.mxu0 %v4668
        %4914 = vmatpush2.bf16.msra.mxu0 %v4667
        %4915 = vmatprep.subr.bf16.mxu0 %v4666
        %4916 = vmatpush2.bf16.msra.mxu0 %v4665
        %4917 = vmatprep.subr.bf16.mxu0 %v4664
        %4918 = vmatpush2.bf16.msra.mxu0 %v4663
        %4919 = vmatprep.subr.bf16.mxu0 %v4662
        %4920 = vmatpush2.bf16.msra.mxu0 %v4661
        %4921 = vmatprep.subr.bf16.mxu0 %v4660
        %4922 = vmatpush2.bf16.msra.mxu0 %v4659
        %4923 = vmatprep.subr.bf16.mxu0 %v4658
        %4924 = vmatpush2.bf16.msra.mxu0 %v4657
        %4925 = vmatprep.subr.bf16.mxu0 %v4656
        %4926 = vmatpush2.bf16.msra.mxu0 %v4655
        %4927 = vmatprep.mubr.bf16.mxu0 %v4240
        %4928 = vmatmul.mubr.bf16.gmra.mxu0 %v4239
        %v4929 = vpop.f32.mrf.mxu0
        %v4930 = vadd.f32 0.0, %v4929
        %v4931 = vpop.f32.mrf.mxu0
        %v4932 = vadd.f32 0.0, %v4931
        %v4933 = vpop.f32.mrf.mxu0
        %v4934 = vadd.f32 0.0, %v4933
        %v4935 = vpop.f32.mrf.mxu0
        %v4936 = vadd.f32 0.0, %v4935
        %4937 = vmatprep.mubr.bf16.mxu0 %v4248
        %4938 = vmatmul.mubr.bf16.gmra.mxu0 %v4247
        %v4939 = vpop.f32.mrf.mxu0
        %v4940 = vadd.f32 0.0, %v4939
        %v4941 = vpop.f32.mrf.mxu0
        %v4942 = vadd.f32 0.0, %v4941
        %v4943 = vpop.f32.mrf.mxu0
        %v4944 = vadd.f32 0.0, %v4943
        %v4945 = vpop.f32.mrf.mxu0
        %v4946 = vadd.f32 0.0, %v4945
        %4947 = vdwg.mxu0
        %4948 = vmatprep.subr.bf16.mxu0 %v4686
        %4949 = vmatpush1.bf16.msra.mxu0 %v4685
        %4950 = vmatprep.subr.bf16.mxu0 %v4684
        %4951 = vmatpush1.bf16.msra.mxu0 %v4683
        %4952 = vmatprep.subr.bf16.mxu0 %v4682
        %4953 = vmatpush1.bf16.msra.mxu0 %v4681
        %4954 = vmatprep.subr.bf16.mxu0 %v4680
        %4955 = vmatpush1.bf16.msra.mxu0 %v4679
        %4956 = vmatprep.subr.bf16.mxu0 %v4678
        %4957 = vmatpush1.bf16.msra.mxu0 %v4677
        %4958 = vmatprep.subr.bf16.mxu0 %v4676
        %4959 = vmatpush1.bf16.msra.mxu0 %v4675
        %4960 = vmatprep.subr.bf16.mxu0 %v4674
        %4961 = vmatpush1.bf16.msra.mxu0 %v4673
        %4962 = vmatprep.subr.bf16.mxu0 %v4672
        %4963 = vmatpush1.bf16.msra.mxu0 %v4671
        %4964 = vmatprep.subr.bf16.mxu0 %v4702
        %4965 = vmatpush2.bf16.msra.mxu0 %v4701
        %4966 = vmatprep.subr.bf16.mxu0 %v4700
        %4967 = vmatpush2.bf16.msra.mxu0 %v4699
        %4968 = vmatprep.subr.bf16.mxu0 %v4698
        %4969 = vmatpush2.bf16.msra.mxu0 %v4697
        %4970 = vmatprep.subr.bf16.mxu0 %v4696
        %4971 = vmatpush2.bf16.msra.mxu0 %v4695
        %4972 = vmatprep.subr.bf16.mxu0 %v4694
        %4973 = vmatpush2.bf16.msra.mxu0 %v4693
        %4974 = vmatprep.subr.bf16.mxu0 %v4692
        %4975 = vmatpush2.bf16.msra.mxu0 %v4691
        %4976 = vmatprep.subr.bf16.mxu0 %v4690
        %4977 = vmatpush2.bf16.msra.mxu0 %v4689
        %4978 = vmatprep.subr.bf16.mxu0 %v4688
        %4979 = vmatpush2.bf16.msra.mxu0 %v4687
        %4980 = vmatprep.mubr.bf16.mxu0 %v4242
        %4981 = vmatmul.mubr.bf16.gmra.mxu0 %v4241
        %v4982 = vpop.f32.mrf.mxu0
        %v4983 = vadd.f32 %v4930, %v4982
        %v4984 = vpop.f32.mrf.mxu0
        %v4985 = vadd.f32 %v4932, %v4984
        %v4986 = vpop.f32.mrf.mxu0
        %v4987 = vadd.f32 %v4934, %v4986
        %v4988 = vpop.f32.mrf.mxu0
        %v4989 = vadd.f32 %v4936, %v4988
        %4990 = vmatprep.mubr.bf16.mxu0 %v4250
        %4991 = vmatmul.mubr.bf16.gmra.mxu0 %v4249
        %v4992 = vpop.f32.mrf.mxu0
        %v4993 = vadd.f32 %v4940, %v4992
        %v4994 = vpop.f32.mrf.mxu0
        %v4995 = vadd.f32 %v4942, %v4994
        %v4996 = vpop.f32.mrf.mxu0
        %v4997 = vadd.f32 %v4944, %v4996
        %v4998 = vpop.f32.mrf.mxu0
        %v4999 = vadd.f32 %v4946, %v4998
        %5000 = vdwg.mxu0
        %5001 = vmatprep.subr.bf16.mxu0 %v4718
        %5002 = vmatpush1.bf16.msra.mxu0 %v4717
        %5003 = vmatprep.subr.bf16.mxu0 %v4716
        %5004 = vmatpush1.bf16.msra.mxu0 %v4715
        %5005 = vmatprep.subr.bf16.mxu0 %v4714
        %5006 = vmatpush1.bf16.msra.mxu0 %v4713
        %5007 = vmatprep.subr.bf16.mxu0 %v4712
        %5008 = vmatpush1.bf16.msra.mxu0 %v4711
        %5009 = vmatprep.subr.bf16.mxu0 %v4710
        %5010 = vmatpush1.bf16.msra.mxu0 %v4709
        %5011 = vmatprep.subr.bf16.mxu0 %v4708
        %5012 = vmatpush1.bf16.msra.mxu0 %v4707
        %5013 = vmatprep.subr.bf16.mxu0 %v4706
        %5014 = vmatpush1.bf16.msra.mxu0 %v4705
        %5015 = vmatprep.subr.bf16.mxu0 %v4704
        %5016 = vmatpush1.bf16.msra.mxu0 %v4703
        %5017 = vmatprep.subr.bf16.mxu0 %v4734
        %5018 = vmatpush2.bf16.msra.mxu0 %v4733
        %5019 = vmatprep.subr.bf16.mxu0 %v4732
        %5020 = vmatpush2.bf16.msra.mxu0 %v4731
        %5021 = vmatprep.subr.bf16.mxu0 %v4730
        %5022 = vmatpush2.bf16.msra.mxu0 %v4729
        %5023 = vmatprep.subr.bf16.mxu0 %v4728
        %5024 = vmatpush2.bf16.msra.mxu0 %v4727
        %5025 = vmatprep.subr.bf16.mxu0 %v4726
        %5026 = vmatpush2.bf16.msra.mxu0 %v4725
        %5027 = vmatprep.subr.bf16.mxu0 %v4724
        %5028 = vmatpush2.bf16.msra.mxu0 %v4723
        %5029 = vmatprep.subr.bf16.mxu0 %v4722
        %5030 = vmatpush2.bf16.msra.mxu0 %v4721
        %5031 = vmatprep.subr.bf16.mxu0 %v4720
        %5032 = vmatpush2.bf16.msra.mxu0 %v4719
        %5033 = vmatprep.mubr.bf16.mxu0 %v4244
        %5034 = vmatmul.mubr.bf16.gmra.mxu0 %v4243
        %v5035 = vpop.f32.mrf.mxu0
        %v5036 = vadd.f32 %v4983, %v5035
        %v5037 = vpop.f32.mrf.mxu0
        %v5038 = vadd.f32 %v4985, %v5037
        %v5039 = vpop.f32.mrf.mxu0
        %v5040 = vadd.f32 %v4987, %v5039
        %v5041 = vpop.f32.mrf.mxu0
        %v5042 = vadd.f32 %v4989, %v5041
        %5043 = vmatprep.mubr.bf16.mxu0 %v4252
        %5044 = vmatmul.mubr.bf16.gmra.mxu0 %v4251
        %v5045 = vpop.f32.mrf.mxu0
        %v5046 = vadd.f32 %v4993, %v5045
        %v5047 = vpop.f32.mrf.mxu0
        %v5048 = vadd.f32 %v4995, %v5047
        %v5049 = vpop.f32.mrf.mxu0
        %v5050 = vadd.f32 %v4997, %v5049
        %v5051 = vpop.f32.mrf.mxu0
        %v5052 = vadd.f32 %v4999, %v5051
        %5053 = vdwg.mxu0
        %5054 = vmatprep.subr.bf16.mxu0 %v4750
        %5055 = vmatpush1.bf16.msra.mxu0 %v4749
        %5056 = vmatprep.subr.bf16.mxu0 %v4748
        %5057 = vmatpush1.bf16.msra.mxu0 %v4747
        %5058 = vmatprep.subr.bf16.mxu0 %v4746
        %5059 = vmatpush1.bf16.msra.mxu0 %v4745
        %5060 = vmatprep.subr.bf16.mxu0 %v4744
        %5061 = vmatpush1.bf16.msra.mxu0 %v4743
        %5062 = vmatprep.subr.bf16.mxu0 %v4742
        %5063 = vmatpush1.bf16.msra.mxu0 %v4741
        %5064 = vmatprep.subr.bf16.mxu0 %v4740
        %5065 = vmatpush1.bf16.msra.mxu0 %v4739
        %5066 = vmatprep.subr.bf16.mxu0 %v4738
        %5067 = vmatpush1.bf16.msra.mxu0 %v4737
        %5068 = vmatprep.subr.bf16.mxu0 %v4736
        %5069 = vmatpush1.bf16.msra.mxu0 %v4735
        %5070 = vmatprep.subr.bf16.mxu0 %v4766
        %5071 = vmatpush2.bf16.msra.mxu0 %v4765
        %5072 = vmatprep.subr.bf16.mxu0 %v4764
        %5073 = vmatpush2.bf16.msra.mxu0 %v4763
        %5074 = vmatprep.subr.bf16.mxu0 %v4762
        %5075 = vmatpush2.bf16.msra.mxu0 %v4761
        %5076 = vmatprep.subr.bf16.mxu0 %v4760
        %5077 = vmatpush2.bf16.msra.mxu0 %v4759
        %5078 = vmatprep.subr.bf16.mxu0 %v4758
        %5079 = vmatpush2.bf16.msra.mxu0 %v4757
        %5080 = vmatprep.subr.bf16.mxu0 %v4756
        %5081 = vmatpush2.bf16.msra.mxu0 %v4755
        %5082 = vmatprep.subr.bf16.mxu0 %v4754
        %5083 = vmatpush2.bf16.msra.mxu0 %v4753
        %5084 = vmatprep.subr.bf16.mxu0 %v4752
        %5085 = vmatpush2.bf16.msra.mxu0 %v4751
        %5086 = vmatprep.mubr.bf16.mxu0 %v4246
        %5087 = vmatmul.mubr.bf16.gmra.mxu0 %v4245
        %v5088 = vpop.f32.mrf.mxu0
        %v5089 = vadd.f32 %v5036, %v5088
        %v5090 = vpop.f32.mrf.mxu0
        %v5091 = vadd.f32 %v5038, %v5090
        %v5092 = vpop.f32.mrf.mxu0
        %v5093 = vadd.f32 %v5040, %v5092
        %v5094 = vpop.f32.mrf.mxu0
        %v5095 = vadd.f32 %v5042, %v5094
        %5096 = vmatprep.mubr.bf16.mxu0 %v4254
        %5097 = vmatmul.mubr.bf16.gmra.mxu0 %v4253
        %v5098 = vpop.f32.mrf.mxu0
        %v5099 = vadd.f32 %v5046, %v5098
        %v5100 = vpop.f32.mrf.mxu0
        %v5101 = vadd.f32 %v5048, %v5100
        %v5102 = vpop.f32.mrf.mxu0
        %v5103 = vadd.f32 %v5050, %v5102
        %v5104 = vpop.f32.mrf.mxu0
        %v5105 = vadd.f32 %v5052, %v5104
        %5106 = vdwg.mxu0
        %v5107 = vadd.f32 %v2717, %v5089
        %v5108 = vadd.f32 %v2718, %v5091
        %v5109 = vadd.f32 %v2719, %v5093
        %v5110 = vadd.f32 %v2720, %v5095
        %v5111 = vadd.f32 %v2721, %v5099
        %v5112 = vadd.f32 %v2722, %v5101
        %v5113 = vadd.f32 %v2723, %v5103
        %v5114 = vadd.f32 %v2724, %v5105
        %v5115 = vld [vmem:[%s984] sm:$0x3]
        %v5117 = vlaneseq
        %v5118 = vshrl.u32 %v5117, 7
        %v5119 = vsub.s32 0, %v5118
        %v5120 = vrot.slane %v5115, %v5119
        %v5121 = vlaneseq
        %v5122 = vshrl.u32 %v5121, 7
        %v5123 = vsub.s32 1, %v5122
        %v5124 = vrot.slane %v5115, %v5123
        %v5127 = vadd.f32 %v5107, %v5120
        %v5128 = vadd.f32 %v5108, %v5124
        %v5129 = vadd.f32 %v5109, %v5120
        %v5130 = vadd.f32 %v5110, %v5124
        %v5131 = vadd.f32 %v5111, %v5120
        %v5132 = vadd.f32 %v5112, %v5124
        %v5133 = vadd.f32 %v5113, %v5120
        %v5134 = vadd.f32 %v5114, %v5124
        %5135 = vst [vmem:[#allocation2] sm:$0xff] %v5127
        %5136 = vst [vmem:[#allocation2 + $0x8] sm:$0xff] %v5128
        %5137 = vst [vmem:[#allocation2 + $0x10] sm:$0xff] %v5129
        %5138 = vst [vmem:[#allocation2 + $0x18] sm:$0xff] %v5130
        %5139 = vst [vmem:[#allocation2 + $0x20] sm:$0xff] %v5131
        %5140 = vst [vmem:[#allocation2 + $0x28] sm:$0xff] %v5132
        %5141 = vst [vmem:[#allocation2 + $0x30] sm:$0xff] %v5133
        %5142 = vst [vmem:[#allocation2 + $0x38] sm:$0xff] %v5134
        %p5143 = scmp.eq.s32.totalorder %s47, 1
        // Predicated region
        $region149: #{tpu_custom_call.1} parent=91 // pred_check
          %p5144 = pneg %p5143
        $region150: #{tpu_custom_call.1} parent=91 // pred_check_branch
          %5146 = sbr.rel (%p5144) target = $region152
        $region151: #{tpu_custom_call.1} parent=91 // pred_region
          %v5147 = vld [vmem:[#allocation2] ss:$8 sm:$0x3]
          %v5148 = vld [vmem:[%s15] sm:$0x3]
          %v5149 = vld [vmem:[%s16] sm:$0x3]
          %v5151 = vlaneseq
          %v5152 = vshrl.u32 %v5151, 7
          %v5153 = vsub.s32 0, %v5152
          %v5154 = vrot.slane %v5147, %v5153
          %v5155 = vlaneseq
          %v5156 = vshrl.u32 %v5155, 7
          %v5157 = vsub.s32 1, %v5156
          %v5158 = vrot.slane %v5147, %v5157
          %vm5161 = vcmask 1040384
          %v5162 = vsel %vm5161, %v5154, 0.0
          %v5163 = vsel %vm5161, %v5158, 0.0
          %v5164 = vadd.f32 %v5162, %v5163
          %5165 = vadd.xlane.f32.xlu0 %v5164
          %v5166 = vpop.xlane.xlu0 %5165
          %v5167 = vmul.f32 %v5166, %v1133
          %v5169 = vlaneseq
          %v5170 = vshrl.u32 %v5169, 7
          %v5171 = vsub.s32 0, %v5170
          %v5172 = vrot.slane %v5167, %v5171
          %v5174 = vsub.f32 %v5147, %v5172
          %v5175 = vmul.f32 %v5174, %v5174
          %v5177 = vlaneseq
          %v5178 = vshrl.u32 %v5177, 7
          %v5179 = vsub.s32 0, %v5178
          %v5180 = vrot.slane %v5175, %v5179
          %v5181 = vlaneseq
          %v5182 = vshrl.u32 %v5181, 7
          %v5183 = vsub.s32 1, %v5182
          %v5184 = vrot.slane %v5175, %v5183
          %v5187 = vsel %vm5161, %v5180, 0.0
          %v5188 = vsel %vm5161, %v5184, 0.0
          %v5189 = vadd.f32 %v5187, %v5188
          %5190 = vadd.xlane.f32.xlu0 %v5189
          %v5191 = vpop.xlane.xlu0 %5190
          %v5192 = vmul.f32 %v5191, %v1133
          %v5193 = vadd.f32 %v5192, 1e-05
          %v5194 = vrsqrt.pop %v5193
          %v5196 = vlaneseq
          %v5197 = vshrl.u32 %v5196, 7
          %v5198 = vsub.s32 0, %v5197
          %v5199 = vrot.slane %v5194, %v5198
          %v5201 = vmul.f32 %v5174, %v5199
          %v5202 = vmul.f32 %v5201, %v5148
          %v5203 = vadd.f32 %v5202, %v5149
          %v5204 = vld [vmem:[#allocation23] sm:$0xff]
          %v5205 = vld [vmem:[#allocation23 + $0x8] sm:$0xff]
          %v5206 = vld [vmem:[#allocation23 + $0x10] sm:$0xff]
          %v5207 = vld [vmem:[#allocation23 + $0x18] sm:$0xff]
          %v5208 = vld [vmem:[#allocation23 + $0x20] sm:$0xff]
          %v5209 = vld [vmem:[#allocation23 + $0x28] sm:$0xff]
          %v5210 = vld [vmem:[#allocation23 + $0x30] sm:$0xff]
          %v5211 = vld [vmem:[#allocation23 + $0x38] sm:$0xff]
          %v5212 = vld [vmem:[#allocation23 + $0x40] sm:$0xff]
          %v5213 = vld [vmem:[#allocation23 + $0x48] sm:$0xff]
          %v5214 = vld [vmem:[#allocation23 + $0x50] sm:$0xff]
          %v5215 = vld [vmem:[#allocation23 + $0x58] sm:$0xff]
          %v5216 = vld [vmem:[#allocation23 + $0x60] sm:$0xff]
          %v5217 = vld [vmem:[#allocation23 + $0x68] sm:$0xff]
          %v5218 = vld [vmem:[#allocation23 + $0x70] sm:$0xff]
          %v5219 = vld [vmem:[#allocation23 + $0x78] sm:$0xff]
          %v5220 = vld [vmem:[#allocation23 + $0x80] sm:$0xff]
          %v5221 = vld [vmem:[#allocation23 + $0x88] sm:$0xff]
          %v5222 = vld [vmem:[#allocation23 + $0x90] sm:$0xff]
          %v5223 = vld [vmem:[#allocation23 + $0x98] sm:$0xff]
          %v5224 = vld [vmem:[#allocation23 + $0xa0] sm:$0xff]
          %v5225 = vld [vmem:[#allocation23 + $0xa8] sm:$0xff]
          %v5226 = vld [vmem:[#allocation23 + $0xb0] sm:$0xff]
          %v5227 = vld [vmem:[#allocation23 + $0xb8] sm:$0xff]
          %v5228 = vld [vmem:[#allocation23 + $0xc0] sm:$0xff]
          %v5229 = vld [vmem:[#allocation23 + $0xc8] sm:$0xff]
          %v5230 = vld [vmem:[#allocation23 + $0xd0] sm:$0xff]
          %v5231 = vld [vmem:[#allocation23 + $0xd8] sm:$0xff]
          %v5232 = vld [vmem:[#allocation23 + $0xe0] sm:$0xff]
          %v5233 = vld [vmem:[#allocation23 + $0xe8] sm:$0xff]
          %v5234 = vld [vmem:[#allocation23 + $0xf0] sm:$0xff]
          %v5235 = vld [vmem:[#allocation23 + $0xf8] sm:$0xff]
          %v5237 = vlaneseq
          %v5238 = vshrl.u32 %v5237, 7
          %v5239 = vsub.s32 0, %v5238
          %v5240 = vrot.slane %v5203, %v5239
          %v5241 = vlaneseq
          %v5242 = vshrl.u32 %v5241, 7
          %v5243 = vsub.s32 1, %v5242
          %v5244 = vrot.slane %v5203, %v5243
          %5247 = vmatprep.subr.mxu0 0.0
          %5248 = vmatpush1.msra.mxu0 %v5219
          %5249 = vmatprep.subr.mxu0 0.0
          %5250 = vmatpush1.msra.mxu0 %v5218
          %5251 = vmatprep.subr.mxu0 0.0
          %5252 = vmatpush1.msra.mxu0 %v5217
          %5253 = vmatprep.subr.mxu0 0.0
          %5254 = vmatpush1.msra.mxu0 %v5216
          %5255 = vmatprep.subr.mxu0 0.0
          %5256 = vmatpush1.msra.mxu0 %v5215
          %5257 = vmatprep.subr.mxu0 0.0
          %5258 = vmatpush1.msra.mxu0 %v5214
          %5259 = vmatprep.subr.mxu0 0.0
          %5260 = vmatpush1.msra.mxu0 %v5213
          %5261 = vmatprep.subr.mxu0 0.0
          %5262 = vmatpush1.msra.mxu0 %v5212
          %5263 = vmatprep.subr.mxu0 0.0
          %5264 = vmatpush1.msra.mxu0 %v5211
          %5265 = vmatprep.subr.mxu0 0.0
          %5266 = vmatpush1.msra.mxu0 %v5210
          %5267 = vmatprep.subr.mxu0 0.0
          %5268 = vmatpush1.msra.mxu0 %v5209
          %5269 = vmatprep.subr.mxu0 0.0
          %5270 = vmatpush1.msra.mxu0 %v5208
          %5271 = vmatprep.subr.mxu0 0.0
          %5272 = vmatpush1.msra.mxu0 %v5207
          %5273 = vmatprep.subr.mxu0 0.0
          %5274 = vmatpush1.msra.mxu0 %v5206
          %5275 = vmatprep.subr.mxu0 0.0
          %5276 = vmatpush1.msra.mxu0 %v5205
          %5277 = vmatprep.subr.mxu0 0.0
          %5278 = vmatpush1.msra.mxu0 %v5204
          %5279 = vmatprep.subr.mxu0 0.0
          %5280 = vmatpush2.msra.mxu0 %v5235
          %5281 = vmatprep.subr.mxu0 0.0
          %5282 = vmatpush2.msra.mxu0 %v5234
          %5283 = vmatprep.subr.mxu0 0.0
          %5284 = vmatpush2.msra.mxu0 %v5233
          %5285 = vmatprep.subr.mxu0 0.0
          %5286 = vmatpush2.msra.mxu0 %v5232
          %5287 = vmatprep.subr.mxu0 0.0
          %5288 = vmatpush2.msra.mxu0 %v5231
          %5289 = vmatprep.subr.mxu0 0.0
          %5290 = vmatpush2.msra.mxu0 %v5230
          %5291 = vmatprep.subr.mxu0 0.0
          %5292 = vmatpush2.msra.mxu0 %v5229
          %5293 = vmatprep.subr.mxu0 0.0
          %5294 = vmatpush2.msra.mxu0 %v5228
          %5295 = vmatprep.subr.mxu0 0.0
          %5296 = vmatpush2.msra.mxu0 %v5227
          %5297 = vmatprep.subr.mxu0 0.0
          %5298 = vmatpush2.msra.mxu0 %v5226
          %5299 = vmatprep.subr.mxu0 0.0
          %5300 = vmatpush2.msra.mxu0 %v5225
          %5301 = vmatprep.subr.mxu0 0.0
          %5302 = vmatpush2.msra.mxu0 %v5224
          %5303 = vmatprep.subr.mxu0 0.0
          %5304 = vmatpush2.msra.mxu0 %v5223
          %5305 = vmatprep.subr.mxu0 0.0
          %5306 = vmatpush2.msra.mxu0 %v5222
          %5307 = vmatprep.subr.mxu0 0.0
          %5308 = vmatpush2.msra.mxu0 %v5221
          %5309 = vmatprep.subr.mxu0 0.0
          %5310 = vmatpush2.msra.mxu0 %v5220
          %5311 = vmatprep.mubr.f32.mxu0 %v5244
          %5312 = vmatmul.mubr.f32.gmra.mxu0 %v5240
          %v5313 = vpop.f32.mrf.mxu0
          %v5314 = vadd.f32 0.0, %v5313
          %v5315 = vpop.f32.mrf.mxu0
          %5316 = vdwg.mxu0
          %5317 = vst [vmem:[#allocation24] sm:$0x1] %v5314
          %s5318 = scalar_lea.vmem [#allocation2], 32
          %v5319 = vld [vmem:[%s5318] ss:$8 sm:$0x3]
          %v5320 = vld [vmem:[%s15] sm:$0x3]
          %v5321 = vld [vmem:[%s16] sm:$0x3]
          %v5323 = vlaneseq
          %v5324 = vshrl.u32 %v5323, 7
          %v5325 = vsub.s32 0, %v5324
          %v5326 = vrot.slane %v5319, %v5325
          %v5327 = vlaneseq
          %v5328 = vshrl.u32 %v5327, 7
          %v5329 = vsub.s32 1, %v5328
          %v5330 = vrot.slane %v5319, %v5329
          %v5333 = vsel %vm5161, %v5326, 0.0
          %v5334 = vsel %vm5161, %v5330, 0.0
          %v5335 = vadd.f32 %v5333, %v5334
          %5336 = vadd.xlane.f32.xlu0 %v5335
          %v5337 = vpop.xlane.xlu0 %5336
          %v5338 = vmul.f32 %v5337, %v1133
          %v5340 = vlaneseq
          %v5341 = vshrl.u32 %v5340, 7
          %v5342 = vsub.s32 0, %v5341
          %v5343 = vrot.slane %v5338, %v5342
          %v5345 = vsub.f32 %v5319, %v5343
          %v5346 = vmul.f32 %v5345, %v5345
          %v5348 = vlaneseq
          %v5349 = vshrl.u32 %v5348, 7
          %v5350 = vsub.s32 0, %v5349
          %v5351 = vrot.slane %v5346, %v5350
          %v5352 = vlaneseq
          %v5353 = vshrl.u32 %v5352, 7
          %v5354 = vsub.s32 1, %v5353
          %v5355 = vrot.slane %v5346, %v5354
          %v5358 = vsel %vm5161, %v5351, 0.0
          %v5359 = vsel %vm5161, %v5355, 0.0
          %v5360 = vadd.f32 %v5358, %v5359
          %5361 = vadd.xlane.f32.xlu0 %v5360
          %v5362 = vpop.xlane.xlu0 %5361
          %v5363 = vmul.f32 %v5362, %v1133
          %v5364 = vadd.f32 %v5363, 1e-05
          %v5365 = vrsqrt.pop %v5364
          %v5367 = vlaneseq
          %v5368 = vshrl.u32 %v5367, 7
          %v5369 = vsub.s32 0, %v5368
          %v5370 = vrot.slane %v5365, %v5369
          %v5372 = vmul.f32 %v5345, %v5370
          %v5373 = vmul.f32 %v5372, %v5320
          %v5374 = vadd.f32 %v5373, %v5321
          %v5375 = vld [vmem:[#allocation23] sm:$0xff]
          %v5376 = vld [vmem:[#allocation23 + $0x8] sm:$0xff]
          %v5377 = vld [vmem:[#allocation23 + $0x10] sm:$0xff]
          %v5378 = vld [vmem:[#allocation23 + $0x18] sm:$0xff]
          %v5379 = vld [vmem:[#allocation23 + $0x20] sm:$0xff]
          %v5380 = vld [vmem:[#allocation23 + $0x28] sm:$0xff]
          %v5381 = vld [vmem:[#allocation23 + $0x30] sm:$0xff]
          %v5382 = vld [vmem:[#allocation23 + $0x38] sm:$0xff]
          %v5383 = vld [vmem:[#allocation23 + $0x40] sm:$0xff]
          %v5384 = vld [vmem:[#allocation23 + $0x48] sm:$0xff]
          %v5385 = vld [vmem:[#allocation23 + $0x50] sm:$0xff]
          %v5386 = vld [vmem:[#allocation23 + $0x58] sm:$0xff]
          %v5387 = vld [vmem:[#allocation23 + $0x60] sm:$0xff]
          %v5388 = vld [vmem:[#allocation23 + $0x68] sm:$0xff]
          %v5389 = vld [vmem:[#allocation23 + $0x70] sm:$0xff]
          %v5390 = vld [vmem:[#allocation23 + $0x78] sm:$0xff]
          %v5391 = vld [vmem:[#allocation23 + $0x80] sm:$0xff]
          %v5392 = vld [vmem:[#allocation23 + $0x88] sm:$0xff]
          %v5393 = vld [vmem:[#allocation23 + $0x90] sm:$0xff]
          %v5394 = vld [vmem:[#allocation23 + $0x98] sm:$0xff]
          %v5395 = vld [vmem:[#allocation23 + $0xa0] sm:$0xff]
          %v5396 = vld [vmem:[#allocation23 + $0xa8] sm:$0xff]
          %v5397 = vld [vmem:[#allocation23 + $0xb0] sm:$0xff]
          %v5398 = vld [vmem:[#allocation23 + $0xb8] sm:$0xff]
          %v5399 = vld [vmem:[#allocation23 + $0xc0] sm:$0xff]
          %v5400 = vld [vmem:[#allocation23 + $0xc8] sm:$0xff]
          %v5401 = vld [vmem:[#allocation23 + $0xd0] sm:$0xff]
          %v5402 = vld [vmem:[#allocation23 + $0xd8] sm:$0xff]
          %v5403 = vld [vmem:[#allocation23 + $0xe0] sm:$0xff]
          %v5404 = vld [vmem:[#allocation23 + $0xe8] sm:$0xff]
          %v5405 = vld [vmem:[#allocation23 + $0xf0] sm:$0xff]
          %v5406 = vld [vmem:[#allocation23 + $0xf8] sm:$0xff]
          %v5408 = vlaneseq
          %v5409 = vshrl.u32 %v5408, 7
          %v5410 = vsub.s32 0, %v5409
          %v5411 = vrot.slane %v5374, %v5410
          %v5412 = vlaneseq
          %v5413 = vshrl.u32 %v5412, 7
          %v5414 = vsub.s32 1, %v5413
          %v5415 = vrot.slane %v5374, %v5414
          %5418 = vmatprep.subr.mxu0 0.0
          %5419 = vmatpush1.msra.mxu0 %v5390
          %5420 = vmatprep.subr.mxu0 0.0
          %5421 = vmatpush1.msra.mxu0 %v5389
          %5422 = vmatprep.subr.mxu0 0.0
          %5423 = vmatpush1.msra.mxu0 %v5388
          %5424 = vmatprep.subr.mxu0 0.0
          %5425 = vmatpush1.msra.mxu0 %v5387
          %5426 = vmatprep.subr.mxu0 0.0
          %5427 = vmatpush1.msra.mxu0 %v5386
          %5428 = vmatprep.subr.mxu0 0.0
          %5429 = vmatpush1.msra.mxu0 %v5385
          %5430 = vmatprep.subr.mxu0 0.0
          %5431 = vmatpush1.msra.mxu0 %v5384
          %5432 = vmatprep.subr.mxu0 0.0
          %5433 = vmatpush1.msra.mxu0 %v5383
          %5434 = vmatprep.subr.mxu0 0.0
          %5435 = vmatpush1.msra.mxu0 %v5382
          %5436 = vmatprep.subr.mxu0 0.0
          %5437 = vmatpush1.msra.mxu0 %v5381
          %5438 = vmatprep.subr.mxu0 0.0
          %5439 = vmatpush1.msra.mxu0 %v5380
          %5440 = vmatprep.subr.mxu0 0.0
          %5441 = vmatpush1.msra.mxu0 %v5379
          %5442 = vmatprep.subr.mxu0 0.0
          %5443 = vmatpush1.msra.mxu0 %v5378
          %5444 = vmatprep.subr.mxu0 0.0
          %5445 = vmatpush1.msra.mxu0 %v5377
          %5446 = vmatprep.subr.mxu0 0.0
          %5447 = vmatpush1.msra.mxu0 %v5376
          %5448 = vmatprep.subr.mxu0 0.0
          %5449 = vmatpush1.msra.mxu0 %v5375
          %5450 = vmatprep.subr.mxu0 0.0
          %5451 = vmatpush2.msra.mxu0 %v5406
          %5452 = vmatprep.subr.mxu0 0.0
          %5453 = vmatpush2.msra.mxu0 %v5405
          %5454 = vmatprep.subr.mxu0 0.0
          %5455 = vmatpush2.msra.mxu0 %v5404
          %5456 = vmatprep.subr.mxu0 0.0
          %5457 = vmatpush2.msra.mxu0 %v5403
          %5458 = vmatprep.subr.mxu0 0.0
          %5459 = vmatpush2.msra.mxu0 %v5402
          %5460 = vmatprep.subr.mxu0 0.0
          %5461 = vmatpush2.msra.mxu0 %v5401
          %5462 = vmatprep.subr.mxu0 0.0
          %5463 = vmatpush2.msra.mxu0 %v5400
          %5464 = vmatprep.subr.mxu0 0.0
          %5465 = vmatpush2.msra.mxu0 %v5399
          %5466 = vmatprep.subr.mxu0 0.0
          %5467 = vmatpush2.msra.mxu0 %v5398
          %5468 = vmatprep.subr.mxu0 0.0
          %5469 = vmatpush2.msra.mxu0 %v5397
          %5470 = vmatprep.subr.mxu0 0.0
          %5471 = vmatpush2.msra.mxu0 %v5396
          %5472 = vmatprep.subr.mxu0 0.0
          %5473 = vmatpush2.msra.mxu0 %v5395
          %5474 = vmatprep.subr.mxu0 0.0
          %5475 = vmatpush2.msra.mxu0 %v5394
          %5476 = vmatprep.subr.mxu0 0.0
          %5477 = vmatpush2.msra.mxu0 %v5393
          %5478 = vmatprep.subr.mxu0 0.0
          %5479 = vmatpush2.msra.mxu0 %v5392
          %5480 = vmatprep.subr.mxu0 0.0
          %5481 = vmatpush2.msra.mxu0 %v5391
          %5482 = vmatprep.mubr.f32.mxu0 %v5415
          %5483 = vmatmul.mubr.f32.gmra.mxu0 %v5411
          %v5484 = vpop.f32.mrf.mxu0
          %v5485 = vadd.f32 0.0, %v5484
          %v5486 = vpop.f32.mrf.mxu0
          %5487 = vdwg.mxu0
          %5488 = vst [vmem:[#allocation24 + $0x1] sm:$0x1] %v5485
        $region152: #{tpu_custom_call.1} parent=91 // pred_fallthru
          _
        // Predicated region
        $region153: #{tpu_custom_call.1} parent=91 // pred_check
          %p5489 = pneg %p498
        $region154: #{tpu_custom_call.1} parent=91 // pred_check_branch
          %5491 = sbr.rel (%p5489) target = $region156
        $region155: #{tpu_custom_call.1} parent=91 // pred_region
          %s5493 = ssub.s32 32, 32
          %5494 = vsyncadd [#allocation5], %s5493
          %s5496 = sshll.u32 [#allocation24], 4
          %s5497 = int_to_ptr.vmem [resolvable:$true] %s5496
          %5499 = dma.vmem_to_hbm [thread:$0]  %s5497, 32, %s18, [#allocation5]
        $region156: #{tpu_custom_call.1} parent=91 // pred_fallthru
          _
        // Predicated region
        $region157: #{tpu_custom_call.1} parent=91 // pred_check
          %p5500 = pneg %p498
        $region158: #{tpu_custom_call.1} parent=91 // pred_check_branch
          %5502 = sbr.rel (%p5500) target = $region160
        $region159: #{tpu_custom_call.1} parent=91 // pred_region
          %5503 = dma.done [#allocation5], 32
        $region160: #{tpu_custom_call.1} parent=91 // pred_fallthru
          _
      $region92: #{tpu_custom_call.1} parent=5 // pred_fallthru
        _
      %p5504 = scmp.le.s32.totalorder 2, %s42
      // Predicated region
      $region161: #{tpu_custom_call.1} parent=5 // pred_check
        %p5505 = pneg %p5504
      $region162: #{tpu_custom_call.1} parent=5 // pred_check_branch
        %5507 = sbr.rel (%p5505) target = $region164
      $region163: #{tpu_custom_call.1} parent=5 // pred_region
        %s5508 = ssub.s32 %s42, 2
      $region164: #{tpu_custom_call.1} parent=5 // pred_fallthru
        _
    $region6: #{tpu_custom_call.1} parent=1 // loop_footer
      %s46 = sadd.s32 1, %s42
    $region7: #{tpu_custom_call.1} parent=1 // loop_footer_branch
      %41 = sbr.rel target = $region3
    $region8: #{tpu_custom_call.1} parent=1 // loop_exit
      _
    %5509 = vsyncpa [#allocation4], 1
    %s5510 = scalar_lea.sflag [#allocation4], 1
    %5511 = vsyncpa %s5510, 1
    %5512 = vsyncpa [#allocation7], 1
    %5513 = vsyncpa [#allocation10], 1
    %s5514 = scalar_lea.sflag [#allocation10], 1
    %5515 = vsyncpa %s5514, 1
    %5516 = vsyncpa [#allocation13], 1
    %s5517 = scalar_lea.sflag [#allocation13], 1
    %5518 = vsyncpa %s5517, 1
    %5519 = vsyncpa [#allocation16], 1
    %s5520 = scalar_lea.sflag [#allocation16], 1
    %5521 = vsyncpa %s5520, 1
    %5522 = vsyncpa [#allocation19], 1
    %s5523 = scalar_lea.sflag [#allocation19], 1
    %5524 = vsyncpa %s5523, 1
    %5525 = vsyncpa [#allocation22], 1
    %s5526 = scalar_lea.sflag [#allocation22], 1
    %5527 = vsyncpa %s5526, 1
    %5528 = vsyncpa [#allocation5], 1
    %s5529 = scalar_lea.sflag [#allocation5], 1
    %5530 = vsyncpa %s5529, 1

</llo_original>
